<compile_context>
chip_gen: v7x
topology: tpu7x:2x2x1
jax: 0.10.0
libtpu: 0.0.40
codegen_flags: <defaults>
</compile_context>

<pallas_src>
import functools

import jax
import jax.numpy as jnp
from jax.experimental import pallas as pl
from jax.experimental.pallas import tpu as pltpu


# --------------------------------------------------------------------------
# Hoisted input projection: gates_x = x2d @ W_ih^T + (b_ih + b_hh)
# Row-tiled so long sequences stay within VMEM and pipeline over HBM.
# --------------------------------------------------------------------------
def _input_proj_kernel(x_ref, w_ref, b_ref, o_ref):
    o_ref[...] = (jnp.dot(x_ref[...], w_ref[...],
                          preferred_element_type=jnp.float32)
                  + b_ref[...]).astype(o_ref.dtype)


def input_projection(x2d, w_t, b):
    """x2d: (N, D) -> (N, 4H).  w_t: (D, 4H), b: (1, 4H)."""
    N, D = x2d.shape
    G = w_t.shape[-1]
    TM = N if N <= 256 else 256          # full block for small N, 256-row tiles otherwise
    grid = (pl.cdiv(N, TM),)
    return pl.pallas_call(
        _input_proj_kernel,
        out_shape=jax.ShapeDtypeStruct((N, G), jnp.float32),
        grid_spec=pltpu.PrefetchScalarGridSpec(
            num_scalar_prefetch=0,
            grid=grid,
            in_specs=[
                pl.BlockSpec((TM, D), lambda i: (i, 0)),   # x rows
                pl.BlockSpec((D, G), lambda i: (0, 0)),    # W_ih^T (resident)
                pl.BlockSpec((1, G), lambda i: (0, 0)),    # combined bias
            ],
            out_specs=pl.BlockSpec((TM, G), lambda i: (i, 0)),
        ),
        compiler_params=pltpu.CompilerParams(
            dimension_semantics=("parallel",)),
    )(x2d, w_t, b)


# --------------------------------------------------------------------------
# LSTM recurrence for an intermediate layer (emits per-step hidden states).
# Single kernel invocation; lax.fori_loop over time; h/c carried as values.
# --------------------------------------------------------------------------
def _lstm_recurrence_kernel(gx_ref, w_hh_ref, h0_ref, c0_ref,
                            y_ref, hn_ref, cn_ref):
    T = gx_ref.shape[0]
    H = h0_ref.shape[-1]
    w_hh = w_hh_ref[...]                               # (H, 4H), hoisted load
    h0 = h0_ref[...].astype(jnp.float32)
    c0 = c0_ref[...].astype(jnp.float32)

    def step(t, carry):
        h, c = carry
        gates = gx_ref[t] + jnp.dot(h, w_hh, preferred_element_type=jnp.float32)
        i = jax.nn.sigmoid(gates[:, 0 * H:1 * H])
        f = jax.nn.sigmoid(gates[:, 1 * H:2 * H])
        g = jnp.tanh(gates[:, 2 * H:3 * H])
        o = jax.nn.sigmoid(gates[:, 3 * H:4 * H])
        c_new = f * c + i * g
        h_new = o * jnp.tanh(c_new)
        y_ref[t] = h_new.astype(y_ref.dtype)
        return (h_new, c_new)

    h_n, c_n = jax.lax.fori_loop(0, T, step, (h0, c0), unroll=(T <= 32))
    hn_ref[...] = h_n.astype(hn_ref.dtype)             # written once, at the end
    cn_ref[...] = c_n.astype(cn_ref.dtype)


def lstm_recurrence(gx_tm, w_hh_t, h0, c0):
    """gx_tm: (T, B, 4H) precomputed input gates.  Returns (y (T,B,H), h_n, c_n)."""
    T, B, _ = gx_tm.shape
    H = h0.shape[-1]
    return pl.pallas_call(
        _lstm_recurrence_kernel,
        out_shape=(
            jax.ShapeDtypeStruct((T, B, H), jnp.float32),
            jax.ShapeDtypeStruct((B, H), jnp.float32),
            jax.ShapeDtypeStruct((B, H), jnp.float32),
        ),
    )(gx_tm, w_hh_t, h0, c0)


# --------------------------------------------------------------------------
# Last LSTM layer with the output Linear fused into the per-step epilogue.
# Only the prediction (and final h/c) leave the kernel; y never hits HBM.
# --------------------------------------------------------------------------
def _lstm_last_layer_kernel(gx_ref, w_hh_ref, h0_ref, c0_ref, wo_ref, bo_ref,
                            pred_ref, hn_ref, cn_ref):
    T = gx_ref.shape[0]
    H = h0_ref.shape[-1]
    w_hh = w_hh_ref[...]                               # (H, 4H)
    w_out = wo_ref[...]                                # (H, D_out)
    b_out = bo_ref[...]                                # (1, D_out)
    h0 = h0_ref[...].astype(jnp.float32)
    c0 = c0_ref[...].astype(jnp.float32)

    def step(t, carry):
        h, c = carry
        gates = gx_ref[t] + jnp.dot(h, w_hh, preferred_element_type=jnp.float32)
        i = jax.nn.sigmoid(gates[:, 0 * H:1 * H])
        f = jax.nn.sigmoid(gates[:, 1 * H:2 * H])
        g = jnp.tanh(gates[:, 2 * H:3 * H])
        o = jax.nn.sigmoid(gates[:, 3 * H:4 * H])
        c_new = f * c + i * g
        h_new = o * jnp.tanh(c_new)
        pred_t = jnp.dot(h_new, w_out, preferred_element_type=jnp.float32) + b_out
        pred_ref[t] = pred_t.astype(pred_ref.dtype)
        return (h_new, c_new)

    h_n, c_n = jax.lax.fori_loop(0, T, step, (h0, c0), unroll=(T <= 32))
    hn_ref[...] = h_n.astype(hn_ref.dtype)
    cn_ref[...] = c_n.astype(cn_ref.dtype)


def lstm_last_layer(gx_tm, w_hh_t, h0, c0, out_w_t, out_b):
    T, B, _ = gx_tm.shape
    H = h0.shape[-1]
    D_out = out_w_t.shape[-1]
    return pl.pallas_call(
        _lstm_last_layer_kernel,
        out_shape=(
            jax.ShapeDtypeStruct((T, B, D_out), jnp.float32),
            jax.ShapeDtypeStruct((B, H), jnp.float32),
            jax.ShapeDtypeStruct((B, H), jnp.float32),
        ),
    )(gx_tm, w_hh_t, h0, c0, out_w_t, out_b)


# --------------------------------------------------------------------------
# Decoder forward
# --------------------------------------------------------------------------
@functools.partial(jax.jit, static_argnames=())
def decoder_forward(params, x, h0, c0):
    """x: (B, T, output_dim); h0, c0: (num_layers, B, hidden_dim).
    Returns (prediction (B, T, output_dim), (h_n, c_n))."""
    # TODO(synk): dropout between LSTM layers skipped (module default rate = 0).
    x_tm = jnp.swapaxes(x, 0, 1).astype(jnp.float32)    # (T, B, D_in), cast once
    T, B, _ = x_tm.shape
    num_layers = h0.shape[0]
    H = h0.shape[-1]

    h_finals, c_finals = [], []
    layer_in = x_tm
    for l in range(num_layers):
        w_ih_t, w_hh_t, b = params["lstm"][l]
        D_l = layer_in.shape[-1]
        # Hoisted input projection: one big (T*B, D) @ (D, 4H) matmul.
        gx = input_projection(layer_in.reshape(T * B, D_l), w_ih_t, b)
        gx = gx.reshape(T, B, 4 * H)
        if l < num_layers - 1:
            y_tm, h_n, c_n = lstm_recurrence(gx, w_hh_t, h0[l], c0[l])
            layer_in = y_tm
        else:
            pred_tm, h_n, c_n = lstm_last_layer(gx, w_hh_t, h0[l], c0[l],
                                                params["out_w_t"], params["out_b"])
        h_finals.append(h_n)
        c_finals.append(c_n)

    prediction = jnp.swapaxes(pred_tm, 0, 1)             # (B, T, D_out), tiny transpose
    return prediction, (jnp.stack(h_finals), jnp.stack(c_finals))


# --------------------------------------------------------------------------
# Pure-JAX reference (mirrors torch.nn.LSTM / Linear semantics)
# --------------------------------------------------------------------------
def _ref_forward(params, x, h0, c0):
    x_tm = jnp.swapaxes(x, 0, 1).astype(jnp.float32)
    num_layers = h0.shape[0]
    h_finals, c_finals = [], []
    layer_in = x_tm
    for l in range(num_layers):
        w_ih_t, w_hh_t, b = params["lstm"][l]
        H = h0.shape[-1]

        def step(carry, x_t):
            h, c = carry
            gates = x_t @ w_ih_t + h @ w_hh_t + b[0]
            i = jax.nn.sigmoid(gates[:, :H])
            f = jax.nn.sigmoid(gates[:, H:2 * H])
            g = jnp.tanh(gates[:, 2 * H:3 * H])
            o = jax.nn.sigmoid(gates[:, 3 * H:])
            c = f * c + i * g
            h = o * jnp.tanh(c)
            return (h, c), h

        (h_n, c_n), ys = jax.lax.scan(step, (h0[l], c0[l]), layer_in)
        h_finals.append(h_n)
        c_finals.append(c_n)
        layer_in = ys
    pred = layer_in @ params["out_w_t"] + params["out_b"][0]
    return jnp.swapaxes(pred, 0, 1), (jnp.stack(h_finals), jnp.stack(c_finals))


# --------------------------------------------------------------------------
# Deterministic parameter init (PyTorch-style uniform(-1/sqrt(H), 1/sqrt(H)))
# --------------------------------------------------------------------------
def init_params(key, output_dim, hidden_dim, num_layers):
    k = 1.0 / jnp.sqrt(hidden_dim)
    params = {"lstm": []}
    for l in range(num_layers):
        d_in = output_dim if l == 0 else hidden_dim
        key, k1, k2, k3, k4 = jax.random.split(key, 5)
        w_ih = jax.random.uniform(k1, (4 * hidden_dim, d_in), jnp.float32, -k, k)
        w_hh = jax.random.uniform(k2, (4 * hidden_dim, hidden_dim), jnp.float32, -k, k)
        b_ih = jax.random.uniform(k3, (4 * hidden_dim,), jnp.float32, -k, k)
        b_hh = jax.random.uniform(k4, (4 * hidden_dim,), jnp.float32, -k, k)
        params["lstm"].append((w_ih.T, w_hh.T, (b_ih + b_hh)[None, :]))
    key, k5, k6 = jax.random.split(key, 3)
    w_out = jax.random.uniform(k5, (output_dim, hidden_dim), jnp.float32, -k, k)
    b_out = jax.random.uniform(k6, (output_dim,), jnp.float32, -k, k)
    params["out_w_t"] = w_out.T
    params["out_b"] = b_out[None, :]
    return params


if __name__ == "__main__":
    output_dim, hidden_dim, num_layers = 4, 32, 2
    B, T = 2, 8

    key = jax.random.PRNGKey(0)
    key, kp, kx, kh, kc = jax.random.split(key, 5)
    params = init_params(kp, output_dim, hidden_dim, num_layers)

    x = jax.random.normal(kx, (B, T, output_dim), jnp.float32)
    h0 = jax.random.normal(kh, (num_layers, B, hidden_dim), jnp.float32)
    c0 = jax.random.normal(kc, (num_layers, B, hidden_dim), jnp.float32)

    pred, (h_n, c_n) = decoder_forward(params, x, h0, c0)
    jax.block_until_ready((pred, h_n, c_n))

    # sanity check vs. pure-JAX reference of the PyTorch semantics
    pred_r, (h_r, c_r) = _ref_forward(params, x, h0, c0)
    assert pred.shape == (B, T, output_dim)
    assert h_n.shape == (num_layers, B, hidden_dim)
    assert c_n.shape == (num_layers, B, hidden_dim)
    assert jnp.allclose(pred, pred_r, atol=1e-5, rtol=1e-5)
    assert jnp.allclose(h_n, h_r, atol=1e-5, rtol=1e-5)
    assert jnp.allclose(c_n, c_r, atol=1e-5, rtol=1e-5)

    print("KERNEL_OK")
</pallas_src>

<mosaic_0001>
module attributes {stable_mosaic.version = 11 : i64} {
  func.func @_input_proj_kernel(%arg0: i32, %arg1: memref<16x4xf32, #tpu.memory_space<vmem>>, %arg2: memref<4x128xf32, #tpu.memory_space<vmem>>, %arg3: memref<1x128xf32, #tpu.memory_space<vmem>>, %arg4: memref<16x128xf32, #tpu.memory_space<vmem>>) attributes {dimension_semantics = [#tpu.dimension_semantics<parallel>], iteration_bounds = array<i64: 1>, scalar_prefetch = 0 : i64, scratch_operands = 0 : i64, tpu.core_type = #tpu.core_type<tc>, window_params = [{transform_indices = @transform_0, window_bounds = array<i64: 16, 4>}, {pipeline_mode = #tpu.pipeline_mode<synchronous>, transform_indices = @transform_1, window_bounds = array<i64: 4, 128>}, {pipeline_mode = #tpu.pipeline_mode<synchronous>, transform_indices = @transform_2, window_bounds = array<i64: 1, 128>}, {transform_indices = @transform_3, window_bounds = array<i64: 16, 128>}]} {
    %c0 = arith.constant 0 : index
    %c0_0 = arith.constant 0 : index
    %0 = vector.load %arg1[%c0, %c0_0] : memref<16x4xf32, #tpu.memory_space<vmem>>, vector<16x4xf32>
    %c0_1 = arith.constant 0 : index
    %c0_2 = arith.constant 0 : index
    %1 = vector.load %arg2[%c0_1, %c0_2] : memref<4x128xf32, #tpu.memory_space<vmem>>, vector<4x128xf32>
    %cst = arith.constant dense<0.000000e+00> : vector<16x128xf32>
    %2 = tpu.matmul %0, %1, %cst {dimension_numbers = #tpu.dot_dimension_numbers<[1], [0], [0], [1], [0, 0, 1, 1], [], []>} : vector<16x4xf32>, vector<4x128xf32>, vector<16x128xf32> -> vector<16x128xf32>
    %c0_3 = arith.constant 0 : index
    %c0_4 = arith.constant 0 : index
    %3 = vector.load %arg3[%c0_3, %c0_4] : memref<1x128xf32, #tpu.memory_space<vmem>>, vector<1x128xf32>
    %4 = vector.broadcast %3 : vector<1x128xf32> to vector<16x128xf32>
    %5 = arith.addf %2, %4 : vector<16x128xf32>
    %c0_5 = arith.constant 0 : index
    %c0_6 = arith.constant 0 : index
    %6 = vector.load %arg4[%c0_5, %c0_6] : memref<16x128xf32, #tpu.memory_space<vmem>>, vector<16x128xf32>
    tpu.vector_store %arg4[%c0_5, %c0_6], %5 {strides = array<i32>} : memref<16x128xf32, #tpu.memory_space<vmem>>, vector<16x128xf32>,
    return
  }
  func.func @transform_0(%arg0: i32) -> (i32, i32) {
    %c0_i32 = arith.constant 0 : i32
    %c0_i32_0 = arith.constant 0 : i32
    return %arg0, %c0_i32 : i32, i32
  }
  func.func @transform_1(%arg0: i32) -> (i32, i32) {
    %c0_i32 = arith.constant 0 : i32
    %c0_i32_0 = arith.constant 0 : i32
    %c0_i32_1 = arith.constant 0 : i32
    return %c0_i32, %c0_i32_0 : i32, i32
  }
  func.func @transform_2(%arg0: i32) -> (i32, i32) {
    %c0_i32 = arith.constant 0 : i32
    %c0_i32_0 = arith.constant 0 : i32
    %c0_i32_1 = arith.constant 0 : i32
    return %c0_i32, %c0_i32_0 : i32, i32
  }
  func.func @transform_3(%arg0: i32) -> (i32, i32) {
    %c0_i32 = arith.constant 0 : i32
    %c0_i32_0 = arith.constant 0 : i32
    return %arg0, %c0_i32 : i32, i32
  }
}

module attributes {stable_mosaic.version = 11 : i64} {
  func.func @_lstm_recurrence_kernel(%arg0: memref<8x2x128xf32, #tpu.memory_space<vmem>>, %arg1: memref<32x128xf32, #tpu.memory_space<vmem>>, %arg2: memref<2x32xf32, #tpu.memory_space<vmem>>, %arg3: memref<2x32xf32, #tpu.memory_space<vmem>>, %arg4: memref<8x2x32xf32, #tpu.memory_space<vmem>>, %arg5: memref<2x32xf32, #tpu.memory_space<vmem>>, %arg6: memref<2x32xf32, #tpu.memory_space<vmem>>) attributes {dimension_semantics = [], scalar_prefetch = 0 : i64, scratch_operands = 0 : i64, tpu.core_type = #tpu.core_type<tc>} {
    %c0 = arith.constant 0 : index
    %c0_0 = arith.constant 0 : index
    %0 = vector.load %arg1[%c0, %c0_0] : memref<32x128xf32, #tpu.memory_space<vmem>>, vector<32x128xf32>
    %c0_1 = arith.constant 0 : index
    %c0_2 = arith.constant 0 : index
    %1 = vector.load %arg2[%c0_1, %c0_2] : memref<2x32xf32, #tpu.memory_space<vmem>>, vector<2x32xf32>
    %c0_3 = arith.constant 0 : index
    %c0_4 = arith.constant 0 : index
    %2 = vector.load %arg3[%c0_3, %c0_4] : memref<2x32xf32, #tpu.memory_space<vmem>>, vector<2x32xf32>
    %c0_i32 = arith.constant 0 : i32
    %3 = arith.index_cast %c0_i32 : i32 to index
    %c0_5 = arith.constant 0 : index
    %c0_6 = arith.constant 0 : index
    %4 = vector.load %arg0[%3, %c0_5, %c0_6] : memref<8x2x128xf32, #tpu.memory_space<vmem>>, vector<1x2x128xf32>
    %5 = vector.shape_cast %4 : vector<1x2x128xf32> to vector<2x128xf32>
    %cst = arith.constant dense<0.000000e+00> : vector<2x128xf32>
    %6 = tpu.matmul %1, %0, %cst {dimension_numbers = #tpu.dot_dimension_numbers<[1], [0], [0], [1], [0, 0, 1, 1], [], []>} : vector<2x32xf32>, vector<32x128xf32>, vector<2x128xf32> -> vector<2x128xf32>
    %7 = arith.addf %5, %6 : vector<2x128xf32>
    %8 = vector.extract_strided_slice %7 {offsets = [0, 0], sizes = [2, 32], strides = [1, 1]} : vector<2x128xf32> to vector<2x32xf32>
    %9 = arith.negf %8 : vector<2x32xf32>
    %10 = math.exp %9 : vector<2x32xf32>
    %cst_7 = arith.constant 1.000000e+00 : f32
    %11 = vector.broadcast %cst_7 : f32 to vector<2x32xf32>
    %12 = arith.addf %11, %10 : vector<2x32xf32>
    %13 = arith.divf %11, %12 : vector<2x32xf32>
    %14 = vector.extract_strided_slice %7 {offsets = [0, 32], sizes = [2, 32], strides = [1, 1]} : vector<2x128xf32> to vector<2x32xf32>
    %15 = arith.negf %14 : vector<2x32xf32>
    %16 = math.exp %15 : vector<2x32xf32>
    %cst_8 = arith.constant 1.000000e+00 : f32
    %17 = vector.broadcast %cst_8 : f32 to vector<2x32xf32>
    %18 = arith.addf %17, %16 : vector<2x32xf32>
    %19 = arith.divf %17, %18 : vector<2x32xf32>
    %20 = vector.extract_strided_slice %7 {offsets = [0, 64], sizes = [2, 32], strides = [1, 1]} : vector<2x128xf32> to vector<2x32xf32>
    %21 = math.tanh %20 : vector<2x32xf32>
    %22 = vector.extract_strided_slice %7 {offsets = [0, 96], sizes = [2, 32], strides = [1, 1]} : vector<2x128xf32> to vector<2x32xf32>
    %23 = arith.negf %22 : vector<2x32xf32>
    %24 = math.exp %23 : vector<2x32xf32>
    %cst_9 = arith.constant 1.000000e+00 : f32
    %25 = vector.broadcast %cst_9 : f32 to vector<2x32xf32>
    %26 = arith.addf %25, %24 : vector<2x32xf32>
    %27 = arith.divf %25, %26 : vector<2x32xf32>
    %28 = arith.mulf %19, %2 : vector<2x32xf32>
    %29 = arith.mulf %13, %21 : vector<2x32xf32>
    %30 = arith.addf %28, %29 : vector<2x32xf32>
    %31 = math.tanh %30 : vector<2x32xf32>
    %32 = arith.mulf %27, %31 : vector<2x32xf32>
    %33 = arith.index_cast %c0_i32 : i32 to index
    %c0_10 = arith.constant 0 : index
    %c0_11 = arith.constant 0 : index
    %34 = vector.load %arg4[%33, %c0_10, %c0_11] : memref<8x2x32xf32, #tpu.memory_space<vmem>>, vector<1x2x32xf32>
    %35 = vector.shape_cast %34 : vector<1x2x32xf32> to vector<2x32xf32>
    %36 = vector.shape_cast %32 : vector<2x32xf32> to vector<1x2x32xf32>
    tpu.vector_store %arg4[%33, %c0_10, %c0_11], %36 {strides = array<i32>} : memref<8x2x32xf32, #tpu.memory_space<vmem>>, vector<1x2x32xf32>,
    %c1_i32 = arith.constant 1 : i32
    %37 = arith.index_cast %c1_i32 : i32 to index
    %c0_12 = arith.constant 0 : index
    %c0_13 = arith.constant 0 : index
    %38 = vector.load %arg0[%37, %c0_12, %c0_13] : memref<8x2x128xf32, #tpu.memory_space<vmem>>, vector<1x2x128xf32>
    %39 = vector.shape_cast %38 : vector<1x2x128xf32> to vector<2x128xf32>
    %cst_14 = arith.constant dense<0.000000e+00> : vector<2x128xf32>
    %40 = tpu.matmul %32, %0, %cst_14 {dimension_numbers = #tpu.dot_dimension_numbers<[1], [0], [0], [1], [0, 0, 1, 1], [], []>} : vector<2x32xf32>, vector<32x128xf32>, vector<2x128xf32> -> vector<2x128xf32>
    %41 = arith.addf %39, %40 : vector<2x128xf32>
    %42 = vector.extract_strided_slice %41 {offsets = [0, 0], sizes = [2, 32], strides = [1, 1]} : vector<2x128xf32> to vector<2x32xf32>
    %43 = arith.negf %42 : vector<2x32xf32>
    %44 = math.exp %43 : vector<2x32xf32>
    %cst_15 = arith.constant 1.000000e+00 : f32
    %45 = vector.broadcast %cst_15 : f32 to vector<2x32xf32>
    %46 = arith.addf %45, %44 : vector<2x32xf32>
    %47 = arith.divf %45, %46 : vector<2x32xf32>
    %48 = vector.extract_strided_slice %41 {offsets = [0, 32], sizes = [2, 32], strides = [1, 1]} : vector<2x128xf32> to vector<2x32xf32>
    %49 = arith.negf %48 : vector<2x32xf32>
    %50 = math.exp %49 : vector<2x32xf32>
    %cst_16 = arith.constant 1.000000e+00 : f32
    %51 = vector.broadcast %cst_16 : f32 to vector<2x32xf32>
    %52 = arith.addf %51, %50 : vector<2x32xf32>
    %53 = arith.divf %51, %52 : vector<2x32xf32>
    %54 = vector.extract_strided_slice %41 {offsets = [0, 64], sizes = [2, 32], strides = [1, 1]} : vector<2x128xf32> to vector<2x32xf32>
    %55 = math.tanh %54 : vector<2x32xf32>
    %56 = vector.extract_strided_slice %41 {offsets = [0, 96], sizes = [2, 32], strides = [1, 1]} : vector<2x128xf32> to vector<2x32xf32>
    %57 = arith.negf %56 : vector<2x32xf32>
    %58 = math.exp %57 : vector<2x32xf32>
    %cst_17 = arith.constant 1.000000e+00 : f32
    %59 = vector.broadcast %cst_17 : f32 to vector<2x32xf32>
    %60 = arith.addf %59, %58 : vector<2x32xf32>
    %61 = arith.divf %59, %60 : vector<2x32xf32>
    %62 = arith.mulf %53, %30 : vector<2x32xf32>
    %63 = arith.mulf %47, %55 : vector<2x32xf32>
    %64 = arith.addf %62, %63 : vector<2x32xf32>
    %65 = math.tanh %64 : vector<2x32xf32>
    %66 = arith.mulf %61, %65 : vector<2x32xf32>
    %67 = arith.index_cast %c1_i32 : i32 to index
    %c0_18 = arith.constant 0 : index
    %c0_19 = arith.constant 0 : index
    %68 = vector.load %arg4[%67, %c0_18, %c0_19] : memref<8x2x32xf32, #tpu.memory_space<vmem>>, vector<1x2x32xf32>
    %69 = vector.shape_cast %68 : vector<1x2x32xf32> to vector<2x32xf32>
    %70 = vector.shape_cast %66 : vector<2x32xf32> to vector<1x2x32xf32>
    tpu.vector_store %arg4[%67, %c0_18, %c0_19], %70 {strides = array<i32>} : memref<8x2x32xf32, #tpu.memory_space<vmem>>, vector<1x2x32xf32>,
    %c2_i32 = arith.constant 2 : i32
    %71 = arith.index_cast %c2_i32 : i32 to index
    %c0_20 = arith.constant 0 : index
    %c0_21 = arith.constant 0 : index
    %72 = vector.load %arg0[%71, %c0_20, %c0_21] : memref<8x2x128xf32, #tpu.memory_space<vmem>>, vector<1x2x128xf32>
    %73 = vector.shape_cast %72 : vector<1x2x128xf32> to vector<2x128xf32>
    %cst_22 = arith.constant dense<0.000000e+00> : vector<2x128xf32>
    %74 = tpu.matmul %66, %0, %cst_22 {dimension_numbers = #tpu.dot_dimension_numbers<[1], [0], [0], [1], [0, 0, 1, 1], [], []>} : vector<2x32xf32>, vector<32x128xf32>, vector<2x128xf32> -> vector<2x128xf32>
    %75 = arith.addf %73, %74 : vector<2x128xf32>
    %76 = vector.extract_strided_slice %75 {offsets = [0, 0], sizes = [2, 32], strides = [1, 1]} : vector<2x128xf32> to vector<2x32xf32>
    %77 = arith.negf %76 : vector<2x32xf32>
    %78 = math.exp %77 : vector<2x32xf32>
    %cst_23 = arith.constant 1.000000e+00 : f32
    %79 = vector.broadcast %cst_23 : f32 to vector<2x32xf32>
    %80 = arith.addf %79, %78 : vector<2x32xf32>
    %81 = arith.divf %79, %80 : vector<2x32xf32>
    %82 = vector.extract_strided_slice %75 {offsets = [0, 32], sizes = [2, 32], strides = [1, 1]} : vector<2x128xf32> to vector<2x32xf32>
    %83 = arith.negf %82 : vector<2x32xf32>
    %84 = math.exp %83 : vector<2x32xf32>
    %cst_24 = arith.constant 1.000000e+00 : f32
    %85 = vector.broadcast %cst_24 : f32 to vector<2x32xf32>
    %86 = arith.addf %85, %84 : vector<2x32xf32>
    %87 = arith.divf %85, %86 : vector<2x32xf32>
    %88 = vector.extract_strided_slice %75 {offsets = [0, 64], sizes = [2, 32], strides = [1, 1]} : vector<2x128xf32> to vector<2x32xf32>
    %89 = math.tanh %88 : vector<2x32xf32>
    %90 = vector.extract_strided_slice %75 {offsets = [0, 96], sizes = [2, 32], strides = [1, 1]} : vector<2x128xf32> to vector<2x32xf32>
    %91 = arith.negf %90 : vector<2x32xf32>
    %92 = math.exp %91 : vector<2x32xf32>
    %cst_25 = arith.constant 1.000000e+00 : f32
    %93 = vector.broadcast %cst_25 : f32 to vector<2x32xf32>
    %94 = arith.addf %93, %92 : vector<2x32xf32>
    %95 = arith.divf %93, %94 : vector<2x32xf32>
    %96 = arith.mulf %87, %64 : vector<2x32xf32>
    %97 = arith.mulf %81, %89 : vector<2x32xf32>
    %98 = arith.addf %96, %97 : vector<2x32xf32>
    %99 = math.tanh %98 : vector<2x32xf32>
    %100 = arith.mulf %95, %99 : vector<2x32xf32>
    %101 = arith.index_cast %c2_i32 : i32 to index
    %c0_26 = arith.constant 0 : index
    %c0_27 = arith.constant 0 : index
    %102 = vector.load %arg4[%101, %c0_26, %c0_27] : memref<8x2x32xf32, #tpu.memory_space<vmem>>, vector<1x2x32xf32>
    %103 = vector.shape_cast %102 : vector<1x2x32xf32> to vector<2x32xf32>
    %104 = vector.shape_cast %100 : vector<2x32xf32> to vector<1x2x32xf32>
    tpu.vector_store %arg4[%101, %c0_26, %c0_27], %104 {strides = array<i32>} : memref<8x2x32xf32, #tpu.memory_space<vmem>>, vector<1x2x32xf32>,
    %c3_i32 = arith.constant 3 : i32
    %105 = arith.index_cast %c3_i32 : i32 to index
    %c0_28 = arith.constant 0 : index
    %c0_29 = arith.constant 0 : index
    %106 = vector.load %arg0[%105, %c0_28, %c0_29] : memref<8x2x128xf32, #tpu.memory_space<vmem>>, vector<1x2x128xf32>
    %107 = vector.shape_cast %106 : vector<1x2x128xf32> to vector<2x128xf32>
    %cst_30 = arith.constant dense<0.000000e+00> : vector<2x128xf32>
    %108 = tpu.matmul %100, %0, %cst_30 {dimension_numbers = #tpu.dot_dimension_numbers<[1], [0], [0], [1], [0, 0, 1, 1], [], []>} : vector<2x32xf32>, vector<32x128xf32>, vector<2x128xf32> -> vector<2x128xf32>
    %109 = arith.addf %107, %108 : vector<2x128xf32>
    %110 = vector.extract_strided_slice %109 {offsets = [0, 0], sizes = [2, 32], strides = [1, 1]} : vector<2x128xf32> to vector<2x32xf32>
    %111 = arith.negf %110 : vector<2x32xf32>
    %112 = math.exp %111 : vector<2x32xf32>
    %cst_31 = arith.constant 1.000000e+00 : f32
    %113 = vector.broadcast %cst_31 : f32 to vector<2x32xf32>
    %114 = arith.addf %113, %112 : vector<2x32xf32>
    %115 = arith.divf %113, %114 : vector<2x32xf32>
    %116 = vector.extract_strided_slice %109 {offsets = [0, 32], sizes = [2, 32], strides = [1, 1]} : vector<2x128xf32> to vector<2x32xf32>
    %117 = arith.negf %116 : vector<2x32xf32>
    %118 = math.exp %117 : vector<2x32xf32>
    %cst_32 = arith.constant 1.000000e+00 : f32
    %119 = vector.broadcast %cst_32 : f32 to vector<2x32xf32>
    %120 = arith.addf %119, %118 : vector<2x32xf32>
    %121 = arith.divf %119, %120 : vector<2x32xf32>
    %122 = vector.extract_strided_slice %109 {offsets = [0, 64], sizes = [2, 32], strides = [1, 1]} : vector<2x128xf32> to vector<2x32xf32>
    %123 = math.tanh %122 : vector<2x32xf32>
    %124 = vector.extract_strided_slice %109 {offsets = [0, 96], sizes = [2, 32], strides = [1, 1]} : vector<2x128xf32> to vector<2x32xf32>
    %125 = arith.negf %124 : vector<2x32xf32>
    %126 = math.exp %125 : vector<2x32xf32>
    %cst_33 = arith.constant 1.000000e+00 : f32
    %127 = vector.broadcast %cst_33 : f32 to vector<2x32xf32>
    %128 = arith.addf %127, %126 : vector<2x32xf32>
    %129 = arith.divf %127, %128 : vector<2x32xf32>
    %130 = arith.mulf %121, %98 : vector<2x32xf32>
    %131 = arith.mulf %115, %123 : vector<2x32xf32>
    %132 = arith.addf %130, %131 : vector<2x32xf32>
    %133 = math.tanh %132 : vector<2x32xf32>
    %134 = arith.mulf %129, %133 : vector<2x32xf32>
    %135 = arith.index_cast %c3_i32 : i32 to index
    %c0_34 = arith.constant 0 : index
    %c0_35 = arith.constant 0 : index
    %136 = vector.load %arg4[%135, %c0_34, %c0_35] : memref<8x2x32xf32, #tpu.memory_space<vmem>>, vector<1x2x32xf32>
    %137 = vector.shape_cast %136 : vector<1x2x32xf32> to vector<2x32xf32>
    %138 = vector.shape_cast %134 : vector<2x32xf32> to vector<1x2x32xf32>
    tpu.vector_store %arg4[%135, %c0_34, %c0_35], %138 {strides = array<i32>} : memref<8x2x32xf32, #tpu.memory_space<vmem>>, vector<1x2x32xf32>,
    %c4_i32 = arith.constant 4 : i32
    %139 = arith.index_cast %c4_i32 : i32 to index
    %c0_36 = arith.constant 0 : index
    %c0_37 = arith.constant 0 : index
    %140 = vector.load %arg0[%139, %c0_36, %c0_37] : memref<8x2x128xf32, #tpu.memory_space<vmem>>, vector<1x2x128xf32>
    %141 = vector.shape_cast %140 : vector<1x2x128xf32> to vector<2x128xf32>
    %cst_38 = arith.constant dense<0.000000e+00> : vector<2x128xf32>
    %142 = tpu.matmul %134, %0, %cst_38 {dimension_numbers = #tpu.dot_dimension_numbers<[1], [0], [0], [1], [0, 0, 1, 1], [], []>} : vector<2x32xf32>, vector<32x128xf32>, vector<2x128xf32> -> vector<2x128xf32>
    %143 = arith.addf %141, %142 : vector<2x128xf32>
    %144 = vector.extract_strided_slice %143 {offsets = [0, 0], sizes = [2, 32], strides = [1, 1]} : vector<2x128xf32> to vector<2x32xf32>
    %145 = arith.negf %144 : vector<2x32xf32>
    %146 = math.exp %145 : vector<2x32xf32>
    %cst_39 = arith.constant 1.000000e+00 : f32
    %147 = vector.broadcast %cst_39 : f32 to vector<2x32xf32>
    %148 = arith.addf %147, %146 : vector<2x32xf32>
    %149 = arith.divf %147, %148 : vector<2x32xf32>
    %150 = vector.extract_strided_slice %143 {offsets = [0, 32], sizes = [2, 32], strides = [1, 1]} : vector<2x128xf32> to vector<2x32xf32>
    %151 = arith.negf %150 : vector<2x32xf32>
    %152 = math.exp %151 : vector<2x32xf32>
    %cst_40 = arith.constant 1.000000e+00 : f32
    %153 = vector.broadcast %cst_40 : f32 to vector<2x32xf32>
    %154 = arith.addf %153, %152 : vector<2x32xf32>
    %155 = arith.divf %153, %154 : vector<2x32xf32>
    %156 = vector.extract_strided_slice %143 {offsets = [0, 64], sizes = [2, 32], strides = [1, 1]} : vector<2x128xf32> to vector<2x32xf32>
    %157 = math.tanh %156 : vector<2x32xf32>
    %158 = vector.extract_strided_slice %143 {offsets = [0, 96], sizes = [2, 32], strides = [1, 1]} : vector<2x128xf32> to vector<2x32xf32>
    %159 = arith.negf %158 : vector<2x32xf32>
    %160 = math.exp %159 : vector<2x32xf32>
    %cst_41 = arith.constant 1.000000e+00 : f32
    %161 = vector.broadcast %cst_41 : f32 to vector<2x32xf32>
    %162 = arith.addf %161, %160 : vector<2x32xf32>
    %163 = arith.divf %161, %162 : vector<2x32xf32>
    %164 = arith.mulf %155, %132 : vector<2x32xf32>
    %165 = arith.mulf %149, %157 : vector<2x32xf32>
    %166 = arith.addf %164, %165 : vector<2x32xf32>
    %167 = math.tanh %166 : vector<2x32xf32>
    %168 = arith.mulf %163, %167 : vector<2x32xf32>
    %169 = arith.index_cast %c4_i32 : i32 to index
    %c0_42 = arith.constant 0 : index
    %c0_43 = arith.constant 0 : index
    %170 = vector.load %arg4[%169, %c0_42, %c0_43] : memref<8x2x32xf32, #tpu.memory_space<vmem>>, vector<1x2x32xf32>
    %171 = vector.shape_cast %170 : vector<1x2x32xf32> to vector<2x32xf32>
    %172 = vector.shape_cast %168 : vector<2x32xf32> to vector<1x2x32xf32>
    tpu.vector_store %arg4[%169, %c0_42, %c0_43], %172 {strides = array<i32>} : memref<8x2x32xf32, #tpu.memory_space<vmem>>, vector<1x2x32xf32>,
    %c5_i32 = arith.constant 5 : i32
    %173 = arith.index_cast %c5_i32 : i32 to index
    %c0_44 = arith.constant 0 : index
    %c0_45 = arith.constant 0 : index
    %174 = vector.load %arg0[%173, %c0_44, %c0_45] : memref<8x2x128xf32, #tpu.memory_space<vmem>>, vector<1x2x128xf32>
    %175 = vector.shape_cast %174 : vector<1x2x128xf32> to vector<2x128xf32>
    %cst_46 = arith.constant dense<0.000000e+00> : vector<2x128xf32>
    %176 = tpu.matmul %168, %0, %cst_46 {dimension_numbers = #tpu.dot_dimension_numbers<[1], [0], [0], [1], [0, 0, 1, 1], [], []>} : vector<2x32xf32>, vector<32x128xf32>, vector<2x128xf32> -> vector<2x128xf32>
    %177 = arith.addf %175, %176 : vector<2x128xf32>
    %178 = vector.extract_strided_slice %177 {offsets = [0, 0], sizes = [2, 32], strides = [1, 1]} : vector<2x128xf32> to vector<2x32xf32>
    %179 = arith.negf %178 : vector<2x32xf32>
    %180 = math.exp %179 : vector<2x32xf32>
    %cst_47 = arith.constant 1.000000e+00 : f32
    %181 = vector.broadcast %cst_47 : f32 to vector<2x32xf32>
    %182 = arith.addf %181, %180 : vector<2x32xf32>
    %183 = arith.divf %181, %182 : vector<2x32xf32>
    %184 = vector.extract_strided_slice %177 {offsets = [0, 32], sizes = [2, 32], strides = [1, 1]} : vector<2x128xf32> to vector<2x32xf32>
    %185 = arith.negf %184 : vector<2x32xf32>
    %186 = math.exp %185 : vector<2x32xf32>
    %cst_48 = arith.constant 1.000000e+00 : f32
    %187 = vector.broadcast %cst_48 : f32 to vector<2x32xf32>
    %188 = arith.addf %187, %186 : vector<2x32xf32>
    %189 = arith.divf %187, %188 : vector<2x32xf32>
    %190 = vector.extract_strided_slice %177 {offsets = [0, 64], sizes = [2, 32], strides = [1, 1]} : vector<2x128xf32> to vector<2x32xf32>
    %191 = math.tanh %190 : vector<2x32xf32>
    %192 = vector.extract_strided_slice %177 {offsets = [0, 96], sizes = [2, 32], strides = [1, 1]} : vector<2x128xf32> to vector<2x32xf32>
    %193 = arith.negf %192 : vector<2x32xf32>
    %194 = math.exp %193 : vector<2x32xf32>
    %cst_49 = arith.constant 1.000000e+00 : f32
    %195 = vector.broadcast %cst_49 : f32 to vector<2x32xf32>
    %196 = arith.addf %195, %194 : vector<2x32xf32>
    %197 = arith.divf %195, %196 : vector<2x32xf32>
    %198 = arith.mulf %189, %166 : vector<2x32xf32>
    %199 = arith.mulf %183, %191 : vector<2x32xf32>
    %200 = arith.addf %198, %199 : vector<2x32xf32>
    %201 = math.tanh %200 : vector<2x32xf32>
    %202 = arith.mulf %197, %201 : vector<2x32xf32>
    %203 = arith.index_cast %c5_i32 : i32 to index
    %c0_50 = arith.constant 0 : index
    %c0_51 = arith.constant 0 : index
    %204 = vector.load %arg4[%203, %c0_50, %c0_51] : memref<8x2x32xf32, #tpu.memory_space<vmem>>, vector<1x2x32xf32>
    %205 = vector.shape_cast %204 : vector<1x2x32xf32> to vector<2x32xf32>
    %206 = vector.shape_cast %202 : vector<2x32xf32> to vector<1x2x32xf32>
    tpu.vector_store %arg4[%203, %c0_50, %c0_51], %206 {strides = array<i32>} : memref<8x2x32xf32, #tpu.memory_space<vmem>>, vector<1x2x32xf32>,
    %c6_i32 = arith.constant 6 : i32
    %207 = arith.index_cast %c6_i32 : i32 to index
    %c0_52 = arith.constant 0 : index
    %c0_53 = arith.constant 0 : index
    %208 = vector.load %arg0[%207, %c0_52, %c0_53] : memref<8x2x128xf32, #tpu.memory_space<vmem>>, vector<1x2x128xf32>
    %209 = vector.shape_cast %208 : vector<1x2x128xf32> to vector<2x128xf32>
    %cst_54 = arith.constant dense<0.000000e+00> : vector<2x128xf32>
    %210 = tpu.matmul %202, %0, %cst_54 {dimension_numbers = #tpu.dot_dimension_numbers<[1], [0], [0], [1], [0, 0, 1, 1], [], []>} : vector<2x32xf32>, vector<32x128xf32>, vector<2x128xf32> -> vector<2x128xf32>
    %211 = arith.addf %209, %210 : vector<2x128xf32>
    %212 = vector.extract_strided_slice %211 {offsets = [0, 0], sizes = [2, 32], strides = [1, 1]} : vector<2x128xf32> to vector<2x32xf32>
    %213 = arith.negf %212 : vector<2x32xf32>
    %214 = math.exp %213 : vector<2x32xf32>
    %cst_55 = arith.constant 1.000000e+00 : f32
    %215 = vector.broadcast %cst_55 : f32 to vector<2x32xf32>
    %216 = arith.addf %215, %214 : vector<2x32xf32>
    %217 = arith.divf %215, %216 : vector<2x32xf32>
    %218 = vector.extract_strided_slice %211 {offsets = [0, 32], sizes = [2, 32], strides = [1, 1]} : vector<2x128xf32> to vector<2x32xf32>
    %219 = arith.negf %218 : vector<2x32xf32>
    %220 = math.exp %219 : vector<2x32xf32>
    %cst_56 = arith.constant 1.000000e+00 : f32
    %221 = vector.broadcast %cst_56 : f32 to vector<2x32xf32>
    %222 = arith.addf %221, %220 : vector<2x32xf32>
    %223 = arith.divf %221, %222 : vector<2x32xf32>
    %224 = vector.extract_strided_slice %211 {offsets = [0, 64], sizes = [2, 32], strides = [1, 1]} : vector<2x128xf32> to vector<2x32xf32>
    %225 = math.tanh %224 : vector<2x32xf32>
    %226 = vector.extract_strided_slice %211 {offsets = [0, 96], sizes = [2, 32], strides = [1, 1]} : vector<2x128xf32> to vector<2x32xf32>
    %227 = arith.negf %226 : vector<2x32xf32>
    %228 = math.exp %227 : vector<2x32xf32>
    %cst_57 = arith.constant 1.000000e+00 : f32
    %229 = vector.broadcast %cst_57 : f32 to vector<2x32xf32>
    %230 = arith.addf %229, %228 : vector<2x32xf32>
    %231 = arith.divf %229, %230 : vector<2x32xf32>
    %232 = arith.mulf %223, %200 : vector<2x32xf32>
    %233 = arith.mulf %217, %225 : vector<2x32xf32>
    %234 = arith.addf %232, %233 : vector<2x32xf32>
    %235 = math.tanh %234 : vector<2x32xf32>
    %236 = arith.mulf %231, %235 : vector<2x32xf32>
    %237 = arith.index_cast %c6_i32 : i32 to index
    %c0_58 = arith.constant 0 : index
    %c0_59 = arith.constant 0 : index
    %238 = vector.load %arg4[%237, %c0_58, %c0_59] : memref<8x2x32xf32, #tpu.memory_space<vmem>>, vector<1x2x32xf32>
    %239 = vector.shape_cast %238 : vector<1x2x32xf32> to vector<2x32xf32>
    %240 = vector.shape_cast %236 : vector<2x32xf32> to vector<1x2x32xf32>
    tpu.vector_store %arg4[%237, %c0_58, %c0_59], %240 {strides = array<i32>} : memref<8x2x32xf32, #tpu.memory_space<vmem>>, vector<1x2x32xf32>,
    %c7_i32 = arith.constant 7 : i32
    %241 = arith.index_cast %c7_i32 : i32 to index
    %c0_60 = arith.constant 0 : index
    %c0_61 = arith.constant 0 : index
    %242 = vector.load %arg0[%241, %c0_60, %c0_61] : memref<8x2x128xf32, #tpu.memory_space<vmem>>, vector<1x2x128xf32>
    %243 = vector.shape_cast %242 : vector<1x2x128xf32> to vector<2x128xf32>
    %cst_62 = arith.constant dense<0.000000e+00> : vector<2x128xf32>
    %244 = tpu.matmul %236, %0, %cst_62 {dimension_numbers = #tpu.dot_dimension_numbers<[1], [0], [0], [1], [0, 0, 1, 1], [], []>} : vector<2x32xf32>, vector<32x128xf32>, vector<2x128xf32> -> vector<2x128xf32>
    %245 = arith.addf %243, %244 : vector<2x128xf32>
    %246 = vector.extract_strided_slice %245 {offsets = [0, 0], sizes = [2, 32], strides = [1, 1]} : vector<2x128xf32> to vector<2x32xf32>
    %247 = arith.negf %246 : vector<2x32xf32>
    %248 = math.exp %247 : vector<2x32xf32>
    %cst_63 = arith.constant 1.000000e+00 : f32
    %249 = vector.broadcast %cst_63 : f32 to vector<2x32xf32>
    %250 = arith.addf %249, %248 : vector<2x32xf32>
    %251 = arith.divf %249, %250 : vector<2x32xf32>
    %252 = vector.extract_strided_slice %245 {offsets = [0, 32], sizes = [2, 32], strides = [1, 1]} : vector<2x128xf32> to vector<2x32xf32>
    %253 = arith.negf %252 : vector<2x32xf32>
    %254 = math.exp %253 : vector<2x32xf32>
    %cst_64 = arith.constant 1.000000e+00 : f32
    %255 = vector.broadcast %cst_64 : f32 to vector<2x32xf32>
    %256 = arith.addf %255, %254 : vector<2x32xf32>
    %257 = arith.divf %255, %256 : vector<2x32xf32>
    %258 = vector.extract_strided_slice %245 {offsets = [0, 64], sizes = [2, 32], strides = [1, 1]} : vector<2x128xf32> to vector<2x32xf32>
    %259 = math.tanh %258 : vector<2x32xf32>
    %260 = vector.extract_strided_slice %245 {offsets = [0, 96], sizes = [2, 32], strides = [1, 1]} : vector<2x128xf32> to vector<2x32xf32>
    %261 = arith.negf %260 : vector<2x32xf32>
    %262 = math.exp %261 : vector<2x32xf32>
    %cst_65 = arith.constant 1.000000e+00 : f32
    %263 = vector.broadcast %cst_65 : f32 to vector<2x32xf32>
    %264 = arith.addf %263, %262 : vector<2x32xf32>
    %265 = arith.divf %263, %264 : vector<2x32xf32>
    %266 = arith.mulf %257, %234 : vector<2x32xf32>
    %267 = arith.mulf %251, %259 : vector<2x32xf32>
    %268 = arith.addf %266, %267 : vector<2x32xf32>
    %269 = math.tanh %268 : vector<2x32xf32>
    %270 = arith.mulf %265, %269 : vector<2x32xf32>
    %271 = arith.index_cast %c7_i32 : i32 to index
    %c0_66 = arith.constant 0 : index
    %c0_67 = arith.constant 0 : index
    %272 = vector.load %arg4[%271, %c0_66, %c0_67] : memref<8x2x32xf32, #tpu.memory_space<vmem>>, vector<1x2x32xf32>
    %273 = vector.shape_cast %272 : vector<1x2x32xf32> to vector<2x32xf32>
    %274 = vector.shape_cast %270 : vector<2x32xf32> to vector<1x2x32xf32>
    tpu.vector_store %arg4[%271, %c0_66, %c0_67], %274 {strides = array<i32>} : memref<8x2x32xf32, #tpu.memory_space<vmem>>, vector<1x2x32xf32>,
    %c8_i32 = arith.constant 8 : i32
    %c0_68 = arith.constant 0 : index
    %c0_69 = arith.constant 0 : index
    %275 = vector.load %arg5[%c0_68, %c0_69] : memref<2x32xf32, #tpu.memory_space<vmem>>, vector<2x32xf32>
    tpu.vector_store %arg5[%c0_68, %c0_69], %270 {strides = array<i32>} : memref<2x32xf32, #tpu.memory_space<vmem>>, vector<2x32xf32>,
    %c0_70 = arith.constant 0 : index
    %c0_71 = arith.constant 0 : index
    %276 = vector.load %arg6[%c0_70, %c0_71] : memref<2x32xf32, #tpu.memory_space<vmem>>, vector<2x32xf32>
    tpu.vector_store %arg6[%c0_70, %c0_71], %268 {strides = array<i32>} : memref<2x32xf32, #tpu.memory_space<vmem>>, vector<2x32xf32>,
    return
  }
}

module attributes {stable_mosaic.version = 11 : i64} {
  func.func @_input_proj_kernel(%arg0: i32, %arg1: memref<16x32xf32, #tpu.memory_space<vmem>>, %arg2: memref<32x128xf32, #tpu.memory_space<vmem>>, %arg3: memref<1x128xf32, #tpu.memory_space<vmem>>, %arg4: memref<16x128xf32, #tpu.memory_space<vmem>>) attributes {dimension_semantics = [#tpu.dimension_semantics<parallel>], iteration_bounds = array<i64: 1>, scalar_prefetch = 0 : i64, scratch_operands = 0 : i64, tpu.core_type = #tpu.core_type<tc>, window_params = [{transform_indices = @transform_0, window_bounds = array<i64: 16, 32>}, {pipeline_mode = #tpu.pipeline_mode<synchronous>, transform_indices = @transform_1, window_bounds = array<i64: 32, 128>}, {pipeline_mode = #tpu.pipeline_mode<synchronous>, transform_indices = @transform_2, window_bounds = array<i64: 1, 128>}, {transform_indices = @transform_3, window_bounds = array<i64: 16, 128>}]} {
    %c0 = arith.constant 0 : index
    %c0_0 = arith.constant 0 : index
    %0 = vector.load %arg1[%c0, %c0_0] : memref<16x32xf32, #tpu.memory_space<vmem>>, vector<16x32xf32>
    %c0_1 = arith.constant 0 : index
    %c0_2 = arith.constant 0 : index
    %1 = vector.load %arg2[%c0_1, %c0_2] : memref<32x128xf32, #tpu.memory_space<vmem>>, vector<32x128xf32>
    %cst = arith.constant dense<0.000000e+00> : vector<16x128xf32>
    %2 = tpu.matmul %0, %1, %cst {dimension_numbers = #tpu.dot_dimension_numbers<[1], [0], [0], [1], [0, 0, 1, 1], [], []>} : vector<16x32xf32>, vector<32x128xf32>, vector<16x128xf32> -> vector<16x128xf32>
    %c0_3 = arith.constant 0 : index
    %c0_4 = arith.constant 0 : index
    %3 = vector.load %arg3[%c0_3, %c0_4] : memref<1x128xf32, #tpu.memory_space<vmem>>, vector<1x128xf32>
    %4 = vector.broadcast %3 : vector<1x128xf32> to vector<16x128xf32>
    %5 = arith.addf %2, %4 : vector<16x128xf32>
    %c0_5 = arith.constant 0 : index
    %c0_6 = arith.constant 0 : index
    %6 = vector.load %arg4[%c0_5, %c0_6] : memref<16x128xf32, #tpu.memory_space<vmem>>, vector<16x128xf32>
    tpu.vector_store %arg4[%c0_5, %c0_6], %5 {strides = array<i32>} : memref<16x128xf32, #tpu.memory_space<vmem>>, vector<16x128xf32>,
    return
  }
  func.func @transform_0(%arg0: i32) -> (i32, i32) {
    %c0_i32 = arith.constant 0 : i32
    %c0_i32_0 = arith.constant 0 : i32
    return %arg0, %c0_i32 : i32, i32
  }
  func.func @transform_1(%arg0: i32) -> (i32, i32) {
    %c0_i32 = arith.constant 0 : i32
    %c0_i32_0 = arith.constant 0 : i32
    %c0_i32_1 = arith.constant 0 : i32
    return %c0_i32, %c0_i32_0 : i32, i32
  }
  func.func @transform_2(%arg0: i32) -> (i32, i32) {
    %c0_i32 = arith.constant 0 : i32
    %c0_i32_0 = arith.constant 0 : i32
    %c0_i32_1 = arith.constant 0 : i32
    return %c0_i32, %c0_i32_0 : i32, i32
  }
  func.func @transform_3(%arg0: i32) -> (i32, i32) {
    %c0_i32 = arith.constant 0 : i32
    %c0_i32_0 = arith.constant 0 : i32
    return %arg0, %c0_i32 : i32, i32
  }
}

module attributes {stable_mosaic.version = 11 : i64} {
  func.func @_lstm_last_layer_kernel(%arg0: memref<8x2x128xf32, #tpu.memory_space<vmem>>, %arg1: memref<32x128xf32, #tpu.memory_space<vmem>>, %arg2: memref<2x32xf32, #tpu.memory_space<vmem>>, %arg3: memref<2x32xf32, #tpu.memory_space<vmem>>, %arg4: memref<32x4xf32, #tpu.memory_space<vmem>>, %arg5: memref<1x4xf32, #tpu.memory_space<vmem>>, %arg6: memref<8x2x4xf32, #tpu.memory_space<vmem>>, %arg7: memref<2x32xf32, #tpu.memory_space<vmem>>, %arg8: memref<2x32xf32, #tpu.memory_space<vmem>>) attributes {dimension_semantics = [], scalar_prefetch = 0 : i64, scratch_operands = 0 : i64, tpu.core_type = #tpu.core_type<tc>} {
    %c0 = arith.constant 0 : index
    %c0_0 = arith.constant 0 : index
    %0 = vector.load %arg1[%c0, %c0_0] : memref<32x128xf32, #tpu.memory_space<vmem>>, vector<32x128xf32>
    %c0_1 = arith.constant 0 : index
    %c0_2 = arith.constant 0 : index
    %1 = vector.load %arg4[%c0_1, %c0_2] : memref<32x4xf32, #tpu.memory_space<vmem>>, vector<32x4xf32>
    %c0_3 = arith.constant 0 : index
    %c0_4 = arith.constant 0 : index
    %2 = vector.load %arg5[%c0_3, %c0_4] : memref<1x4xf32, #tpu.memory_space<vmem>>, vector<1x4xf32>
    %c0_5 = arith.constant 0 : index
    %c0_6 = arith.constant 0 : index
    %3 = vector.load %arg2[%c0_5, %c0_6] : memref<2x32xf32, #tpu.memory_space<vmem>>, vector<2x32xf32>
    %c0_7 = arith.constant 0 : index
    %c0_8 = arith.constant 0 : index
    %4 = vector.load %arg3[%c0_7, %c0_8] : memref<2x32xf32, #tpu.memory_space<vmem>>, vector<2x32xf32>
    %c0_i32 = arith.constant 0 : i32
    %5 = arith.index_cast %c0_i32 : i32 to index
    %c0_9 = arith.constant 0 : index
    %c0_10 = arith.constant 0 : index
    %6 = vector.load %arg0[%5, %c0_9, %c0_10] : memref<8x2x128xf32, #tpu.memory_space<vmem>>, vector<1x2x128xf32>
    %7 = vector.shape_cast %6 : vector<1x2x128xf32> to vector<2x128xf32>
    %cst = arith.constant dense<0.000000e+00> : vector<2x128xf32>
    %8 = tpu.matmul %3, %0, %cst {dimension_numbers = #tpu.dot_dimension_numbers<[1], [0], [0], [1], [0, 0, 1, 1], [], []>} : vector<2x32xf32>, vector<32x128xf32>, vector<2x128xf32> -> vector<2x128xf32>
    %9 = arith.addf %7, %8 : vector<2x128xf32>
    %10 = vector.extract_strided_slice %9 {offsets = [0, 0], sizes = [2, 32], strides = [1, 1]} : vector<2x128xf32> to vector<2x32xf32>
    %11 = arith.negf %10 : vector<2x32xf32>
    %12 = math.exp %11 : vector<2x32xf32>
    %cst_11 = arith.constant 1.000000e+00 : f32
    %13 = vector.broadcast %cst_11 : f32 to vector<2x32xf32>
    %14 = arith.addf %13, %12 : vector<2x32xf32>
    %15 = arith.divf %13, %14 : vector<2x32xf32>
    %16 = vector.extract_strided_slice %9 {offsets = [0, 32], sizes = [2, 32], strides = [1, 1]} : vector<2x128xf32> to vector<2x32xf32>
    %17 = arith.negf %16 : vector<2x32xf32>
    %18 = math.exp %17 : vector<2x32xf32>
    %cst_12 = arith.constant 1.000000e+00 : f32
    %19 = vector.broadcast %cst_12 : f32 to vector<2x32xf32>
    %20 = arith.addf %19, %18 : vector<2x32xf32>
    %21 = arith.divf %19, %20 : vector<2x32xf32>
    %22 = vector.extract_strided_slice %9 {offsets = [0, 64], sizes = [2, 32], strides = [1, 1]} : vector<2x128xf32> to vector<2x32xf32>
    %23 = math.tanh %22 : vector<2x32xf32>
    %24 = vector.extract_strided_slice %9 {offsets = [0, 96], sizes = [2, 32], strides = [1, 1]} : vector<2x128xf32> to vector<2x32xf32>
    %25 = arith.negf %24 : vector<2x32xf32>
    %26 = math.exp %25 : vector<2x32xf32>
    %cst_13 = arith.constant 1.000000e+00 : f32
    %27 = vector.broadcast %cst_13 : f32 to vector<2x32xf32>
    %28 = arith.addf %27, %26 : vector<2x32xf32>
    %29 = arith.divf %27, %28 : vector<2x32xf32>
    %30 = arith.mulf %21, %4 : vector<2x32xf32>
    %31 = arith.mulf %15, %23 : vector<2x32xf32>
    %32 = arith.addf %30, %31 : vector<2x32xf32>
    %33 = math.tanh %32 : vector<2x32xf32>
    %34 = arith.mulf %29, %33 : vector<2x32xf32>
    %cst_14 = arith.constant dense<0.000000e+00> : vector<2x4xf32>
    %35 = tpu.matmul %34, %1, %cst_14 {dimension_numbers = #tpu.dot_dimension_numbers<[1], [0], [0], [1], [0, 0, 1, 1], [], []>} : vector<2x32xf32>, vector<32x4xf32>, vector<2x4xf32> -> vector<2x4xf32>
    %36 = vector.broadcast %2 : vector<1x4xf32> to vector<2x4xf32>
    %37 = arith.addf %35, %36 : vector<2x4xf32>
    %38 = arith.index_cast %c0_i32 : i32 to index
    %c0_15 = arith.constant 0 : index
    %c0_16 = arith.constant 0 : index
    %39 = vector.load %arg6[%38, %c0_15, %c0_16] : memref<8x2x4xf32, #tpu.memory_space<vmem>>, vector<1x2x4xf32>
    %40 = vector.shape_cast %39 : vector<1x2x4xf32> to vector<2x4xf32>
    %41 = vector.shape_cast %37 : vector<2x4xf32> to vector<1x2x4xf32>
    tpu.vector_store %arg6[%38, %c0_15, %c0_16], %41 {strides = array<i32>} : memref<8x2x4xf32, #tpu.memory_space<vmem>>, vector<1x2x4xf32>,
    %c1_i32 = arith.constant 1 : i32
    %42 = arith.index_cast %c1_i32 : i32 to index
    %c0_17 = arith.constant 0 : index
    %c0_18 = arith.constant 0 : index
    %43 = vector.load %arg0[%42, %c0_17, %c0_18] : memref<8x2x128xf32, #tpu.memory_space<vmem>>, vector<1x2x128xf32>
    %44 = vector.shape_cast %43 : vector<1x2x128xf32> to vector<2x128xf32>
    %cst_19 = arith.constant dense<0.000000e+00> : vector<2x128xf32>
    %45 = tpu.matmul %34, %0, %cst_19 {dimension_numbers = #tpu.dot_dimension_numbers<[1], [0], [0], [1], [0, 0, 1, 1], [], []>} : vector<2x32xf32>, vector<32x128xf32>, vector<2x128xf32> -> vector<2x128xf32>
    %46 = arith.addf %44, %45 : vector<2x128xf32>
    %47 = vector.extract_strided_slice %46 {offsets = [0, 0], sizes = [2, 32], strides = [1, 1]} : vector<2x128xf32> to vector<2x32xf32>
    %48 = arith.negf %47 : vector<2x32xf32>
    %49 = math.exp %48 : vector<2x32xf32>
    %cst_20 = arith.constant 1.000000e+00 : f32
    %50 = vector.broadcast %cst_20 : f32 to vector<2x32xf32>
    %51 = arith.addf %50, %49 : vector<2x32xf32>
    %52 = arith.divf %50, %51 : vector<2x32xf32>
    %53 = vector.extract_strided_slice %46 {offsets = [0, 32], sizes = [2, 32], strides = [1, 1]} : vector<2x128xf32> to vector<2x32xf32>
    %54 = arith.negf %53 : vector<2x32xf32>
    %55 = math.exp %54 : vector<2x32xf32>
    %cst_21 = arith.constant 1.000000e+00 : f32
    %56 = vector.broadcast %cst_21 : f32 to vector<2x32xf32>
    %57 = arith.addf %56, %55 : vector<2x32xf32>
    %58 = arith.divf %56, %57 : vector<2x32xf32>
    %59 = vector.extract_strided_slice %46 {offsets = [0, 64], sizes = [2, 32], strides = [1, 1]} : vector<2x128xf32> to vector<2x32xf32>
    %60 = math.tanh %59 : vector<2x32xf32>
    %61 = vector.extract_strided_slice %46 {offsets = [0, 96], sizes = [2, 32], strides = [1, 1]} : vector<2x128xf32> to vector<2x32xf32>
    %62 = arith.negf %61 : vector<2x32xf32>
    %63 = math.exp %62 : vector<2x32xf32>
    %cst_22 = arith.constant 1.000000e+00 : f32
    %64 = vector.broadcast %cst_22 : f32 to vector<2x32xf32>
    %65 = arith.addf %64, %63 : vector<2x32xf32>
    %66 = arith.divf %64, %65 : vector<2x32xf32>
    %67 = arith.mulf %58, %32 : vector<2x32xf32>
    %68 = arith.mulf %52, %60 : vector<2x32xf32>
    %69 = arith.addf %67, %68 : vector<2x32xf32>
    %70 = math.tanh %69 : vector<2x32xf32>
    %71 = arith.mulf %66, %70 : vector<2x32xf32>
    %cst_23 = arith.constant dense<0.000000e+00> : vector<2x4xf32>
    %72 = tpu.matmul %71, %1, %cst_23 {dimension_numbers = #tpu.dot_dimension_numbers<[1], [0], [0], [1], [0, 0, 1, 1], [], []>} : vector<2x32xf32>, vector<32x4xf32>, vector<2x4xf32> -> vector<2x4xf32>
    %73 = vector.broadcast %2 : vector<1x4xf32> to vector<2x4xf32>
    %74 = arith.addf %72, %73 : vector<2x4xf32>
    %75 = arith.index_cast %c1_i32 : i32 to index
    %c0_24 = arith.constant 0 : index
    %c0_25 = arith.constant 0 : index
    %76 = vector.load %arg6[%75, %c0_24, %c0_25] : memref<8x2x4xf32, #tpu.memory_space<vmem>>, vector<1x2x4xf32>
    %77 = vector.shape_cast %76 : vector<1x2x4xf32> to vector<2x4xf32>
    %78 = vector.shape_cast %74 : vector<2x4xf32> to vector<1x2x4xf32>
    tpu.vector_store %arg6[%75, %c0_24, %c0_25], %78 {strides = array<i32>} : memref<8x2x4xf32, #tpu.memory_space<vmem>>, vector<1x2x4xf32>,
    %c2_i32 = arith.constant 2 : i32
    %79 = arith.index_cast %c2_i32 : i32 to index
    %c0_26 = arith.constant 0 : index
    %c0_27 = arith.constant 0 : index
    %80 = vector.load %arg0[%79, %c0_26, %c0_27] : memref<8x2x128xf32, #tpu.memory_space<vmem>>, vector<1x2x128xf32>
    %81 = vector.shape_cast %80 : vector<1x2x128xf32> to vector<2x128xf32>
    %cst_28 = arith.constant dense<0.000000e+00> : vector<2x128xf32>
    %82 = tpu.matmul %71, %0, %cst_28 {dimension_numbers = #tpu.dot_dimension_numbers<[1], [0], [0], [1], [0, 0, 1, 1], [], []>} : vector<2x32xf32>, vector<32x128xf32>, vector<2x128xf32> -> vector<2x128xf32>
    %83 = arith.addf %81, %82 : vector<2x128xf32>
    %84 = vector.extract_strided_slice %83 {offsets = [0, 0], sizes = [2, 32], strides = [1, 1]} : vector<2x128xf32> to vector<2x32xf32>
    %85 = arith.negf %84 : vector<2x32xf32>
    %86 = math.exp %85 : vector<2x32xf32>
    %cst_29 = arith.constant 1.000000e+00 : f32
    %87 = vector.broadcast %cst_29 : f32 to vector<2x32xf32>
    %88 = arith.addf %87, %86 : vector<2x32xf32>
    %89 = arith.divf %87, %88 : vector<2x32xf32>
    %90 = vector.extract_strided_slice %83 {offsets = [0, 32], sizes = [2, 32], strides = [1, 1]} : vector<2x128xf32> to vector<2x32xf32>
    %91 = arith.negf %90 : vector<2x32xf32>
    %92 = math.exp %91 : vector<2x32xf32>
    %cst_30 = arith.constant 1.000000e+00 : f32
    %93 = vector.broadcast %cst_30 : f32 to vector<2x32xf32>
    %94 = arith.addf %93, %92 : vector<2x32xf32>
    %95 = arith.divf %93, %94 : vector<2x32xf32>
    %96 = vector.extract_strided_slice %83 {offsets = [0, 64], sizes = [2, 32], strides = [1, 1]} : vector<2x128xf32> to vector<2x32xf32>
    %97 = math.tanh %96 : vector<2x32xf32>
    %98 = vector.extract_strided_slice %83 {offsets = [0, 96], sizes = [2, 32], strides = [1, 1]} : vector<2x128xf32> to vector<2x32xf32>
    %99 = arith.negf %98 : vector<2x32xf32>
    %100 = math.exp %99 : vector<2x32xf32>
    %cst_31 = arith.constant 1.000000e+00 : f32
    %101 = vector.broadcast %cst_31 : f32 to vector<2x32xf32>
    %102 = arith.addf %101, %100 : vector<2x32xf32>
    %103 = arith.divf %101, %102 : vector<2x32xf32>
    %104 = arith.mulf %95, %69 : vector<2x32xf32>
    %105 = arith.mulf %89, %97 : vector<2x32xf32>
    %106 = arith.addf %104, %105 : vector<2x32xf32>
    %107 = math.tanh %106 : vector<2x32xf32>
    %108 = arith.mulf %103, %107 : vector<2x32xf32>
    %cst_32 = arith.constant dense<0.000000e+00> : vector<2x4xf32>
    %109 = tpu.matmul %108, %1, %cst_32 {dimension_numbers = #tpu.dot_dimension_numbers<[1], [0], [0], [1], [0, 0, 1, 1], [], []>} : vector<2x32xf32>, vector<32x4xf32>, vector<2x4xf32> -> vector<2x4xf32>
    %110 = vector.broadcast %2 : vector<1x4xf32> to vector<2x4xf32>
    %111 = arith.addf %109, %110 : vector<2x4xf32>
    %112 = arith.index_cast %c2_i32 : i32 to index
    %c0_33 = arith.constant 0 : index
    %c0_34 = arith.constant 0 : index
    %113 = vector.load %arg6[%112, %c0_33, %c0_34] : memref<8x2x4xf32, #tpu.memory_space<vmem>>, vector<1x2x4xf32>
    %114 = vector.shape_cast %113 : vector<1x2x4xf32> to vector<2x4xf32>
    %115 = vector.shape_cast %111 : vector<2x4xf32> to vector<1x2x4xf32>
    tpu.vector_store %arg6[%112, %c0_33, %c0_34], %115 {strides = array<i32>} : memref<8x2x4xf32, #tpu.memory_space<vmem>>, vector<1x2x4xf32>,
    %c3_i32 = arith.constant 3 : i32
    %116 = arith.index_cast %c3_i32 : i32 to index
    %c0_35 = arith.constant 0 : index
    %c0_36 = arith.constant 0 : index
    %117 = vector.load %arg0[%116, %c0_35, %c0_36] : memref<8x2x128xf32, #tpu.memory_space<vmem>>, vector<1x2x128xf32>
    %118 = vector.shape_cast %117 : vector<1x2x128xf32> to vector<2x128xf32>
    %cst_37 = arith.constant dense<0.000000e+00> : vector<2x128xf32>
    %119 = tpu.matmul %108, %0, %cst_37 {dimension_numbers = #tpu.dot_dimension_numbers<[1], [0], [0], [1], [0, 0, 1, 1], [], []>} : vector<2x32xf32>, vector<32x128xf32>, vector<2x128xf32> -> vector<2x128xf32>
    %120 = arith.addf %118, %119 : vector<2x128xf32>
    %121 = vector.extract_strided_slice %120 {offsets = [0, 0], sizes = [2, 32], strides = [1, 1]} : vector<2x128xf32> to vector<2x32xf32>
    %122 = arith.negf %121 : vector<2x32xf32>
    %123 = math.exp %122 : vector<2x32xf32>
    %cst_38 = arith.constant 1.000000e+00 : f32
    %124 = vector.broadcast %cst_38 : f32 to vector<2x32xf32>
    %125 = arith.addf %124, %123 : vector<2x32xf32>
    %126 = arith.divf %124, %125 : vector<2x32xf32>
    %127 = vector.extract_strided_slice %120 {offsets = [0, 32], sizes = [2, 32], strides = [1, 1]} : vector<2x128xf32> to vector<2x32xf32>
    %128 = arith.negf %127 : vector<2x32xf32>
    %129 = math.exp %128 : vector<2x32xf32>
    %cst_39 = arith.constant 1.000000e+00 : f32
    %130 = vector.broadcast %cst_39 : f32 to vector<2x32xf32>
    %131 = arith.addf %130, %129 : vector<2x32xf32>
    %132 = arith.divf %130, %131 : vector<2x32xf32>
    %133 = vector.extract_strided_slice %120 {offsets = [0, 64], sizes = [2, 32], strides = [1, 1]} : vector<2x128xf32> to vector<2x32xf32>
    %134 = math.tanh %133 : vector<2x32xf32>
    %135 = vector.extract_strided_slice %120 {offsets = [0, 96], sizes = [2, 32], strides = [1, 1]} : vector<2x128xf32> to vector<2x32xf32>
    %136 = arith.negf %135 : vector<2x32xf32>
    %137 = math.exp %136 : vector<2x32xf32>
    %cst_40 = arith.constant 1.000000e+00 : f32
    %138 = vector.broadcast %cst_40 : f32 to vector<2x32xf32>
    %139 = arith.addf %138, %137 : vector<2x32xf32>
    %140 = arith.divf %138, %139 : vector<2x32xf32>
    %141 = arith.mulf %132, %106 : vector<2x32xf32>
    %142 = arith.mulf %126, %134 : vector<2x32xf32>
    %143 = arith.addf %141, %142 : vector<2x32xf32>
    %144 = math.tanh %143 : vector<2x32xf32>
    %145 = arith.mulf %140, %144 : vector<2x32xf32>
    %cst_41 = arith.constant dense<0.000000e+00> : vector<2x4xf32>
    %146 = tpu.matmul %145, %1, %cst_41 {dimension_numbers = #tpu.dot_dimension_numbers<[1], [0], [0], [1], [0, 0, 1, 1], [], []>} : vector<2x32xf32>, vector<32x4xf32>, vector<2x4xf32> -> vector<2x4xf32>
    %147 = vector.broadcast %2 : vector<1x4xf32> to vector<2x4xf32>
    %148 = arith.addf %146, %147 : vector<2x4xf32>
    %149 = arith.index_cast %c3_i32 : i32 to index
    %c0_42 = arith.constant 0 : index
    %c0_43 = arith.constant 0 : index
    %150 = vector.load %arg6[%149, %c0_42, %c0_43] : memref<8x2x4xf32, #tpu.memory_space<vmem>>, vector<1x2x4xf32>
    %151 = vector.shape_cast %150 : vector<1x2x4xf32> to vector<2x4xf32>
    %152 = vector.shape_cast %148 : vector<2x4xf32> to vector<1x2x4xf32>
    tpu.vector_store %arg6[%149, %c0_42, %c0_43], %152 {strides = array<i32>} : memref<8x2x4xf32, #tpu.memory_space<vmem>>, vector<1x2x4xf32>,
    %c4_i32 = arith.constant 4 : i32
    %153 = arith.index_cast %c4_i32 : i32 to index
    %c0_44 = arith.constant 0 : index
    %c0_45 = arith.constant 0 : index
    %154 = vector.load %arg0[%153, %c0_44, %c0_45] : memref<8x2x128xf32, #tpu.memory_space<vmem>>, vector<1x2x128xf32>
    %155 = vector.shape_cast %154 : vector<1x2x128xf32> to vector<2x128xf32>
    %cst_46 = arith.constant dense<0.000000e+00> : vector<2x128xf32>
    %156 = tpu.matmul %145, %0, %cst_46 {dimension_numbers = #tpu.dot_dimension_numbers<[1], [0], [0], [1], [0, 0, 1, 1], [], []>} : vector<2x32xf32>, vector<32x128xf32>, vector<2x128xf32> -> vector<2x128xf32>
    %157 = arith.addf %155, %156 : vector<2x128xf32>
    %158 = vector.extract_strided_slice %157 {offsets = [0, 0], sizes = [2, 32], strides = [1, 1]} : vector<2x128xf32> to vector<2x32xf32>
    %159 = arith.negf %158 : vector<2x32xf32>
    %160 = math.exp %159 : vector<2x32xf32>
    %cst_47 = arith.constant 1.000000e+00 : f32
    %161 = vector.broadcast %cst_47 : f32 to vector<2x32xf32>
    %162 = arith.addf %161, %160 : vector<2x32xf32>
    %163 = arith.divf %161, %162 : vector<2x32xf32>
    %164 = vector.extract_strided_slice %157 {offsets = [0, 32], sizes = [2, 32], strides = [1, 1]} : vector<2x128xf32> to vector<2x32xf32>
    %165 = arith.negf %164 : vector<2x32xf32>
    %166 = math.exp %165 : vector<2x32xf32>
    %cst_48 = arith.constant 1.000000e+00 : f32
    %167 = vector.broadcast %cst_48 : f32 to vector<2x32xf32>
    %168 = arith.addf %167, %166 : vector<2x32xf32>
    %169 = arith.divf %167, %168 : vector<2x32xf32>
    %170 = vector.extract_strided_slice %157 {offsets = [0, 64], sizes = [2, 32], strides = [1, 1]} : vector<2x128xf32> to vector<2x32xf32>
    %171 = math.tanh %170 : vector<2x32xf32>
    %172 = vector.extract_strided_slice %157 {offsets = [0, 96], sizes = [2, 32], strides = [1, 1]} : vector<2x128xf32> to vector<2x32xf32>
    %173 = arith.negf %172 : vector<2x32xf32>
    %174 = math.exp %173 : vector<2x32xf32>
    %cst_49 = arith.constant 1.000000e+00 : f32
    %175 = vector.broadcast %cst_49 : f32 to vector<2x32xf32>
    %176 = arith.addf %175, %174 : vector<2x32xf32>
    %177 = arith.divf %175, %176 : vector<2x32xf32>
    %178 = arith.mulf %169, %143 : vector<2x32xf32>
    %179 = arith.mulf %163, %171 : vector<2x32xf32>
    %180 = arith.addf %178, %179 : vector<2x32xf32>
    %181 = math.tanh %180 : vector<2x32xf32>
    %182 = arith.mulf %177, %181 : vector<2x32xf32>
    %cst_50 = arith.constant dense<0.000000e+00> : vector<2x4xf32>
    %183 = tpu.matmul %182, %1, %cst_50 {dimension_numbers = #tpu.dot_dimension_numbers<[1], [0], [0], [1], [0, 0, 1, 1], [], []>} : vector<2x32xf32>, vector<32x4xf32>, vector<2x4xf32> -> vector<2x4xf32>
    %184 = vector.broadcast %2 : vector<1x4xf32> to vector<2x4xf32>
    %185 = arith.addf %183, %184 : vector<2x4xf32>
    %186 = arith.index_cast %c4_i32 : i32 to index
    %c0_51 = arith.constant 0 : index
    %c0_52 = arith.constant 0 : index
    %187 = vector.load %arg6[%186, %c0_51, %c0_52] : memref<8x2x4xf32, #tpu.memory_space<vmem>>, vector<1x2x4xf32>
    %188 = vector.shape_cast %187 : vector<1x2x4xf32> to vector<2x4xf32>
    %189 = vector.shape_cast %185 : vector<2x4xf32> to vector<1x2x4xf32>
    tpu.vector_store %arg6[%186, %c0_51, %c0_52], %189 {strides = array<i32>} : memref<8x2x4xf32, #tpu.memory_space<vmem>>, vector<1x2x4xf32>,
    %c5_i32 = arith.constant 5 : i32
    %190 = arith.index_cast %c5_i32 : i32 to index
    %c0_53 = arith.constant 0 : index
    %c0_54 = arith.constant 0 : index
    %191 = vector.load %arg0[%190, %c0_53, %c0_54] : memref<8x2x128xf32, #tpu.memory_space<vmem>>, vector<1x2x128xf32>
    %192 = vector.shape_cast %191 : vector<1x2x128xf32> to vector<2x128xf32>
    %cst_55 = arith.constant dense<0.000000e+00> : vector<2x128xf32>
    %193 = tpu.matmul %182, %0, %cst_55 {dimension_numbers = #tpu.dot_dimension_numbers<[1], [0], [0], [1], [0, 0, 1, 1], [], []>} : vector<2x32xf32>, vector<32x128xf32>, vector<2x128xf32> -> vector<2x128xf32>
    %194 = arith.addf %192, %193 : vector<2x128xf32>
    %195 = vector.extract_strided_slice %194 {offsets = [0, 0], sizes = [2, 32], strides = [1, 1]} : vector<2x128xf32> to vector<2x32xf32>
    %196 = arith.negf %195 : vector<2x32xf32>
    %197 = math.exp %196 : vector<2x32xf32>
    %cst_56 = arith.constant 1.000000e+00 : f32
    %198 = vector.broadcast %cst_56 : f32 to vector<2x32xf32>
    %199 = arith.addf %198, %197 : vector<2x32xf32>
    %200 = arith.divf %198, %199 : vector<2x32xf32>
    %201 = vector.extract_strided_slice %194 {offsets = [0, 32], sizes = [2, 32], strides = [1, 1]} : vector<2x128xf32> to vector<2x32xf32>
    %202 = arith.negf %201 : vector<2x32xf32>
    %203 = math.exp %202 : vector<2x32xf32>
    %cst_57 = arith.constant 1.000000e+00 : f32
    %204 = vector.broadcast %cst_57 : f32 to vector<2x32xf32>
    %205 = arith.addf %204, %203 : vector<2x32xf32>
    %206 = arith.divf %204, %205 : vector<2x32xf32>
    %207 = vector.extract_strided_slice %194 {offsets = [0, 64], sizes = [2, 32], strides = [1, 1]} : vector<2x128xf32> to vector<2x32xf32>
    %208 = math.tanh %207 : vector<2x32xf32>
    %209 = vector.extract_strided_slice %194 {offsets = [0, 96], sizes = [2, 32], strides = [1, 1]} : vector<2x128xf32> to vector<2x32xf32>
    %210 = arith.negf %209 : vector<2x32xf32>
    %211 = math.exp %210 : vector<2x32xf32>
    %cst_58 = arith.constant 1.000000e+00 : f32
    %212 = vector.broadcast %cst_58 : f32 to vector<2x32xf32>
    %213 = arith.addf %212, %211 : vector<2x32xf32>
    %214 = arith.divf %212, %213 : vector<2x32xf32>
    %215 = arith.mulf %206, %180 : vector<2x32xf32>
    %216 = arith.mulf %200, %208 : vector<2x32xf32>
    %217 = arith.addf %215, %216 : vector<2x32xf32>
    %218 = math.tanh %217 : vector<2x32xf32>
    %219 = arith.mulf %214, %218 : vector<2x32xf32>
    %cst_59 = arith.constant dense<0.000000e+00> : vector<2x4xf32>
    %220 = tpu.matmul %219, %1, %cst_59 {dimension_numbers = #tpu.dot_dimension_numbers<[1], [0], [0], [1], [0, 0, 1, 1], [], []>} : vector<2x32xf32>, vector<32x4xf32>, vector<2x4xf32> -> vector<2x4xf32>
    %221 = vector.broadcast %2 : vector<1x4xf32> to vector<2x4xf32>
    %222 = arith.addf %220, %221 : vector<2x4xf32>
    %223 = arith.index_cast %c5_i32 : i32 to index
    %c0_60 = arith.constant 0 : index
    %c0_61 = arith.constant 0 : index
    %224 = vector.load %arg6[%223, %c0_60, %c0_61] : memref<8x2x4xf32, #tpu.memory_space<vmem>>, vector<1x2x4xf32>
    %225 = vector.shape_cast %224 : vector<1x2x4xf32> to vector<2x4xf32>
    %226 = vector.shape_cast %222 : vector<2x4xf32> to vector<1x2x4xf32>
    tpu.vector_store %arg6[%223, %c0_60, %c0_61], %226 {strides = array<i32>} : memref<8x2x4xf32, #tpu.memory_space<vmem>>, vector<1x2x4xf32>,
    %c6_i32 = arith.constant 6 : i32
    %227 = arith.index_cast %c6_i32 : i32 to index
    %c0_62 = arith.constant 0 : index
    %c0_63 = arith.constant 0 : index
    %228 = vector.load %arg0[%227, %c0_62, %c0_63] : memref<8x2x128xf32, #tpu.memory_space<vmem>>, vector<1x2x128xf32>
    %229 = vector.shape_cast %228 : vector<1x2x128xf32> to vector<2x128xf32>
    %cst_64 = arith.constant dense<0.000000e+00> : vector<2x128xf32>
    %230 = tpu.matmul %219, %0, %cst_64 {dimension_numbers = #tpu.dot_dimension_numbers<[1], [0], [0], [1], [0, 0, 1, 1], [], []>} : vector<2x32xf32>, vector<32x128xf32>, vector<2x128xf32> -> vector<2x128xf32>
    %231 = arith.addf %229, %230 : vector<2x128xf32>
    %232 = vector.extract_strided_slice %231 {offsets = [0, 0], sizes = [2, 32], strides = [1, 1]} : vector<2x128xf32> to vector<2x32xf32>
    %233 = arith.negf %232 : vector<2x32xf32>
    %234 = math.exp %233 : vector<2x32xf32>
    %cst_65 = arith.constant 1.000000e+00 : f32
    %235 = vector.broadcast %cst_65 : f32 to vector<2x32xf32>
    %236 = arith.addf %235, %234 : vector<2x32xf32>
    %237 = arith.divf %235, %236 : vector<2x32xf32>
    %238 = vector.extract_strided_slice %231 {offsets = [0, 32], sizes = [2, 32], strides = [1, 1]} : vector<2x128xf32> to vector<2x32xf32>
    %239 = arith.negf %238 : vector<2x32xf32>
    %240 = math.exp %239 : vector<2x32xf32>
    %cst_66 = arith.constant 1.000000e+00 : f32
    %241 = vector.broadcast %cst_66 : f32 to vector<2x32xf32>
    %242 = arith.addf %241, %240 : vector<2x32xf32>
    %243 = arith.divf %241, %242 : vector<2x32xf32>
    %244 = vector.extract_strided_slice %231 {offsets = [0, 64], sizes = [2, 32], strides = [1, 1]} : vector<2x128xf32> to vector<2x32xf32>
    %245 = math.tanh %244 : vector<2x32xf32>
    %246 = vector.extract_strided_slice %231 {offsets = [0, 96], sizes = [2, 32], strides = [1, 1]} : vector<2x128xf32> to vector<2x32xf32>
    %247 = arith.negf %246 : vector<2x32xf32>
    %248 = math.exp %247 : vector<2x32xf32>
    %cst_67 = arith.constant 1.000000e+00 : f32
    %249 = vector.broadcast %cst_67 : f32 to vector<2x32xf32>
    %250 = arith.addf %249, %248 : vector<2x32xf32>
    %251 = arith.divf %249, %250 : vector<2x32xf32>
    %252 = arith.mulf %243, %217 : vector<2x32xf32>
    %253 = arith.mulf %237, %245 : vector<2x32xf32>
    %254 = arith.addf %252, %253 : vector<2x32xf32>
    %255 = math.tanh %254 : vector<2x32xf32>
    %256 = arith.mulf %251, %255 : vector<2x32xf32>
    %cst_68 = arith.constant dense<0.000000e+00> : vector<2x4xf32>
    %257 = tpu.matmul %256, %1, %cst_68 {dimension_numbers = #tpu.dot_dimension_numbers<[1], [0], [0], [1], [0, 0, 1, 1], [], []>} : vector<2x32xf32>, vector<32x4xf32>, vector<2x4xf32> -> vector<2x4xf32>
    %258 = vector.broadcast %2 : vector<1x4xf32> to vector<2x4xf32>
    %259 = arith.addf %257, %258 : vector<2x4xf32>
    %260 = arith.index_cast %c6_i32 : i32 to index
    %c0_69 = arith.constant 0 : index
    %c0_70 = arith.constant 0 : index
    %261 = vector.load %arg6[%260, %c0_69, %c0_70] : memref<8x2x4xf32, #tpu.memory_space<vmem>>, vector<1x2x4xf32>
    %262 = vector.shape_cast %261 : vector<1x2x4xf32> to vector<2x4xf32>
    %263 = vector.shape_cast %259 : vector<2x4xf32> to vector<1x2x4xf32>
    tpu.vector_store %arg6[%260, %c0_69, %c0_70], %263 {strides = array<i32>} : memref<8x2x4xf32, #tpu.memory_space<vmem>>, vector<1x2x4xf32>,
    %c7_i32 = arith.constant 7 : i32
    %264 = arith.index_cast %c7_i32 : i32 to index
    %c0_71 = arith.constant 0 : index
    %c0_72 = arith.constant 0 : index
    %265 = vector.load %arg0[%264, %c0_71, %c0_72] : memref<8x2x128xf32, #tpu.memory_space<vmem>>, vector<1x2x128xf32>
    %266 = vector.shape_cast %265 : vector<1x2x128xf32> to vector<2x128xf32>
    %cst_73 = arith.constant dense<0.000000e+00> : vector<2x128xf32>
    %267 = tpu.matmul %256, %0, %cst_73 {dimension_numbers = #tpu.dot_dimension_numbers<[1], [0], [0], [1], [0, 0, 1, 1], [], []>} : vector<2x32xf32>, vector<32x128xf32>, vector<2x128xf32> -> vector<2x128xf32>
    %268 = arith.addf %266, %267 : vector<2x128xf32>
    %269 = vector.extract_strided_slice %268 {offsets = [0, 0], sizes = [2, 32], strides = [1, 1]} : vector<2x128xf32> to vector<2x32xf32>
    %270 = arith.negf %269 : vector<2x32xf32>
    %271 = math.exp %270 : vector<2x32xf32>
    %cst_74 = arith.constant 1.000000e+00 : f32
    %272 = vector.broadcast %cst_74 : f32 to vector<2x32xf32>
    %273 = arith.addf %272, %271 : vector<2x32xf32>
    %274 = arith.divf %272, %273 : vector<2x32xf32>
    %275 = vector.extract_strided_slice %268 {offsets = [0, 32], sizes = [2, 32], strides = [1, 1]} : vector<2x128xf32> to vector<2x32xf32>
    %276 = arith.negf %275 : vector<2x32xf32>
    %277 = math.exp %276 : vector<2x32xf32>
    %cst_75 = arith.constant 1.000000e+00 : f32
    %278 = vector.broadcast %cst_75 : f32 to vector<2x32xf32>
    %279 = arith.addf %278, %277 : vector<2x32xf32>
    %280 = arith.divf %278, %279 : vector<2x32xf32>
    %281 = vector.extract_strided_slice %268 {offsets = [0, 64], sizes = [2, 32], strides = [1, 1]} : vector<2x128xf32> to vector<2x32xf32>
    %282 = math.tanh %281 : vector<2x32xf32>
    %283 = vector.extract_strided_slice %268 {offsets = [0, 96], sizes = [2, 32], strides = [1, 1]} : vector<2x128xf32> to vector<2x32xf32>
    %284 = arith.negf %283 : vector<2x32xf32>
    %285 = math.exp %284 : vector<2x32xf32>
    %cst_76 = arith.constant 1.000000e+00 : f32
    %286 = vector.broadcast %cst_76 : f32 to vector<2x32xf32>
    %287 = arith.addf %286, %285 : vector<2x32xf32>
    %288 = arith.divf %286, %287 : vector<2x32xf32>
    %289 = arith.mulf %280, %254 : vector<2x32xf32>
    %290 = arith.mulf %274, %282 : vector<2x32xf32>
    %291 = arith.addf %289, %290 : vector<2x32xf32>
    %292 = math.tanh %291 : vector<2x32xf32>
    %293 = arith.mulf %288, %292 : vector<2x32xf32>
    %cst_77 = arith.constant dense<0.000000e+00> : vector<2x4xf32>
    %294 = tpu.matmul %293, %1, %cst_77 {dimension_numbers = #tpu.dot_dimension_numbers<[1], [0], [0], [1], [0, 0, 1, 1], [], []>} : vector<2x32xf32>, vector<32x4xf32>, vector<2x4xf32> -> vector<2x4xf32>
    %295 = vector.broadcast %2 : vector<1x4xf32> to vector<2x4xf32>
    %296 = arith.addf %294, %295 : vector<2x4xf32>
    %297 = arith.index_cast %c7_i32 : i32 to index
    %c0_78 = arith.constant 0 : index
    %c0_79 = arith.constant 0 : index
    %298 = vector.load %arg6[%297, %c0_78, %c0_79] : memref<8x2x4xf32, #tpu.memory_space<vmem>>, vector<1x2x4xf32>
    %299 = vector.shape_cast %298 : vector<1x2x4xf32> to vector<2x4xf32>
    %300 = vector.shape_cast %296 : vector<2x4xf32> to vector<1x2x4xf32>
    tpu.vector_store %arg6[%297, %c0_78, %c0_79], %300 {strides = array<i32>} : memref<8x2x4xf32, #tpu.memory_space<vmem>>, vector<1x2x4xf32>,
    %c8_i32 = arith.constant 8 : i32
    %c0_80 = arith.constant 0 : index
    %c0_81 = arith.constant 0 : index
    %301 = vector.load %arg7[%c0_80, %c0_81] : memref<2x32xf32, #tpu.memory_space<vmem>>, vector<2x32xf32>
    tpu.vector_store %arg7[%c0_80, %c0_81], %293 {strides = array<i32>} : memref<2x32xf32, #tpu.memory_space<vmem>>, vector<2x32xf32>,
    %c0_82 = arith.constant 0 : index
    %c0_83 = arith.constant 0 : index
    %302 = vector.load %arg8[%c0_82, %c0_83] : memref<2x32xf32, #tpu.memory_space<vmem>>, vector<2x32xf32>
    tpu.vector_store %arg8[%c0_82, %c0_83], %291 {strides = array<i32>} : memref<2x32xf32, #tpu.memory_space<vmem>>, vector<2x32xf32>,
    return
  }
}

</mosaic_0001>

<llo_original>
// kernel: decoder_forward.4
$region0: #{decoder_forward.4}
  #allocation0 [shape = 'u32[]', space=smem, size = 0x4, offset = 0x4, fixed_abs, tag = 'smem constant byte address 0x4 - core index']
  #allocation1 [shape = 'u32[144,128]{1,0:T(1,128)}', space=vmem, size = 0x12000, scoped, tag = 'internal scratch']
  %s0 = inlined_call_operand.vmem [shape: f32[16,4], index: 0, kind: input, shape index: {}]
  %s1 = inlined_call_operand.vmem [shape: f32[4,128], index: 1, kind: input, shape index: {}]
  %s2 = inlined_call_operand.vmem [shape: f32[1,128], index: 2, kind: input, shape index: {}]
  %s3 = inlined_call_operand.vmem [shape: f32[16,128], index: 3, kind: output, shape index: {}]
  %s4 = sld [smem:[#allocation0]]
  $region22: #{decoder_forward.4} parent=0
    _
  %s6 = ssub.s32 1, %s4
  %s7 = scalar_select 0, %s6, %s4
  // Predicated region
  $region2: #{decoder_forward.4} parent=0 // pred_check
    _
  $region3: #{decoder_forward.4} parent=0 // pred_check_branch
    %9 = sbr.rel (0) target = $region5
  $region4: #{decoder_forward.4} parent=0 // pred_region
    _
  $region5: #{decoder_forward.4} parent=0 // pred_fallthru
    _
  // Predicated region
  $region6: #{decoder_forward.4} parent=0 // pred_check
    _
  $region7: #{decoder_forward.4} parent=0 // pred_check_branch
    %11 = sbr.rel (0) target = $region9
  $region8: #{decoder_forward.4} parent=0 // pred_region
    _
  $region9: #{decoder_forward.4} parent=0 // pred_fallthru
    _
  // Predicated region
  $region10: #{decoder_forward.4} parent=0 // pred_check
    _
  $region11: #{decoder_forward.4} parent=0 // pred_check_branch
    %13 = sbr.rel (0) target = $region13
  $region12: #{decoder_forward.4} parent=0 // pred_region
    _
  $region13: #{decoder_forward.4} parent=0 // pred_fallthru
    _
  %v14 = vld [vmem:[%s0] sm:$0xff]
  %v15 = vld [vmem:[%s0 + $0x8] sm:$0xff]
  %v16 = vld [vmem:[%s1] sm:$0xf]
  %v17 = vld [vmem:[%s2] sm:$0x1]
  %v19 = vlaneseq
  %v20 = vshrl.u32 %v19, 7
  %v21 = vsub.s32 0, %v20
  %v22 = vrot.slane %v17, %v21
  %vm24 = vcmask 31744
  %v26 = vsel %vm24, %v14, 0
  %v29 = vsel %vm24, %v15, 0
  %vm31 = vcmask 1043456
  %v33 = vsel %vm31, %v16, 0
  %35 = vmatprep.subr.mxu0 0.0
  %36 = vmatpush1.msra.mxu0 %v33
  %37 = vmatprep.subr.mxu0 0.0
  %38 = vmatpush1.msra.mxu0 0.0
  %39 = vmatprep.subr.mxu0 0.0
  %40 = vmatpush1.msra.mxu0 0.0
  %41 = vmatprep.subr.mxu0 0.0
  %42 = vmatpush1.msra.mxu0 0.0
  %43 = vmatprep.subr.mxu0 0.0
  %44 = vmatpush1.msra.mxu0 0.0
  %45 = vmatprep.subr.mxu0 0.0
  %46 = vmatpush1.msra.mxu0 0.0
  %47 = vmatprep.subr.mxu0 0.0
  %48 = vmatpush1.msra.mxu0 0.0
  %49 = vmatprep.subr.mxu0 0.0
  %50 = vmatpush1.msra.mxu0 0.0
  %51 = vmatprep.subr.mxu0 0.0
  %52 = vmatpush1.msra.mxu0 0.0
  %53 = vmatprep.subr.mxu0 0.0
  %54 = vmatpush1.msra.mxu0 0.0
  %55 = vmatprep.subr.mxu0 0.0
  %56 = vmatpush1.msra.mxu0 0.0
  %57 = vmatprep.subr.mxu0 0.0
  %58 = vmatpush1.msra.mxu0 0.0
  %59 = vmatprep.subr.mxu0 0.0
  %60 = vmatpush1.msra.mxu0 0.0
  %61 = vmatprep.subr.mxu0 0.0
  %62 = vmatpush1.msra.mxu0 0.0
  %63 = vmatprep.subr.mxu0 0.0
  %64 = vmatpush1.msra.mxu0 0.0
  %65 = vmatprep.subr.mxu0 0.0
  %66 = vmatpush1.msra.mxu0 0.0
  %67 = vmatprep.subr.mxu0 0.0
  %68 = vmatpush1.msra.mxu0 0.0
  %69 = vmatprep.subr.mxu0 0.0
  %70 = vmatpush1.msra.mxu0 0.0
  %71 = vmatprep.subr.mxu0 0.0
  %72 = vmatpush1.msra.mxu0 0.0
  %73 = vmatprep.subr.mxu0 0.0
  %74 = vmatpush1.msra.mxu0 0.0
  %75 = vmatprep.subr.mxu0 0.0
  %76 = vmatpush1.msra.mxu0 0.0
  %77 = vmatprep.subr.mxu0 0.0
  %78 = vmatpush1.msra.mxu0 0.0
  %79 = vmatprep.subr.mxu0 0.0
  %80 = vmatpush1.msra.mxu0 0.0
  %81 = vmatprep.subr.mxu0 0.0
  %82 = vmatpush1.msra.mxu0 0.0
  %83 = vmatprep.subr.mxu0 0.0
  %84 = vmatpush1.msra.mxu0 0.0
  %85 = vmatprep.subr.mxu0 0.0
  %86 = vmatpush1.msra.mxu0 0.0
  %87 = vmatprep.subr.mxu0 0.0
  %88 = vmatpush1.msra.mxu0 0.0
  %89 = vmatprep.subr.mxu0 0.0
  %90 = vmatpush1.msra.mxu0 0.0
  %91 = vmatprep.subr.mxu0 0.0
  %92 = vmatpush1.msra.mxu0 0.0
  %93 = vmatprep.subr.mxu0 0.0
  %94 = vmatpush1.msra.mxu0 0.0
  %95 = vmatprep.subr.mxu0 0.0
  %96 = vmatpush1.msra.mxu0 0.0
  %97 = vmatprep.subr.mxu0 0.0
  %98 = vmatpush1.msra.mxu0 0.0
  %99 = vmatprep.mubr.f32.mxu0 0.0
  %100 = vmatmul.mubr.f32.gmra.mrb[0].mxu0 %v26
  %v101 = vpop.f32.mrb[0].mxu0
  %v102 = vadd.f32 %v22, %v101
  %v103 = vpop.f32.mrb[0].mxu0
  %104 = vmatprep.mubr.f32.mxu0 0.0
  %105 = vmatmul.mubr.f32.gmra.mrb[0].mxu0 %v29
  %v106 = vpop.f32.mrb[0].mxu0
  %v107 = vadd.f32 %v22, %v106
  %v108 = vpop.f32.mrb[0].mxu0
  %109 = vdwg.mxu0
  %110 = vst [vmem:[%s3] sm:$0xff] %v102
  %111 = vst [vmem:[%s3 + $0x8] sm:$0xff] %v107
  // Predicated region
  $region14: #{decoder_forward.4} parent=0 // pred_check
    _
  $region15: #{decoder_forward.4} parent=0 // pred_check_branch
    %113 = sbr.rel (0) target = $region17
  $region16: #{decoder_forward.4} parent=0 // pred_region
    _
  $region17: #{decoder_forward.4} parent=0 // pred_fallthru
    _
  // Predicated region
  $region18: #{decoder_forward.4} parent=0 // pred_check
    _
  $region19: #{decoder_forward.4} parent=0 // pred_check_branch
    %115 = sbr.rel (0) target = $region21
  $region20: #{decoder_forward.4} parent=0 // pred_region
    _
  $region21: #{decoder_forward.4} parent=0 // pred_fallthru
    _

// kernel: decoder_forward.6
$region0: #{decoder_forward.6}
  #allocation0 [shape = 'u32[]', space=smem, size = 0x4, offset = 0x4, fixed_abs, tag = 'smem constant byte address 0x4 - core index']
  #allocation1 [shape = 'u32[144,128]{1,0:T(1,128)}', space=vmem, size = 0x12000, scoped, tag = 'internal scratch']
  %s0 = inlined_call_operand.vmem [shape: f32[16,32], index: 0, kind: input, shape index: {}]
  %s1 = inlined_call_operand.vmem [shape: f32[32,128], index: 1, kind: input, shape index: {}]
  %s2 = inlined_call_operand.vmem [shape: f32[1,128], index: 2, kind: input, shape index: {}]
  %s3 = inlined_call_operand.vmem [shape: f32[16,128], index: 3, kind: output, shape index: {}]
  %s4 = sld [smem:[#allocation0]]
  $region22: #{decoder_forward.6} parent=0
    _
  %s6 = ssub.s32 1, %s4
  %s7 = scalar_select 0, %s6, %s4
  // Predicated region
  $region2: #{decoder_forward.6} parent=0 // pred_check
    _
  $region3: #{decoder_forward.6} parent=0 // pred_check_branch
    %9 = sbr.rel (0) target = $region5
  $region4: #{decoder_forward.6} parent=0 // pred_region
    _
  $region5: #{decoder_forward.6} parent=0 // pred_fallthru
    _
  // Predicated region
  $region6: #{decoder_forward.6} parent=0 // pred_check
    _
  $region7: #{decoder_forward.6} parent=0 // pred_check_branch
    %11 = sbr.rel (0) target = $region9
  $region8: #{decoder_forward.6} parent=0 // pred_region
    _
  $region9: #{decoder_forward.6} parent=0 // pred_fallthru
    _
  // Predicated region
  $region10: #{decoder_forward.6} parent=0 // pred_check
    _
  $region11: #{decoder_forward.6} parent=0 // pred_check_branch
    %13 = sbr.rel (0) target = $region13
  $region12: #{decoder_forward.6} parent=0 // pred_region
    _
  $region13: #{decoder_forward.6} parent=0 // pred_fallthru
    _
  %v14 = vld [vmem:[%s0] sm:$0xff]
  %v15 = vld [vmem:[%s0 + $0x8] sm:$0xff]
  %v16 = vld [vmem:[%s1] sm:$0xff]
  %v17 = vld [vmem:[%s1 + $0x8] sm:$0xff]
  %v18 = vld [vmem:[%s1 + $0x10] sm:$0xff]
  %v19 = vld [vmem:[%s1 + $0x18] sm:$0xff]
  %v20 = vld [vmem:[%s2] sm:$0x1]
  %v22 = vlaneseq
  %v23 = vshrl.u32 %v22, 7
  %v24 = vsub.s32 0, %v23
  %v25 = vrot.slane %v20, %v24
  %vm27 = vcmask 261120
  %v29 = vsel %vm27, %v14, 0
  %v32 = vsel %vm27, %v15, 0
  %34 = vmatprep.subr.mxu0 0.0
  %35 = vmatpush1.msra.mxu0 %v16
  %36 = vmatprep.subr.mxu0 0.0
  %37 = vmatpush1.msra.mxu0 %v17
  %38 = vmatprep.subr.mxu0 0.0
  %39 = vmatpush1.msra.mxu0 %v18
  %40 = vmatprep.subr.mxu0 0.0
  %41 = vmatpush1.msra.mxu0 %v19
  %42 = vmatprep.subr.mxu0 0.0
  %43 = vmatpush1.msra.mxu0 0.0
  %44 = vmatprep.subr.mxu0 0.0
  %45 = vmatpush1.msra.mxu0 0.0
  %46 = vmatprep.subr.mxu0 0.0
  %47 = vmatpush1.msra.mxu0 0.0
  %48 = vmatprep.subr.mxu0 0.0
  %49 = vmatpush1.msra.mxu0 0.0
  %50 = vmatprep.subr.mxu0 0.0
  %51 = vmatpush1.msra.mxu0 0.0
  %52 = vmatprep.subr.mxu0 0.0
  %53 = vmatpush1.msra.mxu0 0.0
  %54 = vmatprep.subr.mxu0 0.0
  %55 = vmatpush1.msra.mxu0 0.0
  %56 = vmatprep.subr.mxu0 0.0
  %57 = vmatpush1.msra.mxu0 0.0
  %58 = vmatprep.subr.mxu0 0.0
  %59 = vmatpush1.msra.mxu0 0.0
  %60 = vmatprep.subr.mxu0 0.0
  %61 = vmatpush1.msra.mxu0 0.0
  %62 = vmatprep.subr.mxu0 0.0
  %63 = vmatpush1.msra.mxu0 0.0
  %64 = vmatprep.subr.mxu0 0.0
  %65 = vmatpush1.msra.mxu0 0.0
  %66 = vmatprep.subr.mxu0 0.0
  %67 = vmatpush1.msra.mxu0 0.0
  %68 = vmatprep.subr.mxu0 0.0
  %69 = vmatpush1.msra.mxu0 0.0
  %70 = vmatprep.subr.mxu0 0.0
  %71 = vmatpush1.msra.mxu0 0.0
  %72 = vmatprep.subr.mxu0 0.0
  %73 = vmatpush1.msra.mxu0 0.0
  %74 = vmatprep.subr.mxu0 0.0
  %75 = vmatpush1.msra.mxu0 0.0
  %76 = vmatprep.subr.mxu0 0.0
  %77 = vmatpush1.msra.mxu0 0.0
  %78 = vmatprep.subr.mxu0 0.0
  %79 = vmatpush1.msra.mxu0 0.0
  %80 = vmatprep.subr.mxu0 0.0
  %81 = vmatpush1.msra.mxu0 0.0
  %82 = vmatprep.subr.mxu0 0.0
  %83 = vmatpush1.msra.mxu0 0.0
  %84 = vmatprep.subr.mxu0 0.0
  %85 = vmatpush1.msra.mxu0 0.0
  %86 = vmatprep.subr.mxu0 0.0
  %87 = vmatpush1.msra.mxu0 0.0
  %88 = vmatprep.subr.mxu0 0.0
  %89 = vmatpush1.msra.mxu0 0.0
  %90 = vmatprep.subr.mxu0 0.0
  %91 = vmatpush1.msra.mxu0 0.0
  %92 = vmatprep.subr.mxu0 0.0
  %93 = vmatpush1.msra.mxu0 0.0
  %94 = vmatprep.subr.mxu0 0.0
  %95 = vmatpush1.msra.mxu0 0.0
  %96 = vmatprep.subr.mxu0 0.0
  %97 = vmatpush1.msra.mxu0 0.0
  %98 = vmatprep.mubr.f32.mxu0 0.0
  %99 = vmatmul.mubr.f32.gmra.mrb[0].mxu0 %v29
  %v100 = vpop.f32.mrb[0].mxu0
  %v101 = vadd.f32 %v25, %v100
  %v102 = vpop.f32.mrb[0].mxu0
  %103 = vmatprep.mubr.f32.mxu0 0.0
  %104 = vmatmul.mubr.f32.gmra.mrb[0].mxu0 %v32
  %v105 = vpop.f32.mrb[0].mxu0
  %v106 = vadd.f32 %v25, %v105
  %v107 = vpop.f32.mrb[0].mxu0
  %108 = vdwg.mxu0
  %109 = vst [vmem:[%s3] sm:$0xff] %v101
  %110 = vst [vmem:[%s3 + $0x8] sm:$0xff] %v106
  // Predicated region
  $region14: #{decoder_forward.6} parent=0 // pred_check
    _
  $region15: #{decoder_forward.6} parent=0 // pred_check_branch
    %112 = sbr.rel (0) target = $region17
  $region16: #{decoder_forward.6} parent=0 // pred_region
    _
  $region17: #{decoder_forward.6} parent=0 // pred_fallthru
    _
  // Predicated region
  $region18: #{decoder_forward.6} parent=0 // pred_check
    _
  $region19: #{decoder_forward.6} parent=0 // pred_check_branch
    %114 = sbr.rel (0) target = $region21
  $region20: #{decoder_forward.6} parent=0 // pred_region
    _
  $region21: #{decoder_forward.6} parent=0 // pred_fallthru
    _

// kernel: decoder_forward.5
$region0: #{decoder_forward.5}
  #allocation0 [shape = 'u32[]', space=smem, size = 0x4, offset = 0x4, fixed_abs, tag = 'smem constant byte address 0x4 - core index']
  #allocation1 [shape = 'u32[144,128]{1,0:T(1,128)}', space=vmem, size = 0x12000, scoped, tag = 'internal scratch']
  %s0 = inlined_call_operand.vmem [shape: f32[8,2,128], index: 0, kind: input, shape index: {}]
  %s1 = inlined_call_operand.vmem [shape: f32[32,128], index: 1, kind: input, shape index: {}]
  %s2 = inlined_call_operand.vmem [shape: f32[2,32], index: 2, kind: input, shape index: {}]
  %s3 = inlined_call_operand.vmem [shape: f32[2,32], index: 3, kind: input, shape index: {}]
  %s4 = inlined_call_operand.vmem [shape: f32[8,2,32], index: 4, kind: output, shape index: {0}]
  %s5 = inlined_call_operand.vmem [shape: f32[2,32], index: 5, kind: output, shape index: {1}]
  %s6 = inlined_call_operand.vmem [shape: f32[2,32], index: 6, kind: output, shape index: {2}]
  %7 = xla_tuple %s4, %s5, %s6
  %s8 = sld [smem:[#allocation0]]
  $region42: #{decoder_forward.5} parent=0
    _
  %s10 = ssub.s32 1, %s8
  %s11 = scalar_select 0, %s10, %s8
  // Predicated region
  $region2: #{decoder_forward.5} parent=0 // pred_check
    _
  $region3: #{decoder_forward.5} parent=0 // pred_check_branch
    %13 = sbr.rel (0) target = $region5
  $region4: #{decoder_forward.5} parent=0 // pred_region
    _
  $region5: #{decoder_forward.5} parent=0 // pred_fallthru
    _
  // Predicated region
  $region6: #{decoder_forward.5} parent=0 // pred_check
    _
  $region7: #{decoder_forward.5} parent=0 // pred_check_branch
    %15 = sbr.rel (0) target = $region9
  $region8: #{decoder_forward.5} parent=0 // pred_region
    _
  $region9: #{decoder_forward.5} parent=0 // pred_fallthru
    _
  // Predicated region
  $region10: #{decoder_forward.5} parent=0 // pred_check
    _
  $region11: #{decoder_forward.5} parent=0 // pred_check_branch
    %17 = sbr.rel (0) target = $region13
  $region12: #{decoder_forward.5} parent=0 // pred_region
    _
  $region13: #{decoder_forward.5} parent=0 // pred_fallthru
    _
  // Predicated region
  $region14: #{decoder_forward.5} parent=0 // pred_check
    _
  $region15: #{decoder_forward.5} parent=0 // pred_check_branch
    %19 = sbr.rel (0) target = $region17
  $region16: #{decoder_forward.5} parent=0 // pred_region
    _
  $region17: #{decoder_forward.5} parent=0 // pred_fallthru
    _
  %v20 = vld [vmem:[%s1] sm:$0xff]
  %v21 = vld [vmem:[%s1 + $0x8] sm:$0xff]
  %v22 = vld [vmem:[%s1 + $0x10] sm:$0xff]
  %v23 = vld [vmem:[%s1 + $0x18] sm:$0xff]
  %v24 = vld [vmem:[%s2] sm:$0x3]
  %v25 = vld [vmem:[%s3] sm:$0x3]
  %v26 = vld [vmem:[%s0] sm:$0x3]
  %vm27 = vcmask 261120
  %v29 = vsel %vm27, %v24, 0
  %31 = vmatprep.subr.mxu0 0.0
  %32 = vmatpush1.msra.mxu0 %v20
  %33 = vmatprep.subr.mxu0 0.0
  %34 = vmatpush1.msra.mxu0 %v21
  %35 = vmatprep.subr.mxu0 0.0
  %36 = vmatpush1.msra.mxu0 %v22
  %37 = vmatprep.subr.mxu0 0.0
  %38 = vmatpush1.msra.mxu0 %v23
  %39 = vmatprep.subr.mxu0 0.0
  %40 = vmatpush1.msra.mxu0 0.0
  %41 = vmatprep.subr.mxu0 0.0
  %42 = vmatpush1.msra.mxu0 0.0
  %43 = vmatprep.subr.mxu0 0.0
  %44 = vmatpush1.msra.mxu0 0.0
  %45 = vmatprep.subr.mxu0 0.0
  %46 = vmatpush1.msra.mxu0 0.0
  %47 = vmatprep.subr.mxu0 0.0
  %48 = vmatpush1.msra.mxu0 0.0
  %49 = vmatprep.subr.mxu0 0.0
  %50 = vmatpush1.msra.mxu0 0.0
  %51 = vmatprep.subr.mxu0 0.0
  %52 = vmatpush1.msra.mxu0 0.0
  %53 = vmatprep.subr.mxu0 0.0
  %54 = vmatpush1.msra.mxu0 0.0
  %55 = vmatprep.subr.mxu0 0.0
  %56 = vmatpush1.msra.mxu0 0.0
  %57 = vmatprep.subr.mxu0 0.0
  %58 = vmatpush1.msra.mxu0 0.0
  %59 = vmatprep.subr.mxu0 0.0
  %60 = vmatpush1.msra.mxu0 0.0
  %61 = vmatprep.subr.mxu0 0.0
  %62 = vmatpush1.msra.mxu0 0.0
  %63 = vmatprep.subr.mxu0 0.0
  %64 = vmatpush1.msra.mxu0 0.0
  %65 = vmatprep.subr.mxu0 0.0
  %66 = vmatpush1.msra.mxu0 0.0
  %67 = vmatprep.subr.mxu0 0.0
  %68 = vmatpush1.msra.mxu0 0.0
  %69 = vmatprep.subr.mxu0 0.0
  %70 = vmatpush1.msra.mxu0 0.0
  %71 = vmatprep.subr.mxu0 0.0
  %72 = vmatpush1.msra.mxu0 0.0
  %73 = vmatprep.subr.mxu0 0.0
  %74 = vmatpush1.msra.mxu0 0.0
  %75 = vmatprep.subr.mxu0 0.0
  %76 = vmatpush1.msra.mxu0 0.0
  %77 = vmatprep.subr.mxu0 0.0
  %78 = vmatpush1.msra.mxu0 0.0
  %79 = vmatprep.subr.mxu0 0.0
  %80 = vmatpush1.msra.mxu0 0.0
  %81 = vmatprep.subr.mxu0 0.0
  %82 = vmatpush1.msra.mxu0 0.0
  %83 = vmatprep.subr.mxu0 0.0
  %84 = vmatpush1.msra.mxu0 0.0
  %85 = vmatprep.subr.mxu0 0.0
  %86 = vmatpush1.msra.mxu0 0.0
  %87 = vmatprep.subr.mxu0 0.0
  %88 = vmatpush1.msra.mxu0 0.0
  %89 = vmatprep.subr.mxu0 0.0
  %90 = vmatpush1.msra.mxu0 0.0
  %91 = vmatprep.subr.mxu0 0.0
  %92 = vmatpush1.msra.mxu0 0.0
  %93 = vmatprep.subr.mxu0 0.0
  %94 = vmatpush1.msra.mxu0 0.0
  %95 = vmatprep.mubr.f32.mxu0 0.0
  %96 = vmatmul.mubr.f32.gmra.mrb[0].mxu0 %v29
  %v97 = vpop.f32.mrb[0].mxu0
  %v98 = vadd.f32 0.0, %v97
  %v99 = vpop.f32.mrb[0].mxu0
  %100 = vdwg.mxu0
  %v101 = vadd.f32 %v26, %v98
  %v102 = vxor.u32 %v101, 2147483648
  %v103 = vmul.f32 %v102, 1.442695
  %v104 = vpow.pop %v103
  %v105 = vadd.f32 %v104, 1.0
  %v106 = vrcp.pop %v105
  %v107 = vmul.f32 1.0, %v106
  %v108 = vtanh.pop %v101
  %110 = vrot.lane.b32.xlu0 %v25, 32
  %v111 = vpop.permute.xlu0 %110
  %v113 = vmul.f32 %v107, %v111
  %115 = vrot.lane.b32.xlu0 %v108, 64
  %v116 = vpop.permute.xlu0 %115
  %v118 = vmul.f32 %v107, %v116
  %120 = vrot.lane.b32.xlu0 %v118, 32
  %v121 = vpop.permute.xlu0 %120
  %v123 = vadd.f32 %v113, %v121
  %v124 = vtanh.pop %v123
  %126 = vrot.lane.b32.xlu0 %v124, 64
  %v127 = vpop.permute.xlu0 %126
  %v129 = vmul.f32 %v107, %v127
  %131 = vrot.lane.b32.xlu0 %v129, 32
  %v132 = vpop.permute.xlu0 %131
  %vm134 = vcmask 254976
  %135 = vst.msk [vmem:[%s4] sm:$0x3] %vm134, %v132
  %s136 = scalar_lea.vmem %s0, 2
  %v137 = vld [vmem:[%s136] sm:$0x3]
  %v138 = vsel %vm27, %v132, 0
  %140 = vmatprep.subr.mxu0 0.0
  %141 = vmatpush1.msra.mxu0 %v20
  %142 = vmatprep.subr.mxu0 0.0
  %143 = vmatpush1.msra.mxu0 %v21
  %144 = vmatprep.subr.mxu0 0.0
  %145 = vmatpush1.msra.mxu0 %v22
  %146 = vmatprep.subr.mxu0 0.0
  %147 = vmatpush1.msra.mxu0 %v23
  %148 = vmatprep.subr.mxu0 0.0
  %149 = vmatpush1.msra.mxu0 0.0
  %150 = vmatprep.subr.mxu0 0.0
  %151 = vmatpush1.msra.mxu0 0.0
  %152 = vmatprep.subr.mxu0 0.0
  %153 = vmatpush1.msra.mxu0 0.0
  %154 = vmatprep.subr.mxu0 0.0
  %155 = vmatpush1.msra.mxu0 0.0
  %156 = vmatprep.subr.mxu0 0.0
  %157 = vmatpush1.msra.mxu0 0.0
  %158 = vmatprep.subr.mxu0 0.0
  %159 = vmatpush1.msra.mxu0 0.0
  %160 = vmatprep.subr.mxu0 0.0
  %161 = vmatpush1.msra.mxu0 0.0
  %162 = vmatprep.subr.mxu0 0.0
  %163 = vmatpush1.msra.mxu0 0.0
  %164 = vmatprep.subr.mxu0 0.0
  %165 = vmatpush1.msra.mxu0 0.0
  %166 = vmatprep.subr.mxu0 0.0
  %167 = vmatpush1.msra.mxu0 0.0
  %168 = vmatprep.subr.mxu0 0.0
  %169 = vmatpush1.msra.mxu0 0.0
  %170 = vmatprep.subr.mxu0 0.0
  %171 = vmatpush1.msra.mxu0 0.0
  %172 = vmatprep.subr.mxu0 0.0
  %173 = vmatpush1.msra.mxu0 0.0
  %174 = vmatprep.subr.mxu0 0.0
  %175 = vmatpush1.msra.mxu0 0.0
  %176 = vmatprep.subr.mxu0 0.0
  %177 = vmatpush1.msra.mxu0 0.0
  %178 = vmatprep.subr.mxu0 0.0
  %179 = vmatpush1.msra.mxu0 0.0
  %180 = vmatprep.subr.mxu0 0.0
  %181 = vmatpush1.msra.mxu0 0.0
  %182 = vmatprep.subr.mxu0 0.0
  %183 = vmatpush1.msra.mxu0 0.0
  %184 = vmatprep.subr.mxu0 0.0
  %185 = vmatpush1.msra.mxu0 0.0
  %186 = vmatprep.subr.mxu0 0.0
  %187 = vmatpush1.msra.mxu0 0.0
  %188 = vmatprep.subr.mxu0 0.0
  %189 = vmatpush1.msra.mxu0 0.0
  %190 = vmatprep.subr.mxu0 0.0
  %191 = vmatpush1.msra.mxu0 0.0
  %192 = vmatprep.subr.mxu0 0.0
  %193 = vmatpush1.msra.mxu0 0.0
  %194 = vmatprep.subr.mxu0 0.0
  %195 = vmatpush1.msra.mxu0 0.0
  %196 = vmatprep.subr.mxu0 0.0
  %197 = vmatpush1.msra.mxu0 0.0
  %198 = vmatprep.subr.mxu0 0.0
  %199 = vmatpush1.msra.mxu0 0.0
  %200 = vmatprep.subr.mxu0 0.0
  %201 = vmatpush1.msra.mxu0 0.0
  %202 = vmatprep.subr.mxu0 0.0
  %203 = vmatpush1.msra.mxu0 0.0
  %204 = vmatprep.mubr.f32.mxu0 0.0
  %205 = vmatmul.mubr.f32.gmra.mrb[0].mxu0 %v138
  %v206 = vpop.f32.mrb[0].mxu0
  %v207 = vadd.f32 0.0, %v206
  %v208 = vpop.f32.mrb[0].mxu0
  %209 = vdwg.mxu0
  %v210 = vadd.f32 %v137, %v207
  %v211 = vxor.u32 %v210, 2147483648
  %v212 = vmul.f32 %v211, 1.442695
  %v213 = vpow.pop %v212
  %v214 = vadd.f32 %v213, 1.0
  %v215 = vrcp.pop %v214
  %v216 = vmul.f32 1.0, %v215
  %v217 = vtanh.pop %v210
  %v218 = vmul.f32 %v216, %v123
  %220 = vrot.lane.b32.xlu0 %v217, 64
  %v221 = vpop.permute.xlu0 %220
  %v223 = vmul.f32 %v216, %v221
  %225 = vrot.lane.b32.xlu0 %v223, 32
  %v226 = vpop.permute.xlu0 %225
  %v228 = vadd.f32 %v218, %v226
  %v229 = vtanh.pop %v228
  %231 = vrot.lane.b32.xlu0 %v229, 64
  %v232 = vpop.permute.xlu0 %231
  %v234 = vmul.f32 %v216, %v232
  %236 = vrot.lane.b32.xlu0 %v234, 32
  %v237 = vpop.permute.xlu0 %236
  %s239 = scalar_lea.vmem %s4, 2
  %240 = vst.msk [vmem:[%s239] sm:$0x3] %vm134, %v237
  %s241 = scalar_lea.vmem %s0, 4
  %v242 = vld [vmem:[%s241] sm:$0x3]
  %v243 = vsel %vm27, %v237, 0
  %245 = vmatprep.subr.mxu0 0.0
  %246 = vmatpush1.msra.mxu0 %v20
  %247 = vmatprep.subr.mxu0 0.0
  %248 = vmatpush1.msra.mxu0 %v21
  %249 = vmatprep.subr.mxu0 0.0
  %250 = vmatpush1.msra.mxu0 %v22
  %251 = vmatprep.subr.mxu0 0.0
  %252 = vmatpush1.msra.mxu0 %v23
  %253 = vmatprep.subr.mxu0 0.0
  %254 = vmatpush1.msra.mxu0 0.0
  %255 = vmatprep.subr.mxu0 0.0
  %256 = vmatpush1.msra.mxu0 0.0
  %257 = vmatprep.subr.mxu0 0.0
  %258 = vmatpush1.msra.mxu0 0.0
  %259 = vmatprep.subr.mxu0 0.0
  %260 = vmatpush1.msra.mxu0 0.0
  %261 = vmatprep.subr.mxu0 0.0
  %262 = vmatpush1.msra.mxu0 0.0
  %263 = vmatprep.subr.mxu0 0.0
  %264 = vmatpush1.msra.mxu0 0.0
  %265 = vmatprep.subr.mxu0 0.0
  %266 = vmatpush1.msra.mxu0 0.0
  %267 = vmatprep.subr.mxu0 0.0
  %268 = vmatpush1.msra.mxu0 0.0
  %269 = vmatprep.subr.mxu0 0.0
  %270 = vmatpush1.msra.mxu0 0.0
  %271 = vmatprep.subr.mxu0 0.0
  %272 = vmatpush1.msra.mxu0 0.0
  %273 = vmatprep.subr.mxu0 0.0
  %274 = vmatpush1.msra.mxu0 0.0
  %275 = vmatprep.subr.mxu0 0.0
  %276 = vmatpush1.msra.mxu0 0.0
  %277 = vmatprep.subr.mxu0 0.0
  %278 = vmatpush1.msra.mxu0 0.0
  %279 = vmatprep.subr.mxu0 0.0
  %280 = vmatpush1.msra.mxu0 0.0
  %281 = vmatprep.subr.mxu0 0.0
  %282 = vmatpush1.msra.mxu0 0.0
  %283 = vmatprep.subr.mxu0 0.0
  %284 = vmatpush1.msra.mxu0 0.0
  %285 = vmatprep.subr.mxu0 0.0
  %286 = vmatpush1.msra.mxu0 0.0
  %287 = vmatprep.subr.mxu0 0.0
  %288 = vmatpush1.msra.mxu0 0.0
  %289 = vmatprep.subr.mxu0 0.0
  %290 = vmatpush1.msra.mxu0 0.0
  %291 = vmatprep.subr.mxu0 0.0
  %292 = vmatpush1.msra.mxu0 0.0
  %293 = vmatprep.subr.mxu0 0.0
  %294 = vmatpush1.msra.mxu0 0.0
  %295 = vmatprep.subr.mxu0 0.0
  %296 = vmatpush1.msra.mxu0 0.0
  %297 = vmatprep.subr.mxu0 0.0
  %298 = vmatpush1.msra.mxu0 0.0
  %299 = vmatprep.subr.mxu0 0.0
  %300 = vmatpush1.msra.mxu0 0.0
  %301 = vmatprep.subr.mxu0 0.0
  %302 = vmatpush1.msra.mxu0 0.0
  %303 = vmatprep.subr.mxu0 0.0
  %304 = vmatpush1.msra.mxu0 0.0
  %305 = vmatprep.subr.mxu0 0.0
  %306 = vmatpush1.msra.mxu0 0.0
  %307 = vmatprep.subr.mxu0 0.0
  %308 = vmatpush1.msra.mxu0 0.0
  %309 = vmatprep.mubr.f32.mxu0 0.0
  %310 = vmatmul.mubr.f32.gmra.mrb[0].mxu0 %v243
  %v311 = vpop.f32.mrb[0].mxu0
  %v312 = vadd.f32 0.0, %v311
  %v313 = vpop.f32.mrb[0].mxu0
  %314 = vdwg.mxu0
  %v315 = vadd.f32 %v242, %v312
  %v316 = vxor.u32 %v315, 2147483648
  %v317 = vmul.f32 %v316, 1.442695
  %v318 = vpow.pop %v317
  %v319 = vadd.f32 %v318, 1.0
  %v320 = vrcp.pop %v319
  %v321 = vmul.f32 1.0, %v320
  %v322 = vtanh.pop %v315
  %v323 = vmul.f32 %v321, %v228
  %325 = vrot.lane.b32.xlu0 %v322, 64
  %v326 = vpop.permute.xlu0 %325
  %v328 = vmul.f32 %v321, %v326
  %330 = vrot.lane.b32.xlu0 %v328, 32
  %v331 = vpop.permute.xlu0 %330
  %v333 = vadd.f32 %v323, %v331
  %v334 = vtanh.pop %v333
  %336 = vrot.lane.b32.xlu0 %v334, 64
  %v337 = vpop.permute.xlu0 %336
  %v339 = vmul.f32 %v321, %v337
  %341 = vrot.lane.b32.xlu0 %v339, 32
  %v342 = vpop.permute.xlu0 %341
  %s344 = scalar_lea.vmem %s4, 4
  %345 = vst.msk [vmem:[%s344] sm:$0x3] %vm134, %v342
  %s346 = scalar_lea.vmem %s0, 6
  %v347 = vld [vmem:[%s346] sm:$0x3]
  %v348 = vsel %vm27, %v342, 0
  %350 = vmatprep.subr.mxu0 0.0
  %351 = vmatpush1.msra.mxu0 %v20
  %352 = vmatprep.subr.mxu0 0.0
  %353 = vmatpush1.msra.mxu0 %v21
  %354 = vmatprep.subr.mxu0 0.0
  %355 = vmatpush1.msra.mxu0 %v22
  %356 = vmatprep.subr.mxu0 0.0
  %357 = vmatpush1.msra.mxu0 %v23
  %358 = vmatprep.subr.mxu0 0.0
  %359 = vmatpush1.msra.mxu0 0.0
  %360 = vmatprep.subr.mxu0 0.0
  %361 = vmatpush1.msra.mxu0 0.0
  %362 = vmatprep.subr.mxu0 0.0
  %363 = vmatpush1.msra.mxu0 0.0
  %364 = vmatprep.subr.mxu0 0.0
  %365 = vmatpush1.msra.mxu0 0.0
  %366 = vmatprep.subr.mxu0 0.0
  %367 = vmatpush1.msra.mxu0 0.0
  %368 = vmatprep.subr.mxu0 0.0
  %369 = vmatpush1.msra.mxu0 0.0
  %370 = vmatprep.subr.mxu0 0.0
  %371 = vmatpush1.msra.mxu0 0.0
  %372 = vmatprep.subr.mxu0 0.0
  %373 = vmatpush1.msra.mxu0 0.0
  %374 = vmatprep.subr.mxu0 0.0
  %375 = vmatpush1.msra.mxu0 0.0
  %376 = vmatprep.subr.mxu0 0.0
  %377 = vmatpush1.msra.mxu0 0.0
  %378 = vmatprep.subr.mxu0 0.0
  %379 = vmatpush1.msra.mxu0 0.0
  %380 = vmatprep.subr.mxu0 0.0
  %381 = vmatpush1.msra.mxu0 0.0
  %382 = vmatprep.subr.mxu0 0.0
  %383 = vmatpush1.msra.mxu0 0.0
  %384 = vmatprep.subr.mxu0 0.0
  %385 = vmatpush1.msra.mxu0 0.0
  %386 = vmatprep.subr.mxu0 0.0
  %387 = vmatpush1.msra.mxu0 0.0
  %388 = vmatprep.subr.mxu0 0.0
  %389 = vmatpush1.msra.mxu0 0.0
  %390 = vmatprep.subr.mxu0 0.0
  %391 = vmatpush1.msra.mxu0 0.0
  %392 = vmatprep.subr.mxu0 0.0
  %393 = vmatpush1.msra.mxu0 0.0
  %394 = vmatprep.subr.mxu0 0.0
  %395 = vmatpush1.msra.mxu0 0.0
  %396 = vmatprep.subr.mxu0 0.0
  %397 = vmatpush1.msra.mxu0 0.0
  %398 = vmatprep.subr.mxu0 0.0
  %399 = vmatpush1.msra.mxu0 0.0
  %400 = vmatprep.subr.mxu0 0.0
  %401 = vmatpush1.msra.mxu0 0.0
  %402 = vmatprep.subr.mxu0 0.0
  %403 = vmatpush1.msra.mxu0 0.0
  %404 = vmatprep.subr.mxu0 0.0
  %405 = vmatpush1.msra.mxu0 0.0
  %406 = vmatprep.subr.mxu0 0.0
  %407 = vmatpush1.msra.mxu0 0.0
  %408 = vmatprep.subr.mxu0 0.0
  %409 = vmatpush1.msra.mxu0 0.0
  %410 = vmatprep.subr.mxu0 0.0
  %411 = vmatpush1.msra.mxu0 0.0
  %412 = vmatprep.subr.mxu0 0.0
  %413 = vmatpush1.msra.mxu0 0.0
  %414 = vmatprep.mubr.f32.mxu0 0.0
  %415 = vmatmul.mubr.f32.gmra.mrb[0].mxu0 %v348
  %v416 = vpop.f32.mrb[0].mxu0
  %v417 = vadd.f32 0.0, %v416
  %v418 = vpop.f32.mrb[0].mxu0
  %419 = vdwg.mxu0
  %v420 = vadd.f32 %v347, %v417
  %v421 = vxor.u32 %v420, 2147483648
  %v422 = vmul.f32 %v421, 1.442695
  %v423 = vpow.pop %v422
  %v424 = vadd.f32 %v423, 1.0
  %v425 = vrcp.pop %v424
  %v426 = vmul.f32 1.0, %v425
  %v427 = vtanh.pop %v420
  %v428 = vmul.f32 %v426, %v333
  %430 = vrot.lane.b32.xlu0 %v427, 64
  %v431 = vpop.permute.xlu0 %430
  %v433 = vmul.f32 %v426, %v431
  %435 = vrot.lane.b32.xlu0 %v433, 32
  %v436 = vpop.permute.xlu0 %435
  %v438 = vadd.f32 %v428, %v436
  %v439 = vtanh.pop %v438
  %441 = vrot.lane.b32.xlu0 %v439, 64
  %v442 = vpop.permute.xlu0 %441
  %v444 = vmul.f32 %v426, %v442
  %446 = vrot.lane.b32.xlu0 %v444, 32
  %v447 = vpop.permute.xlu0 %446
  %s449 = scalar_lea.vmem %s4, 6
  %450 = vst.msk [vmem:[%s449] sm:$0x3] %vm134, %v447
  %s451 = scalar_lea.vmem %s0, 8
  %v452 = vld [vmem:[%s451] sm:$0x3]
  %v453 = vsel %vm27, %v447, 0
  %455 = vmatprep.subr.mxu0 0.0
  %456 = vmatpush1.msra.mxu0 %v20
  %457 = vmatprep.subr.mxu0 0.0
  %458 = vmatpush1.msra.mxu0 %v21
  %459 = vmatprep.subr.mxu0 0.0
  %460 = vmatpush1.msra.mxu0 %v22
  %461 = vmatprep.subr.mxu0 0.0
  %462 = vmatpush1.msra.mxu0 %v23
  %463 = vmatprep.subr.mxu0 0.0
  %464 = vmatpush1.msra.mxu0 0.0
  %465 = vmatprep.subr.mxu0 0.0
  %466 = vmatpush1.msra.mxu0 0.0
  %467 = vmatprep.subr.mxu0 0.0
  %468 = vmatpush1.msra.mxu0 0.0
  %469 = vmatprep.subr.mxu0 0.0
  %470 = vmatpush1.msra.mxu0 0.0
  %471 = vmatprep.subr.mxu0 0.0
  %472 = vmatpush1.msra.mxu0 0.0
  %473 = vmatprep.subr.mxu0 0.0
  %474 = vmatpush1.msra.mxu0 0.0
  %475 = vmatprep.subr.mxu0 0.0
  %476 = vmatpush1.msra.mxu0 0.0
  %477 = vmatprep.subr.mxu0 0.0
  %478 = vmatpush1.msra.mxu0 0.0
  %479 = vmatprep.subr.mxu0 0.0
  %480 = vmatpush1.msra.mxu0 0.0
  %481 = vmatprep.subr.mxu0 0.0
  %482 = vmatpush1.msra.mxu0 0.0
  %483 = vmatprep.subr.mxu0 0.0
  %484 = vmatpush1.msra.mxu0 0.0
  %485 = vmatprep.subr.mxu0 0.0
  %486 = vmatpush1.msra.mxu0 0.0
  %487 = vmatprep.subr.mxu0 0.0
  %488 = vmatpush1.msra.mxu0 0.0
  %489 = vmatprep.subr.mxu0 0.0
  %490 = vmatpush1.msra.mxu0 0.0
  %491 = vmatprep.subr.mxu0 0.0
  %492 = vmatpush1.msra.mxu0 0.0
  %493 = vmatprep.subr.mxu0 0.0
  %494 = vmatpush1.msra.mxu0 0.0
  %495 = vmatprep.subr.mxu0 0.0
  %496 = vmatpush1.msra.mxu0 0.0
  %497 = vmatprep.subr.mxu0 0.0
  %498 = vmatpush1.msra.mxu0 0.0
  %499 = vmatprep.subr.mxu0 0.0
  %500 = vmatpush1.msra.mxu0 0.0
  %501 = vmatprep.subr.mxu0 0.0
  %502 = vmatpush1.msra.mxu0 0.0
  %503 = vmatprep.subr.mxu0 0.0
  %504 = vmatpush1.msra.mxu0 0.0
  %505 = vmatprep.subr.mxu0 0.0
  %506 = vmatpush1.msra.mxu0 0.0
  %507 = vmatprep.subr.mxu0 0.0
  %508 = vmatpush1.msra.mxu0 0.0
  %509 = vmatprep.subr.mxu0 0.0
  %510 = vmatpush1.msra.mxu0 0.0
  %511 = vmatprep.subr.mxu0 0.0
  %512 = vmatpush1.msra.mxu0 0.0
  %513 = vmatprep.subr.mxu0 0.0
  %514 = vmatpush1.msra.mxu0 0.0
  %515 = vmatprep.subr.mxu0 0.0
  %516 = vmatpush1.msra.mxu0 0.0
  %517 = vmatprep.subr.mxu0 0.0
  %518 = vmatpush1.msra.mxu0 0.0
  %519 = vmatprep.mubr.f32.mxu0 0.0
  %520 = vmatmul.mubr.f32.gmra.mrb[0].mxu0 %v453
  %v521 = vpop.f32.mrb[0].mxu0
  %v522 = vadd.f32 0.0, %v521
  %v523 = vpop.f32.mrb[0].mxu0
  %524 = vdwg.mxu0
  %v525 = vadd.f32 %v452, %v522
  %v526 = vxor.u32 %v525, 2147483648
  %v527 = vmul.f32 %v526, 1.442695
  %v528 = vpow.pop %v527
  %v529 = vadd.f32 %v528, 1.0
  %v530 = vrcp.pop %v529
  %v531 = vmul.f32 1.0, %v530
  %v532 = vtanh.pop %v525
  %v533 = vmul.f32 %v531, %v438
  %535 = vrot.lane.b32.xlu0 %v532, 64
  %v536 = vpop.permute.xlu0 %535
  %v538 = vmul.f32 %v531, %v536
  %540 = vrot.lane.b32.xlu0 %v538, 32
  %v541 = vpop.permute.xlu0 %540
  %v543 = vadd.f32 %v533, %v541
  %v544 = vtanh.pop %v543
  %546 = vrot.lane.b32.xlu0 %v544, 64
  %v547 = vpop.permute.xlu0 %546
  %v549 = vmul.f32 %v531, %v547
  %551 = vrot.lane.b32.xlu0 %v549, 32
  %v552 = vpop.permute.xlu0 %551
  %s554 = scalar_lea.vmem %s4, 8
  %555 = vst.msk [vmem:[%s554] sm:$0x3] %vm134, %v552
  %s556 = scalar_lea.vmem %s0, 10
  %v557 = vld [vmem:[%s556] sm:$0x3]
  %v558 = vsel %vm27, %v552, 0
  %560 = vmatprep.subr.mxu0 0.0
  %561 = vmatpush1.msra.mxu0 %v20
  %562 = vmatprep.subr.mxu0 0.0
  %563 = vmatpush1.msra.mxu0 %v21
  %564 = vmatprep.subr.mxu0 0.0
  %565 = vmatpush1.msra.mxu0 %v22
  %566 = vmatprep.subr.mxu0 0.0
  %567 = vmatpush1.msra.mxu0 %v23
  %568 = vmatprep.subr.mxu0 0.0
  %569 = vmatpush1.msra.mxu0 0.0
  %570 = vmatprep.subr.mxu0 0.0
  %571 = vmatpush1.msra.mxu0 0.0
  %572 = vmatprep.subr.mxu0 0.0
  %573 = vmatpush1.msra.mxu0 0.0
  %574 = vmatprep.subr.mxu0 0.0
  %575 = vmatpush1.msra.mxu0 0.0
  %576 = vmatprep.subr.mxu0 0.0
  %577 = vmatpush1.msra.mxu0 0.0
  %578 = vmatprep.subr.mxu0 0.0
  %579 = vmatpush1.msra.mxu0 0.0
  %580 = vmatprep.subr.mxu0 0.0
  %581 = vmatpush1.msra.mxu0 0.0
  %582 = vmatprep.subr.mxu0 0.0
  %583 = vmatpush1.msra.mxu0 0.0
  %584 = vmatprep.subr.mxu0 0.0
  %585 = vmatpush1.msra.mxu0 0.0
  %586 = vmatprep.subr.mxu0 0.0
  %587 = vmatpush1.msra.mxu0 0.0
  %588 = vmatprep.subr.mxu0 0.0
  %589 = vmatpush1.msra.mxu0 0.0
  %590 = vmatprep.subr.mxu0 0.0
  %591 = vmatpush1.msra.mxu0 0.0
  %592 = vmatprep.subr.mxu0 0.0
  %593 = vmatpush1.msra.mxu0 0.0
  %594 = vmatprep.subr.mxu0 0.0
  %595 = vmatpush1.msra.mxu0 0.0
  %596 = vmatprep.subr.mxu0 0.0
  %597 = vmatpush1.msra.mxu0 0.0
  %598 = vmatprep.subr.mxu0 0.0
  %599 = vmatpush1.msra.mxu0 0.0
  %600 = vmatprep.subr.mxu0 0.0
  %601 = vmatpush1.msra.mxu0 0.0
  %602 = vmatprep.subr.mxu0 0.0
  %603 = vmatpush1.msra.mxu0 0.0
  %604 = vmatprep.subr.mxu0 0.0
  %605 = vmatpush1.msra.mxu0 0.0
  %606 = vmatprep.subr.mxu0 0.0
  %607 = vmatpush1.msra.mxu0 0.0
  %608 = vmatprep.subr.mxu0 0.0
  %609 = vmatpush1.msra.mxu0 0.0
  %610 = vmatprep.subr.mxu0 0.0
  %611 = vmatpush1.msra.mxu0 0.0
  %612 = vmatprep.subr.mxu0 0.0
  %613 = vmatpush1.msra.mxu0 0.0
  %614 = vmatprep.subr.mxu0 0.0
  %615 = vmatpush1.msra.mxu0 0.0
  %616 = vmatprep.subr.mxu0 0.0
  %617 = vmatpush1.msra.mxu0 0.0
  %618 = vmatprep.subr.mxu0 0.0
  %619 = vmatpush1.msra.mxu0 0.0
  %620 = vmatprep.subr.mxu0 0.0
  %621 = vmatpush1.msra.mxu0 0.0
  %622 = vmatprep.subr.mxu0 0.0
  %623 = vmatpush1.msra.mxu0 0.0
  %624 = vmatprep.mubr.f32.mxu0 0.0
  %625 = vmatmul.mubr.f32.gmra.mrb[0].mxu0 %v558
  %v626 = vpop.f32.mrb[0].mxu0
  %v627 = vadd.f32 0.0, %v626
  %v628 = vpop.f32.mrb[0].mxu0
  %629 = vdwg.mxu0
  %v630 = vadd.f32 %v557, %v627
  %v631 = vxor.u32 %v630, 2147483648
  %v632 = vmul.f32 %v631, 1.442695
  %v633 = vpow.pop %v632
  %v634 = vadd.f32 %v633, 1.0
  %v635 = vrcp.pop %v634
  %v636 = vmul.f32 1.0, %v635
  %v637 = vtanh.pop %v630
  %v638 = vmul.f32 %v636, %v543
  %640 = vrot.lane.b32.xlu0 %v637, 64
  %v641 = vpop.permute.xlu0 %640
  %v643 = vmul.f32 %v636, %v641
  %645 = vrot.lane.b32.xlu0 %v643, 32
  %v646 = vpop.permute.xlu0 %645
  %v648 = vadd.f32 %v638, %v646
  %v649 = vtanh.pop %v648
  %651 = vrot.lane.b32.xlu0 %v649, 64
  %v652 = vpop.permute.xlu0 %651
  %v654 = vmul.f32 %v636, %v652
  %656 = vrot.lane.b32.xlu0 %v654, 32
  %v657 = vpop.permute.xlu0 %656
  %s659 = scalar_lea.vmem %s4, 10
  %660 = vst.msk [vmem:[%s659] sm:$0x3] %vm134, %v657
  %s661 = scalar_lea.vmem %s0, 12
  %v662 = vld [vmem:[%s661] sm:$0x3]
  %v663 = vsel %vm27, %v657, 0
  %665 = vmatprep.subr.mxu0 0.0
  %666 = vmatpush1.msra.mxu0 %v20
  %667 = vmatprep.subr.mxu0 0.0
  %668 = vmatpush1.msra.mxu0 %v21
  %669 = vmatprep.subr.mxu0 0.0
  %670 = vmatpush1.msra.mxu0 %v22
  %671 = vmatprep.subr.mxu0 0.0
  %672 = vmatpush1.msra.mxu0 %v23
  %673 = vmatprep.subr.mxu0 0.0
  %674 = vmatpush1.msra.mxu0 0.0
  %675 = vmatprep.subr.mxu0 0.0
  %676 = vmatpush1.msra.mxu0 0.0
  %677 = vmatprep.subr.mxu0 0.0
  %678 = vmatpush1.msra.mxu0 0.0
  %679 = vmatprep.subr.mxu0 0.0
  %680 = vmatpush1.msra.mxu0 0.0
  %681 = vmatprep.subr.mxu0 0.0
  %682 = vmatpush1.msra.mxu0 0.0
  %683 = vmatprep.subr.mxu0 0.0
  %684 = vmatpush1.msra.mxu0 0.0
  %685 = vmatprep.subr.mxu0 0.0
  %686 = vmatpush1.msra.mxu0 0.0
  %687 = vmatprep.subr.mxu0 0.0
  %688 = vmatpush1.msra.mxu0 0.0
  %689 = vmatprep.subr.mxu0 0.0
  %690 = vmatpush1.msra.mxu0 0.0
  %691 = vmatprep.subr.mxu0 0.0
  %692 = vmatpush1.msra.mxu0 0.0
  %693 = vmatprep.subr.mxu0 0.0
  %694 = vmatpush1.msra.mxu0 0.0
  %695 = vmatprep.subr.mxu0 0.0
  %696 = vmatpush1.msra.mxu0 0.0
  %697 = vmatprep.subr.mxu0 0.0
  %698 = vmatpush1.msra.mxu0 0.0
  %699 = vmatprep.subr.mxu0 0.0
  %700 = vmatpush1.msra.mxu0 0.0
  %701 = vmatprep.subr.mxu0 0.0
  %702 = vmatpush1.msra.mxu0 0.0
  %703 = vmatprep.subr.mxu0 0.0
  %704 = vmatpush1.msra.mxu0 0.0
  %705 = vmatprep.subr.mxu0 0.0
  %706 = vmatpush1.msra.mxu0 0.0
  %707 = vmatprep.subr.mxu0 0.0
  %708 = vmatpush1.msra.mxu0 0.0
  %709 = vmatprep.subr.mxu0 0.0
  %710 = vmatpush1.msra.mxu0 0.0
  %711 = vmatprep.subr.mxu0 0.0
  %712 = vmatpush1.msra.mxu0 0.0
  %713 = vmatprep.subr.mxu0 0.0
  %714 = vmatpush1.msra.mxu0 0.0
  %715 = vmatprep.subr.mxu0 0.0
  %716 = vmatpush1.msra.mxu0 0.0
  %717 = vmatprep.subr.mxu0 0.0
  %718 = vmatpush1.msra.mxu0 0.0
  %719 = vmatprep.subr.mxu0 0.0
  %720 = vmatpush1.msra.mxu0 0.0
  %721 = vmatprep.subr.mxu0 0.0
  %722 = vmatpush1.msra.mxu0 0.0
  %723 = vmatprep.subr.mxu0 0.0
  %724 = vmatpush1.msra.mxu0 0.0
  %725 = vmatprep.subr.mxu0 0.0
  %726 = vmatpush1.msra.mxu0 0.0
  %727 = vmatprep.subr.mxu0 0.0
  %728 = vmatpush1.msra.mxu0 0.0
  %729 = vmatprep.mubr.f32.mxu0 0.0
  %730 = vmatmul.mubr.f32.gmra.mrb[0].mxu0 %v663
  %v731 = vpop.f32.mrb[0].mxu0
  %v732 = vadd.f32 0.0, %v731
  %v733 = vpop.f32.mrb[0].mxu0
  %734 = vdwg.mxu0
  %v735 = vadd.f32 %v662, %v732
  %v736 = vxor.u32 %v735, 2147483648
  %v737 = vmul.f32 %v736, 1.442695
  %v738 = vpow.pop %v737
  %v739 = vadd.f32 %v738, 1.0
  %v740 = vrcp.pop %v739
  %v741 = vmul.f32 1.0, %v740
  %v742 = vtanh.pop %v735
  %v743 = vmul.f32 %v741, %v648
  %745 = vrot.lane.b32.xlu0 %v742, 64
  %v746 = vpop.permute.xlu0 %745
  %v748 = vmul.f32 %v741, %v746
  %750 = vrot.lane.b32.xlu0 %v748, 32
  %v751 = vpop.permute.xlu0 %750
  %v753 = vadd.f32 %v743, %v751
  %v754 = vtanh.pop %v753
  %756 = vrot.lane.b32.xlu0 %v754, 64
  %v757 = vpop.permute.xlu0 %756
  %v759 = vmul.f32 %v741, %v757
  %761 = vrot.lane.b32.xlu0 %v759, 32
  %v762 = vpop.permute.xlu0 %761
  %s764 = scalar_lea.vmem %s4, 12
  %765 = vst.msk [vmem:[%s764] sm:$0x3] %vm134, %v762
  %s766 = scalar_lea.vmem %s0, 14
  %v767 = vld [vmem:[%s766] sm:$0x3]
  %v768 = vsel %vm27, %v762, 0
  %770 = vmatprep.subr.mxu0 0.0
  %771 = vmatpush1.msra.mxu0 %v20
  %772 = vmatprep.subr.mxu0 0.0
  %773 = vmatpush1.msra.mxu0 %v21
  %774 = vmatprep.subr.mxu0 0.0
  %775 = vmatpush1.msra.mxu0 %v22
  %776 = vmatprep.subr.mxu0 0.0
  %777 = vmatpush1.msra.mxu0 %v23
  %778 = vmatprep.subr.mxu0 0.0
  %779 = vmatpush1.msra.mxu0 0.0
  %780 = vmatprep.subr.mxu0 0.0
  %781 = vmatpush1.msra.mxu0 0.0
  %782 = vmatprep.subr.mxu0 0.0
  %783 = vmatpush1.msra.mxu0 0.0
  %784 = vmatprep.subr.mxu0 0.0
  %785 = vmatpush1.msra.mxu0 0.0
  %786 = vmatprep.subr.mxu0 0.0
  %787 = vmatpush1.msra.mxu0 0.0
  %788 = vmatprep.subr.mxu0 0.0
  %789 = vmatpush1.msra.mxu0 0.0
  %790 = vmatprep.subr.mxu0 0.0
  %791 = vmatpush1.msra.mxu0 0.0
  %792 = vmatprep.subr.mxu0 0.0
  %793 = vmatpush1.msra.mxu0 0.0
  %794 = vmatprep.subr.mxu0 0.0
  %795 = vmatpush1.msra.mxu0 0.0
  %796 = vmatprep.subr.mxu0 0.0
  %797 = vmatpush1.msra.mxu0 0.0
  %798 = vmatprep.subr.mxu0 0.0
  %799 = vmatpush1.msra.mxu0 0.0
  %800 = vmatprep.subr.mxu0 0.0
  %801 = vmatpush1.msra.mxu0 0.0
  %802 = vmatprep.subr.mxu0 0.0
  %803 = vmatpush1.msra.mxu0 0.0
  %804 = vmatprep.subr.mxu0 0.0
  %805 = vmatpush1.msra.mxu0 0.0
  %806 = vmatprep.subr.mxu0 0.0
  %807 = vmatpush1.msra.mxu0 0.0
  %808 = vmatprep.subr.mxu0 0.0
  %809 = vmatpush1.msra.mxu0 0.0
  %810 = vmatprep.subr.mxu0 0.0
  %811 = vmatpush1.msra.mxu0 0.0
  %812 = vmatprep.subr.mxu0 0.0
  %813 = vmatpush1.msra.mxu0 0.0
  %814 = vmatprep.subr.mxu0 0.0
  %815 = vmatpush1.msra.mxu0 0.0
  %816 = vmatprep.subr.mxu0 0.0
  %817 = vmatpush1.msra.mxu0 0.0
  %818 = vmatprep.subr.mxu0 0.0
  %819 = vmatpush1.msra.mxu0 0.0
  %820 = vmatprep.subr.mxu0 0.0
  %821 = vmatpush1.msra.mxu0 0.0
  %822 = vmatprep.subr.mxu0 0.0
  %823 = vmatpush1.msra.mxu0 0.0
  %824 = vmatprep.subr.mxu0 0.0
  %825 = vmatpush1.msra.mxu0 0.0
  %826 = vmatprep.subr.mxu0 0.0
  %827 = vmatpush1.msra.mxu0 0.0
  %828 = vmatprep.subr.mxu0 0.0
  %829 = vmatpush1.msra.mxu0 0.0
  %830 = vmatprep.subr.mxu0 0.0
  %831 = vmatpush1.msra.mxu0 0.0
  %832 = vmatprep.subr.mxu0 0.0
  %833 = vmatpush1.msra.mxu0 0.0
  %834 = vmatprep.mubr.f32.mxu0 0.0
  %835 = vmatmul.mubr.f32.gmra.mrb[0].mxu0 %v768
  %v836 = vpop.f32.mrb[0].mxu0
  %v837 = vadd.f32 0.0, %v836
  %v838 = vpop.f32.mrb[0].mxu0
  %839 = vdwg.mxu0
  %v840 = vadd.f32 %v767, %v837
  %v841 = vxor.u32 %v840, 2147483648
  %v842 = vmul.f32 %v841, 1.442695
  %v843 = vpow.pop %v842
  %v844 = vadd.f32 %v843, 1.0
  %v845 = vrcp.pop %v844
  %v846 = vmul.f32 1.0, %v845
  %v847 = vtanh.pop %v840
  %v848 = vmul.f32 %v846, %v753
  %850 = vrot.lane.b32.xlu0 %v847, 64
  %v851 = vpop.permute.xlu0 %850
  %v853 = vmul.f32 %v846, %v851
  %855 = vrot.lane.b32.xlu0 %v853, 32
  %v856 = vpop.permute.xlu0 %855
  %v858 = vadd.f32 %v848, %v856
  %v859 = vtanh.pop %v858
  %861 = vrot.lane.b32.xlu0 %v859, 64
  %v862 = vpop.permute.xlu0 %861
  %v864 = vmul.f32 %v846, %v862
  %866 = vrot.lane.b32.xlu0 %v864, 32
  %v867 = vpop.permute.xlu0 %866
  %s869 = scalar_lea.vmem %s4, 14
  %870 = vst.msk [vmem:[%s869] sm:$0x3] %vm134, %v867
  %871 = vst.msk [vmem:[%s5] sm:$0x3] %vm134, %v867
  %873 = vrot.lane.b32.xlu0 %v858, 96
  %v874 = vpop.permute.xlu0 %873
  %876 = vst.msk [vmem:[%s6] sm:$0x3] %vm134, %v874
  // Predicated region
  $region18: #{decoder_forward.5} parent=0 // pred_check
    _
  $region19: #{decoder_forward.5} parent=0 // pred_check_branch
    %878 = sbr.rel (0) target = $region21
  $region20: #{decoder_forward.5} parent=0 // pred_region
    _
  $region21: #{decoder_forward.5} parent=0 // pred_fallthru
    _
  // Predicated region
  $region22: #{decoder_forward.5} parent=0 // pred_check
    _
  $region23: #{decoder_forward.5} parent=0 // pred_check_branch
    %880 = sbr.rel (0) target = $region25
  $region24: #{decoder_forward.5} parent=0 // pred_region
    _
  $region25: #{decoder_forward.5} parent=0 // pred_fallthru
    _
  // Predicated region
  $region26: #{decoder_forward.5} parent=0 // pred_check
    _
  $region27: #{decoder_forward.5} parent=0 // pred_check_branch
    %882 = sbr.rel (0) target = $region29
  $region28: #{decoder_forward.5} parent=0 // pred_region
    _
  $region29: #{decoder_forward.5} parent=0 // pred_fallthru
    _
  // Predicated region
  $region30: #{decoder_forward.5} parent=0 // pred_check
    _
  $region31: #{decoder_forward.5} parent=0 // pred_check_branch
    %884 = sbr.rel (0) target = $region33
  $region32: #{decoder_forward.5} parent=0 // pred_region
    _
  $region33: #{decoder_forward.5} parent=0 // pred_fallthru
    _
  // Predicated region
  $region34: #{decoder_forward.5} parent=0 // pred_check
    _
  $region35: #{decoder_forward.5} parent=0 // pred_check_branch
    %886 = sbr.rel (0) target = $region37
  $region36: #{decoder_forward.5} parent=0 // pred_region
    _
  $region37: #{decoder_forward.5} parent=0 // pred_fallthru
    _
  // Predicated region
  $region38: #{decoder_forward.5} parent=0 // pred_check
    _
  $region39: #{decoder_forward.5} parent=0 // pred_check_branch
    %888 = sbr.rel (0) target = $region41
  $region40: #{decoder_forward.5} parent=0 // pred_region
    _
  $region41: #{decoder_forward.5} parent=0 // pred_fallthru
    _

// kernel: decoder_forward.7
$region0: #{decoder_forward.7}
  #allocation0 [shape = 'u32[]', space=smem, size = 0x4, offset = 0x4, fixed_abs, tag = 'smem constant byte address 0x4 - core index']
  #allocation1 [shape = 'u32[144,128]{1,0:T(1,128)}', space=vmem, size = 0x12000, scoped, tag = 'internal scratch']
  %s0 = inlined_call_operand.vmem [shape: f32[8,2,128], index: 0, kind: input, shape index: {}]
  %s1 = inlined_call_operand.vmem [shape: f32[32,128], index: 1, kind: input, shape index: {}]
  %s2 = inlined_call_operand.vmem [shape: f32[2,32], index: 2, kind: input, shape index: {}]
  %s3 = inlined_call_operand.vmem [shape: f32[2,32], index: 3, kind: input, shape index: {}]
  %s4 = inlined_call_operand.vmem [shape: f32[32,4], index: 4, kind: input, shape index: {}]
  %s5 = inlined_call_operand.vmem [shape: f32[1,4], index: 5, kind: input, shape index: {}]
  %s6 = inlined_call_operand.vmem [shape: f32[8,2,4], index: 6, kind: output, shape index: {0}]
  %s7 = inlined_call_operand.vmem [shape: f32[2,32], index: 7, kind: output, shape index: {1}]
  %s8 = inlined_call_operand.vmem [shape: f32[2,32], index: 8, kind: output, shape index: {2}]
  %9 = xla_tuple %s6, %s7, %s8
  %s10 = sld [smem:[#allocation0]]
  $region50: #{decoder_forward.7} parent=0
    _
  %s12 = ssub.s32 1, %s10
  %s13 = scalar_select 0, %s12, %s10
  // Predicated region
  $region2: #{decoder_forward.7} parent=0 // pred_check
    _
  $region3: #{decoder_forward.7} parent=0 // pred_check_branch
    %15 = sbr.rel (0) target = $region5
  $region4: #{decoder_forward.7} parent=0 // pred_region
    _
  $region5: #{decoder_forward.7} parent=0 // pred_fallthru
    _
  // Predicated region
  $region6: #{decoder_forward.7} parent=0 // pred_check
    _
  $region7: #{decoder_forward.7} parent=0 // pred_check_branch
    %17 = sbr.rel (0) target = $region9
  $region8: #{decoder_forward.7} parent=0 // pred_region
    _
  $region9: #{decoder_forward.7} parent=0 // pred_fallthru
    _
  // Predicated region
  $region10: #{decoder_forward.7} parent=0 // pred_check
    _
  $region11: #{decoder_forward.7} parent=0 // pred_check_branch
    %19 = sbr.rel (0) target = $region13
  $region12: #{decoder_forward.7} parent=0 // pred_region
    _
  $region13: #{decoder_forward.7} parent=0 // pred_fallthru
    _
  // Predicated region
  $region14: #{decoder_forward.7} parent=0 // pred_check
    _
  $region15: #{decoder_forward.7} parent=0 // pred_check_branch
    %21 = sbr.rel (0) target = $region17
  $region16: #{decoder_forward.7} parent=0 // pred_region
    _
  $region17: #{decoder_forward.7} parent=0 // pred_fallthru
    _
  // Predicated region
  $region18: #{decoder_forward.7} parent=0 // pred_check
    _
  $region19: #{decoder_forward.7} parent=0 // pred_check_branch
    %23 = sbr.rel (0) target = $region21
  $region20: #{decoder_forward.7} parent=0 // pred_region
    _
  $region21: #{decoder_forward.7} parent=0 // pred_fallthru
    _
  // Predicated region
  $region22: #{decoder_forward.7} parent=0 // pred_check
    _
  $region23: #{decoder_forward.7} parent=0 // pred_check_branch
    %25 = sbr.rel (0) target = $region25
  $region24: #{decoder_forward.7} parent=0 // pred_region
    _
  $region25: #{decoder_forward.7} parent=0 // pred_fallthru
    _
  %v26 = vld [vmem:[%s1] sm:$0xff]
  %v27 = vld [vmem:[%s1 + $0x8] sm:$0xff]
  %v28 = vld [vmem:[%s1 + $0x10] sm:$0xff]
  %v29 = vld [vmem:[%s1 + $0x18] sm:$0xff]
  %v30 = vld [vmem:[%s4] sm:$0xff]
  %v31 = vld [vmem:[%s4 + $0x8] sm:$0xff]
  %v32 = vld [vmem:[%s4 + $0x10] sm:$0xff]
  %v33 = vld [vmem:[%s4 + $0x18] sm:$0xff]
  %v34 = vld [vmem:[%s5] sm:$0x1]
  %v35 = vld [vmem:[%s2] sm:$0x3]
  %v36 = vld [vmem:[%s3] sm:$0x3]
  %v37 = vld [vmem:[%s0] sm:$0x3]
  %vm38 = vcmask 261120
  %v40 = vsel %vm38, %v35, 0
  %42 = vmatprep.subr.mxu0 0.0
  %43 = vmatpush1.msra.mxu0 %v26
  %44 = vmatprep.subr.mxu0 0.0
  %45 = vmatpush1.msra.mxu0 %v27
  %46 = vmatprep.subr.mxu0 0.0
  %47 = vmatpush1.msra.mxu0 %v28
  %48 = vmatprep.subr.mxu0 0.0
  %49 = vmatpush1.msra.mxu0 %v29
  %50 = vmatprep.subr.mxu0 0.0
  %51 = vmatpush1.msra.mxu0 0.0
  %52 = vmatprep.subr.mxu0 0.0
  %53 = vmatpush1.msra.mxu0 0.0
  %54 = vmatprep.subr.mxu0 0.0
  %55 = vmatpush1.msra.mxu0 0.0
  %56 = vmatprep.subr.mxu0 0.0
  %57 = vmatpush1.msra.mxu0 0.0
  %58 = vmatprep.subr.mxu0 0.0
  %59 = vmatpush1.msra.mxu0 0.0
  %60 = vmatprep.subr.mxu0 0.0
  %61 = vmatpush1.msra.mxu0 0.0
  %62 = vmatprep.subr.mxu0 0.0
  %63 = vmatpush1.msra.mxu0 0.0
  %64 = vmatprep.subr.mxu0 0.0
  %65 = vmatpush1.msra.mxu0 0.0
  %66 = vmatprep.subr.mxu0 0.0
  %67 = vmatpush1.msra.mxu0 0.0
  %68 = vmatprep.subr.mxu0 0.0
  %69 = vmatpush1.msra.mxu0 0.0
  %70 = vmatprep.subr.mxu0 0.0
  %71 = vmatpush1.msra.mxu0 0.0
  %72 = vmatprep.subr.mxu0 0.0
  %73 = vmatpush1.msra.mxu0 0.0
  %74 = vmatprep.subr.mxu0 0.0
  %75 = vmatpush1.msra.mxu0 0.0
  %76 = vmatprep.subr.mxu0 0.0
  %77 = vmatpush1.msra.mxu0 0.0
  %78 = vmatprep.subr.mxu0 0.0
  %79 = vmatpush1.msra.mxu0 0.0
  %80 = vmatprep.subr.mxu0 0.0
  %81 = vmatpush1.msra.mxu0 0.0
  %82 = vmatprep.subr.mxu0 0.0
  %83 = vmatpush1.msra.mxu0 0.0
  %84 = vmatprep.subr.mxu0 0.0
  %85 = vmatpush1.msra.mxu0 0.0
  %86 = vmatprep.subr.mxu0 0.0
  %87 = vmatpush1.msra.mxu0 0.0
  %88 = vmatprep.subr.mxu0 0.0
  %89 = vmatpush1.msra.mxu0 0.0
  %90 = vmatprep.subr.mxu0 0.0
  %91 = vmatpush1.msra.mxu0 0.0
  %92 = vmatprep.subr.mxu0 0.0
  %93 = vmatpush1.msra.mxu0 0.0
  %94 = vmatprep.subr.mxu0 0.0
  %95 = vmatpush1.msra.mxu0 0.0
  %96 = vmatprep.subr.mxu0 0.0
  %97 = vmatpush1.msra.mxu0 0.0
  %98 = vmatprep.subr.mxu0 0.0
  %99 = vmatpush1.msra.mxu0 0.0
  %100 = vmatprep.subr.mxu0 0.0
  %101 = vmatpush1.msra.mxu0 0.0
  %102 = vmatprep.subr.mxu0 0.0
  %103 = vmatpush1.msra.mxu0 0.0
  %104 = vmatprep.subr.mxu0 0.0
  %105 = vmatpush1.msra.mxu0 0.0
  %106 = vmatprep.mubr.f32.mxu0 0.0
  %107 = vmatmul.mubr.f32.gmra.mrb[0].mxu0 %v40
  %v108 = vpop.f32.mrb[0].mxu0
  %v109 = vadd.f32 0.0, %v108
  %v110 = vpop.f32.mrb[0].mxu0
  %111 = vdwg.mxu0
  %v112 = vadd.f32 %v37, %v109
  %v113 = vxor.u32 %v112, 2147483648
  %v114 = vmul.f32 %v113, 1.442695
  %v115 = vpow.pop %v114
  %v116 = vadd.f32 %v115, 1.0
  %v117 = vrcp.pop %v116
  %v118 = vmul.f32 1.0, %v117
  %v119 = vtanh.pop %v112
  %121 = vrot.lane.b32.xlu0 %v36, 32
  %v122 = vpop.permute.xlu0 %121
  %v124 = vmul.f32 %v118, %v122
  %126 = vrot.lane.b32.xlu0 %v119, 64
  %v127 = vpop.permute.xlu0 %126
  %v129 = vmul.f32 %v118, %v127
  %131 = vrot.lane.b32.xlu0 %v129, 32
  %v132 = vpop.permute.xlu0 %131
  %v134 = vadd.f32 %v124, %v132
  %v135 = vtanh.pop %v134
  %137 = vrot.lane.b32.xlu0 %v135, 64
  %v138 = vpop.permute.xlu0 %137
  %v140 = vmul.f32 %v118, %v138
  %v142 = vlaneseq
  %v143 = vshrl.u32 %v142, 7
  %v144 = vsub.s32 0, %v143
  %v145 = vrot.slane %v34, %v144
  %148 = vrot.lane.b32.xlu0 %v140, 32
  %v149 = vpop.permute.xlu0 %148
  %v150 = vsel %vm38, %v149, 0
  %152 = vmatprep.subr.mxu0 0.0
  %153 = vmatpush1.msra.mxu0 %v30
  %154 = vmatprep.subr.mxu0 0.0
  %155 = vmatpush1.msra.mxu0 %v31
  %156 = vmatprep.subr.mxu0 0.0
  %157 = vmatpush1.msra.mxu0 %v32
  %158 = vmatprep.subr.mxu0 0.0
  %159 = vmatpush1.msra.mxu0 %v33
  %160 = vmatprep.subr.mxu0 0.0
  %161 = vmatpush1.msra.mxu0 0.0
  %162 = vmatprep.subr.mxu0 0.0
  %163 = vmatpush1.msra.mxu0 0.0
  %164 = vmatprep.subr.mxu0 0.0
  %165 = vmatpush1.msra.mxu0 0.0
  %166 = vmatprep.subr.mxu0 0.0
  %167 = vmatpush1.msra.mxu0 0.0
  %168 = vmatprep.subr.mxu0 0.0
  %169 = vmatpush1.msra.mxu0 0.0
  %170 = vmatprep.subr.mxu0 0.0
  %171 = vmatpush1.msra.mxu0 0.0
  %172 = vmatprep.subr.mxu0 0.0
  %173 = vmatpush1.msra.mxu0 0.0
  %174 = vmatprep.subr.mxu0 0.0
  %175 = vmatpush1.msra.mxu0 0.0
  %176 = vmatprep.subr.mxu0 0.0
  %177 = vmatpush1.msra.mxu0 0.0
  %178 = vmatprep.subr.mxu0 0.0
  %179 = vmatpush1.msra.mxu0 0.0
  %180 = vmatprep.subr.mxu0 0.0
  %181 = vmatpush1.msra.mxu0 0.0
  %182 = vmatprep.subr.mxu0 0.0
  %183 = vmatpush1.msra.mxu0 0.0
  %184 = vmatprep.subr.mxu0 0.0
  %185 = vmatpush1.msra.mxu0 0.0
  %186 = vmatprep.subr.mxu0 0.0
  %187 = vmatpush1.msra.mxu0 0.0
  %188 = vmatprep.subr.mxu0 0.0
  %189 = vmatpush1.msra.mxu0 0.0
  %190 = vmatprep.subr.mxu0 0.0
  %191 = vmatpush1.msra.mxu0 0.0
  %192 = vmatprep.subr.mxu0 0.0
  %193 = vmatpush1.msra.mxu0 0.0
  %194 = vmatprep.subr.mxu0 0.0
  %195 = vmatpush1.msra.mxu0 0.0
  %196 = vmatprep.subr.mxu0 0.0
  %197 = vmatpush1.msra.mxu0 0.0
  %198 = vmatprep.subr.mxu0 0.0
  %199 = vmatpush1.msra.mxu0 0.0
  %200 = vmatprep.subr.mxu0 0.0
  %201 = vmatpush1.msra.mxu0 0.0
  %202 = vmatprep.subr.mxu0 0.0
  %203 = vmatpush1.msra.mxu0 0.0
  %204 = vmatprep.subr.mxu0 0.0
  %205 = vmatpush1.msra.mxu0 0.0
  %206 = vmatprep.subr.mxu0 0.0
  %207 = vmatpush1.msra.mxu0 0.0
  %208 = vmatprep.subr.mxu0 0.0
  %209 = vmatpush1.msra.mxu0 0.0
  %210 = vmatprep.subr.mxu0 0.0
  %211 = vmatpush1.msra.mxu0 0.0
  %212 = vmatprep.subr.mxu0 0.0
  %213 = vmatpush1.msra.mxu0 0.0
  %214 = vmatprep.subr.mxu0 0.0
  %215 = vmatpush1.msra.mxu0 0.0
  %216 = vmatprep.mubr.f32.mxu0 0.0
  %217 = vmatmul.mubr.f32.gmra.mrb[0].mxu0 %v150
  %v218 = vpop.f32.mrb[0].mxu0
  %v219 = vadd.f32 %v145, %v218
  %v220 = vpop.f32.mrb[0].mxu0
  %221 = vdwg.mxu0
  %vm222 = vcmask 25600
  %223 = vst.msk [vmem:[%s6] sm:$0x3] %vm222, %v219
  %s224 = scalar_lea.vmem %s0, 2
  %v225 = vld [vmem:[%s224] sm:$0x3]
  %226 = vmatprep.subr.mxu0 0.0
  %227 = vmatpush1.msra.mxu0 %v26
  %228 = vmatprep.subr.mxu0 0.0
  %229 = vmatpush1.msra.mxu0 %v27
  %230 = vmatprep.subr.mxu0 0.0
  %231 = vmatpush1.msra.mxu0 %v28
  %232 = vmatprep.subr.mxu0 0.0
  %233 = vmatpush1.msra.mxu0 %v29
  %234 = vmatprep.subr.mxu0 0.0
  %235 = vmatpush1.msra.mxu0 0.0
  %236 = vmatprep.subr.mxu0 0.0
  %237 = vmatpush1.msra.mxu0 0.0
  %238 = vmatprep.subr.mxu0 0.0
  %239 = vmatpush1.msra.mxu0 0.0
  %240 = vmatprep.subr.mxu0 0.0
  %241 = vmatpush1.msra.mxu0 0.0
  %242 = vmatprep.subr.mxu0 0.0
  %243 = vmatpush1.msra.mxu0 0.0
  %244 = vmatprep.subr.mxu0 0.0
  %245 = vmatpush1.msra.mxu0 0.0
  %246 = vmatprep.subr.mxu0 0.0
  %247 = vmatpush1.msra.mxu0 0.0
  %248 = vmatprep.subr.mxu0 0.0
  %249 = vmatpush1.msra.mxu0 0.0
  %250 = vmatprep.subr.mxu0 0.0
  %251 = vmatpush1.msra.mxu0 0.0
  %252 = vmatprep.subr.mxu0 0.0
  %253 = vmatpush1.msra.mxu0 0.0
  %254 = vmatprep.subr.mxu0 0.0
  %255 = vmatpush1.msra.mxu0 0.0
  %256 = vmatprep.subr.mxu0 0.0
  %257 = vmatpush1.msra.mxu0 0.0
  %258 = vmatprep.subr.mxu0 0.0
  %259 = vmatpush1.msra.mxu0 0.0
  %260 = vmatprep.subr.mxu0 0.0
  %261 = vmatpush1.msra.mxu0 0.0
  %262 = vmatprep.subr.mxu0 0.0
  %263 = vmatpush1.msra.mxu0 0.0
  %264 = vmatprep.subr.mxu0 0.0
  %265 = vmatpush1.msra.mxu0 0.0
  %266 = vmatprep.subr.mxu0 0.0
  %267 = vmatpush1.msra.mxu0 0.0
  %268 = vmatprep.subr.mxu0 0.0
  %269 = vmatpush1.msra.mxu0 0.0
  %270 = vmatprep.subr.mxu0 0.0
  %271 = vmatpush1.msra.mxu0 0.0
  %272 = vmatprep.subr.mxu0 0.0
  %273 = vmatpush1.msra.mxu0 0.0
  %274 = vmatprep.subr.mxu0 0.0
  %275 = vmatpush1.msra.mxu0 0.0
  %276 = vmatprep.subr.mxu0 0.0
  %277 = vmatpush1.msra.mxu0 0.0
  %278 = vmatprep.subr.mxu0 0.0
  %279 = vmatpush1.msra.mxu0 0.0
  %280 = vmatprep.subr.mxu0 0.0
  %281 = vmatpush1.msra.mxu0 0.0
  %282 = vmatprep.subr.mxu0 0.0
  %283 = vmatpush1.msra.mxu0 0.0
  %284 = vmatprep.subr.mxu0 0.0
  %285 = vmatpush1.msra.mxu0 0.0
  %286 = vmatprep.subr.mxu0 0.0
  %287 = vmatpush1.msra.mxu0 0.0
  %288 = vmatprep.subr.mxu0 0.0
  %289 = vmatpush1.msra.mxu0 0.0
  %290 = vmatprep.mubr.f32.mxu0 0.0
  %291 = vmatmul.mubr.f32.gmra.mrb[0].mxu0 %v150
  %v292 = vpop.f32.mrb[0].mxu0
  %v293 = vadd.f32 0.0, %v292
  %v294 = vpop.f32.mrb[0].mxu0
  %295 = vdwg.mxu0
  %v296 = vadd.f32 %v225, %v293
  %v297 = vxor.u32 %v296, 2147483648
  %v298 = vmul.f32 %v297, 1.442695
  %v299 = vpow.pop %v298
  %v300 = vadd.f32 %v299, 1.0
  %v301 = vrcp.pop %v300
  %v302 = vmul.f32 1.0, %v301
  %v303 = vtanh.pop %v296
  %v304 = vmul.f32 %v302, %v134
  %306 = vrot.lane.b32.xlu0 %v303, 64
  %v307 = vpop.permute.xlu0 %306
  %v309 = vmul.f32 %v302, %v307
  %311 = vrot.lane.b32.xlu0 %v309, 32
  %v312 = vpop.permute.xlu0 %311
  %v314 = vadd.f32 %v304, %v312
  %v315 = vtanh.pop %v314
  %317 = vrot.lane.b32.xlu0 %v315, 64
  %v318 = vpop.permute.xlu0 %317
  %v320 = vmul.f32 %v302, %v318
  %322 = vrot.lane.b32.xlu0 %v320, 32
  %v323 = vpop.permute.xlu0 %322
  %v324 = vsel %vm38, %v323, 0
  %326 = vmatprep.subr.mxu0 0.0
  %327 = vmatpush1.msra.mxu0 %v30
  %328 = vmatprep.subr.mxu0 0.0
  %329 = vmatpush1.msra.mxu0 %v31
  %330 = vmatprep.subr.mxu0 0.0
  %331 = vmatpush1.msra.mxu0 %v32
  %332 = vmatprep.subr.mxu0 0.0
  %333 = vmatpush1.msra.mxu0 %v33
  %334 = vmatprep.subr.mxu0 0.0
  %335 = vmatpush1.msra.mxu0 0.0
  %336 = vmatprep.subr.mxu0 0.0
  %337 = vmatpush1.msra.mxu0 0.0
  %338 = vmatprep.subr.mxu0 0.0
  %339 = vmatpush1.msra.mxu0 0.0
  %340 = vmatprep.subr.mxu0 0.0
  %341 = vmatpush1.msra.mxu0 0.0
  %342 = vmatprep.subr.mxu0 0.0
  %343 = vmatpush1.msra.mxu0 0.0
  %344 = vmatprep.subr.mxu0 0.0
  %345 = vmatpush1.msra.mxu0 0.0
  %346 = vmatprep.subr.mxu0 0.0
  %347 = vmatpush1.msra.mxu0 0.0
  %348 = vmatprep.subr.mxu0 0.0
  %349 = vmatpush1.msra.mxu0 0.0
  %350 = vmatprep.subr.mxu0 0.0
  %351 = vmatpush1.msra.mxu0 0.0
  %352 = vmatprep.subr.mxu0 0.0
  %353 = vmatpush1.msra.mxu0 0.0
  %354 = vmatprep.subr.mxu0 0.0
  %355 = vmatpush1.msra.mxu0 0.0
  %356 = vmatprep.subr.mxu0 0.0
  %357 = vmatpush1.msra.mxu0 0.0
  %358 = vmatprep.subr.mxu0 0.0
  %359 = vmatpush1.msra.mxu0 0.0
  %360 = vmatprep.subr.mxu0 0.0
  %361 = vmatpush1.msra.mxu0 0.0
  %362 = vmatprep.subr.mxu0 0.0
  %363 = vmatpush1.msra.mxu0 0.0
  %364 = vmatprep.subr.mxu0 0.0
  %365 = vmatpush1.msra.mxu0 0.0
  %366 = vmatprep.subr.mxu0 0.0
  %367 = vmatpush1.msra.mxu0 0.0
  %368 = vmatprep.subr.mxu0 0.0
  %369 = vmatpush1.msra.mxu0 0.0
  %370 = vmatprep.subr.mxu0 0.0
  %371 = vmatpush1.msra.mxu0 0.0
  %372 = vmatprep.subr.mxu0 0.0
  %373 = vmatpush1.msra.mxu0 0.0
  %374 = vmatprep.subr.mxu0 0.0
  %375 = vmatpush1.msra.mxu0 0.0
  %376 = vmatprep.subr.mxu0 0.0
  %377 = vmatpush1.msra.mxu0 0.0
  %378 = vmatprep.subr.mxu0 0.0
  %379 = vmatpush1.msra.mxu0 0.0
  %380 = vmatprep.subr.mxu0 0.0
  %381 = vmatpush1.msra.mxu0 0.0
  %382 = vmatprep.subr.mxu0 0.0
  %383 = vmatpush1.msra.mxu0 0.0
  %384 = vmatprep.subr.mxu0 0.0
  %385 = vmatpush1.msra.mxu0 0.0
  %386 = vmatprep.subr.mxu0 0.0
  %387 = vmatpush1.msra.mxu0 0.0
  %388 = vmatprep.subr.mxu0 0.0
  %389 = vmatpush1.msra.mxu0 0.0
  %390 = vmatprep.mubr.f32.mxu0 0.0
  %391 = vmatmul.mubr.f32.gmra.mrb[0].mxu0 %v324
  %v392 = vpop.f32.mrb[0].mxu0
  %v393 = vadd.f32 %v145, %v392
  %v394 = vpop.f32.mrb[0].mxu0
  %395 = vdwg.mxu0
  %s396 = scalar_lea.vmem %s6, 2
  %397 = vst.msk [vmem:[%s396] sm:$0x3] %vm222, %v393
  %s398 = scalar_lea.vmem %s0, 4
  %v399 = vld [vmem:[%s398] sm:$0x3]
  %400 = vmatprep.subr.mxu0 0.0
  %401 = vmatpush1.msra.mxu0 %v26
  %402 = vmatprep.subr.mxu0 0.0
  %403 = vmatpush1.msra.mxu0 %v27
  %404 = vmatprep.subr.mxu0 0.0
  %405 = vmatpush1.msra.mxu0 %v28
  %406 = vmatprep.subr.mxu0 0.0
  %407 = vmatpush1.msra.mxu0 %v29
  %408 = vmatprep.subr.mxu0 0.0
  %409 = vmatpush1.msra.mxu0 0.0
  %410 = vmatprep.subr.mxu0 0.0
  %411 = vmatpush1.msra.mxu0 0.0
  %412 = vmatprep.subr.mxu0 0.0
  %413 = vmatpush1.msra.mxu0 0.0
  %414 = vmatprep.subr.mxu0 0.0
  %415 = vmatpush1.msra.mxu0 0.0
  %416 = vmatprep.subr.mxu0 0.0
  %417 = vmatpush1.msra.mxu0 0.0
  %418 = vmatprep.subr.mxu0 0.0
  %419 = vmatpush1.msra.mxu0 0.0
  %420 = vmatprep.subr.mxu0 0.0
  %421 = vmatpush1.msra.mxu0 0.0
  %422 = vmatprep.subr.mxu0 0.0
  %423 = vmatpush1.msra.mxu0 0.0
  %424 = vmatprep.subr.mxu0 0.0
  %425 = vmatpush1.msra.mxu0 0.0
  %426 = vmatprep.subr.mxu0 0.0
  %427 = vmatpush1.msra.mxu0 0.0
  %428 = vmatprep.subr.mxu0 0.0
  %429 = vmatpush1.msra.mxu0 0.0
  %430 = vmatprep.subr.mxu0 0.0
  %431 = vmatpush1.msra.mxu0 0.0
  %432 = vmatprep.subr.mxu0 0.0
  %433 = vmatpush1.msra.mxu0 0.0
  %434 = vmatprep.subr.mxu0 0.0
  %435 = vmatpush1.msra.mxu0 0.0
  %436 = vmatprep.subr.mxu0 0.0
  %437 = vmatpush1.msra.mxu0 0.0
  %438 = vmatprep.subr.mxu0 0.0
  %439 = vmatpush1.msra.mxu0 0.0
  %440 = vmatprep.subr.mxu0 0.0
  %441 = vmatpush1.msra.mxu0 0.0
  %442 = vmatprep.subr.mxu0 0.0
  %443 = vmatpush1.msra.mxu0 0.0
  %444 = vmatprep.subr.mxu0 0.0
  %445 = vmatpush1.msra.mxu0 0.0
  %446 = vmatprep.subr.mxu0 0.0
  %447 = vmatpush1.msra.mxu0 0.0
  %448 = vmatprep.subr.mxu0 0.0
  %449 = vmatpush1.msra.mxu0 0.0
  %450 = vmatprep.subr.mxu0 0.0
  %451 = vmatpush1.msra.mxu0 0.0
  %452 = vmatprep.subr.mxu0 0.0
  %453 = vmatpush1.msra.mxu0 0.0
  %454 = vmatprep.subr.mxu0 0.0
  %455 = vmatpush1.msra.mxu0 0.0
  %456 = vmatprep.subr.mxu0 0.0
  %457 = vmatpush1.msra.mxu0 0.0
  %458 = vmatprep.subr.mxu0 0.0
  %459 = vmatpush1.msra.mxu0 0.0
  %460 = vmatprep.subr.mxu0 0.0
  %461 = vmatpush1.msra.mxu0 0.0
  %462 = vmatprep.subr.mxu0 0.0
  %463 = vmatpush1.msra.mxu0 0.0
  %464 = vmatprep.mubr.f32.mxu0 0.0
  %465 = vmatmul.mubr.f32.gmra.mrb[0].mxu0 %v324
  %v466 = vpop.f32.mrb[0].mxu0
  %v467 = vadd.f32 0.0, %v466
  %v468 = vpop.f32.mrb[0].mxu0
  %469 = vdwg.mxu0
  %v470 = vadd.f32 %v399, %v467
  %v471 = vxor.u32 %v470, 2147483648
  %v472 = vmul.f32 %v471, 1.442695
  %v473 = vpow.pop %v472
  %v474 = vadd.f32 %v473, 1.0
  %v475 = vrcp.pop %v474
  %v476 = vmul.f32 1.0, %v475
  %v477 = vtanh.pop %v470
  %v478 = vmul.f32 %v476, %v314
  %480 = vrot.lane.b32.xlu0 %v477, 64
  %v481 = vpop.permute.xlu0 %480
  %v483 = vmul.f32 %v476, %v481
  %485 = vrot.lane.b32.xlu0 %v483, 32
  %v486 = vpop.permute.xlu0 %485
  %v488 = vadd.f32 %v478, %v486
  %v489 = vtanh.pop %v488
  %491 = vrot.lane.b32.xlu0 %v489, 64
  %v492 = vpop.permute.xlu0 %491
  %v494 = vmul.f32 %v476, %v492
  %496 = vrot.lane.b32.xlu0 %v494, 32
  %v497 = vpop.permute.xlu0 %496
  %v498 = vsel %vm38, %v497, 0
  %500 = vmatprep.subr.mxu0 0.0
  %501 = vmatpush1.msra.mxu0 %v30
  %502 = vmatprep.subr.mxu0 0.0
  %503 = vmatpush1.msra.mxu0 %v31
  %504 = vmatprep.subr.mxu0 0.0
  %505 = vmatpush1.msra.mxu0 %v32
  %506 = vmatprep.subr.mxu0 0.0
  %507 = vmatpush1.msra.mxu0 %v33
  %508 = vmatprep.subr.mxu0 0.0
  %509 = vmatpush1.msra.mxu0 0.0
  %510 = vmatprep.subr.mxu0 0.0
  %511 = vmatpush1.msra.mxu0 0.0
  %512 = vmatprep.subr.mxu0 0.0
  %513 = vmatpush1.msra.mxu0 0.0
  %514 = vmatprep.subr.mxu0 0.0
  %515 = vmatpush1.msra.mxu0 0.0
  %516 = vmatprep.subr.mxu0 0.0
  %517 = vmatpush1.msra.mxu0 0.0
  %518 = vmatprep.subr.mxu0 0.0
  %519 = vmatpush1.msra.mxu0 0.0
  %520 = vmatprep.subr.mxu0 0.0
  %521 = vmatpush1.msra.mxu0 0.0
  %522 = vmatprep.subr.mxu0 0.0
  %523 = vmatpush1.msra.mxu0 0.0
  %524 = vmatprep.subr.mxu0 0.0
  %525 = vmatpush1.msra.mxu0 0.0
  %526 = vmatprep.subr.mxu0 0.0
  %527 = vmatpush1.msra.mxu0 0.0
  %528 = vmatprep.subr.mxu0 0.0
  %529 = vmatpush1.msra.mxu0 0.0
  %530 = vmatprep.subr.mxu0 0.0
  %531 = vmatpush1.msra.mxu0 0.0
  %532 = vmatprep.subr.mxu0 0.0
  %533 = vmatpush1.msra.mxu0 0.0
  %534 = vmatprep.subr.mxu0 0.0
  %535 = vmatpush1.msra.mxu0 0.0
  %536 = vmatprep.subr.mxu0 0.0
  %537 = vmatpush1.msra.mxu0 0.0
  %538 = vmatprep.subr.mxu0 0.0
  %539 = vmatpush1.msra.mxu0 0.0
  %540 = vmatprep.subr.mxu0 0.0
  %541 = vmatpush1.msra.mxu0 0.0
  %542 = vmatprep.subr.mxu0 0.0
  %543 = vmatpush1.msra.mxu0 0.0
  %544 = vmatprep.subr.mxu0 0.0
  %545 = vmatpush1.msra.mxu0 0.0
  %546 = vmatprep.subr.mxu0 0.0
  %547 = vmatpush1.msra.mxu0 0.0
  %548 = vmatprep.subr.mxu0 0.0
  %549 = vmatpush1.msra.mxu0 0.0
  %550 = vmatprep.subr.mxu0 0.0
  %551 = vmatpush1.msra.mxu0 0.0
  %552 = vmatprep.subr.mxu0 0.0
  %553 = vmatpush1.msra.mxu0 0.0
  %554 = vmatprep.subr.mxu0 0.0
  %555 = vmatpush1.msra.mxu0 0.0
  %556 = vmatprep.subr.mxu0 0.0
  %557 = vmatpush1.msra.mxu0 0.0
  %558 = vmatprep.subr.mxu0 0.0
  %559 = vmatpush1.msra.mxu0 0.0
  %560 = vmatprep.subr.mxu0 0.0
  %561 = vmatpush1.msra.mxu0 0.0
  %562 = vmatprep.subr.mxu0 0.0
  %563 = vmatpush1.msra.mxu0 0.0
  %564 = vmatprep.mubr.f32.mxu0 0.0
  %565 = vmatmul.mubr.f32.gmra.mrb[0].mxu0 %v498
  %v566 = vpop.f32.mrb[0].mxu0
  %v567 = vadd.f32 %v145, %v566
  %v568 = vpop.f32.mrb[0].mxu0
  %569 = vdwg.mxu0
  %s570 = scalar_lea.vmem %s6, 4
  %571 = vst.msk [vmem:[%s570] sm:$0x3] %vm222, %v567
  %s572 = scalar_lea.vmem %s0, 6
  %v573 = vld [vmem:[%s572] sm:$0x3]
  %574 = vmatprep.subr.mxu0 0.0
  %575 = vmatpush1.msra.mxu0 %v26
  %576 = vmatprep.subr.mxu0 0.0
  %577 = vmatpush1.msra.mxu0 %v27
  %578 = vmatprep.subr.mxu0 0.0
  %579 = vmatpush1.msra.mxu0 %v28
  %580 = vmatprep.subr.mxu0 0.0
  %581 = vmatpush1.msra.mxu0 %v29
  %582 = vmatprep.subr.mxu0 0.0
  %583 = vmatpush1.msra.mxu0 0.0
  %584 = vmatprep.subr.mxu0 0.0
  %585 = vmatpush1.msra.mxu0 0.0
  %586 = vmatprep.subr.mxu0 0.0
  %587 = vmatpush1.msra.mxu0 0.0
  %588 = vmatprep.subr.mxu0 0.0
  %589 = vmatpush1.msra.mxu0 0.0
  %590 = vmatprep.subr.mxu0 0.0
  %591 = vmatpush1.msra.mxu0 0.0
  %592 = vmatprep.subr.mxu0 0.0
  %593 = vmatpush1.msra.mxu0 0.0
  %594 = vmatprep.subr.mxu0 0.0
  %595 = vmatpush1.msra.mxu0 0.0
  %596 = vmatprep.subr.mxu0 0.0
  %597 = vmatpush1.msra.mxu0 0.0
  %598 = vmatprep.subr.mxu0 0.0
  %599 = vmatpush1.msra.mxu0 0.0
  %600 = vmatprep.subr.mxu0 0.0
  %601 = vmatpush1.msra.mxu0 0.0
  %602 = vmatprep.subr.mxu0 0.0
  %603 = vmatpush1.msra.mxu0 0.0
  %604 = vmatprep.subr.mxu0 0.0
  %605 = vmatpush1.msra.mxu0 0.0
  %606 = vmatprep.subr.mxu0 0.0
  %607 = vmatpush1.msra.mxu0 0.0
  %608 = vmatprep.subr.mxu0 0.0
  %609 = vmatpush1.msra.mxu0 0.0
  %610 = vmatprep.subr.mxu0 0.0
  %611 = vmatpush1.msra.mxu0 0.0
  %612 = vmatprep.subr.mxu0 0.0
  %613 = vmatpush1.msra.mxu0 0.0
  %614 = vmatprep.subr.mxu0 0.0
  %615 = vmatpush1.msra.mxu0 0.0
  %616 = vmatprep.subr.mxu0 0.0
  %617 = vmatpush1.msra.mxu0 0.0
  %618 = vmatprep.subr.mxu0 0.0
  %619 = vmatpush1.msra.mxu0 0.0
  %620 = vmatprep.subr.mxu0 0.0
  %621 = vmatpush1.msra.mxu0 0.0
  %622 = vmatprep.subr.mxu0 0.0
  %623 = vmatpush1.msra.mxu0 0.0
  %624 = vmatprep.subr.mxu0 0.0
  %625 = vmatpush1.msra.mxu0 0.0
  %626 = vmatprep.subr.mxu0 0.0
  %627 = vmatpush1.msra.mxu0 0.0
  %628 = vmatprep.subr.mxu0 0.0
  %629 = vmatpush1.msra.mxu0 0.0
  %630 = vmatprep.subr.mxu0 0.0
  %631 = vmatpush1.msra.mxu0 0.0
  %632 = vmatprep.subr.mxu0 0.0
  %633 = vmatpush1.msra.mxu0 0.0
  %634 = vmatprep.subr.mxu0 0.0
  %635 = vmatpush1.msra.mxu0 0.0
  %636 = vmatprep.subr.mxu0 0.0
  %637 = vmatpush1.msra.mxu0 0.0
  %638 = vmatprep.mubr.f32.mxu0 0.0
  %639 = vmatmul.mubr.f32.gmra.mrb[0].mxu0 %v498
  %v640 = vpop.f32.mrb[0].mxu0
  %v641 = vadd.f32 0.0, %v640
  %v642 = vpop.f32.mrb[0].mxu0
  %643 = vdwg.mxu0
  %v644 = vadd.f32 %v573, %v641
  %v645 = vxor.u32 %v644, 2147483648
  %v646 = vmul.f32 %v645, 1.442695
  %v647 = vpow.pop %v646
  %v648 = vadd.f32 %v647, 1.0
  %v649 = vrcp.pop %v648
  %v650 = vmul.f32 1.0, %v649
  %v651 = vtanh.pop %v644
  %v652 = vmul.f32 %v650, %v488
  %654 = vrot.lane.b32.xlu0 %v651, 64
  %v655 = vpop.permute.xlu0 %654
  %v657 = vmul.f32 %v650, %v655
  %659 = vrot.lane.b32.xlu0 %v657, 32
  %v660 = vpop.permute.xlu0 %659
  %v662 = vadd.f32 %v652, %v660
  %v663 = vtanh.pop %v662
  %665 = vrot.lane.b32.xlu0 %v663, 64
  %v666 = vpop.permute.xlu0 %665
  %v668 = vmul.f32 %v650, %v666
  %670 = vrot.lane.b32.xlu0 %v668, 32
  %v671 = vpop.permute.xlu0 %670
  %v672 = vsel %vm38, %v671, 0
  %674 = vmatprep.subr.mxu0 0.0
  %675 = vmatpush1.msra.mxu0 %v30
  %676 = vmatprep.subr.mxu0 0.0
  %677 = vmatpush1.msra.mxu0 %v31
  %678 = vmatprep.subr.mxu0 0.0
  %679 = vmatpush1.msra.mxu0 %v32
  %680 = vmatprep.subr.mxu0 0.0
  %681 = vmatpush1.msra.mxu0 %v33
  %682 = vmatprep.subr.mxu0 0.0
  %683 = vmatpush1.msra.mxu0 0.0
  %684 = vmatprep.subr.mxu0 0.0
  %685 = vmatpush1.msra.mxu0 0.0
  %686 = vmatprep.subr.mxu0 0.0
  %687 = vmatpush1.msra.mxu0 0.0
  %688 = vmatprep.subr.mxu0 0.0
  %689 = vmatpush1.msra.mxu0 0.0
  %690 = vmatprep.subr.mxu0 0.0
  %691 = vmatpush1.msra.mxu0 0.0
  %692 = vmatprep.subr.mxu0 0.0
  %693 = vmatpush1.msra.mxu0 0.0
  %694 = vmatprep.subr.mxu0 0.0
  %695 = vmatpush1.msra.mxu0 0.0
  %696 = vmatprep.subr.mxu0 0.0
  %697 = vmatpush1.msra.mxu0 0.0
  %698 = vmatprep.subr.mxu0 0.0
  %699 = vmatpush1.msra.mxu0 0.0
  %700 = vmatprep.subr.mxu0 0.0
  %701 = vmatpush1.msra.mxu0 0.0
  %702 = vmatprep.subr.mxu0 0.0
  %703 = vmatpush1.msra.mxu0 0.0
  %704 = vmatprep.subr.mxu0 0.0
  %705 = vmatpush1.msra.mxu0 0.0
  %706 = vmatprep.subr.mxu0 0.0
  %707 = vmatpush1.msra.mxu0 0.0
  %708 = vmatprep.subr.mxu0 0.0
  %709 = vmatpush1.msra.mxu0 0.0
  %710 = vmatprep.subr.mxu0 0.0
  %711 = vmatpush1.msra.mxu0 0.0
  %712 = vmatprep.subr.mxu0 0.0
  %713 = vmatpush1.msra.mxu0 0.0
  %714 = vmatprep.subr.mxu0 0.0
  %715 = vmatpush1.msra.mxu0 0.0
  %716 = vmatprep.subr.mxu0 0.0
  %717 = vmatpush1.msra.mxu0 0.0
  %718 = vmatprep.subr.mxu0 0.0
  %719 = vmatpush1.msra.mxu0 0.0
  %720 = vmatprep.subr.mxu0 0.0
  %721 = vmatpush1.msra.mxu0 0.0
  %722 = vmatprep.subr.mxu0 0.0
  %723 = vmatpush1.msra.mxu0 0.0
  %724 = vmatprep.subr.mxu0 0.0
  %725 = vmatpush1.msra.mxu0 0.0
  %726 = vmatprep.subr.mxu0 0.0
  %727 = vmatpush1.msra.mxu0 0.0
  %728 = vmatprep.subr.mxu0 0.0
  %729 = vmatpush1.msra.mxu0 0.0
  %730 = vmatprep.subr.mxu0 0.0
  %731 = vmatpush1.msra.mxu0 0.0
  %732 = vmatprep.subr.mxu0 0.0
  %733 = vmatpush1.msra.mxu0 0.0
  %734 = vmatprep.subr.mxu0 0.0
  %735 = vmatpush1.msra.mxu0 0.0
  %736 = vmatprep.subr.mxu0 0.0
  %737 = vmatpush1.msra.mxu0 0.0
  %738 = vmatprep.mubr.f32.mxu0 0.0
  %739 = vmatmul.mubr.f32.gmra.mrb[0].mxu0 %v672
  %v740 = vpop.f32.mrb[0].mxu0
  %v741 = vadd.f32 %v145, %v740
  %v742 = vpop.f32.mrb[0].mxu0
  %743 = vdwg.mxu0
  %s744 = scalar_lea.vmem %s6, 6
  %745 = vst.msk [vmem:[%s744] sm:$0x3] %vm222, %v741
  %s746 = scalar_lea.vmem %s0, 8
  %v747 = vld [vmem:[%s746] sm:$0x3]
  %748 = vmatprep.subr.mxu0 0.0
  %749 = vmatpush1.msra.mxu0 %v26
  %750 = vmatprep.subr.mxu0 0.0
  %751 = vmatpush1.msra.mxu0 %v27
  %752 = vmatprep.subr.mxu0 0.0
  %753 = vmatpush1.msra.mxu0 %v28
  %754 = vmatprep.subr.mxu0 0.0
  %755 = vmatpush1.msra.mxu0 %v29
  %756 = vmatprep.subr.mxu0 0.0
  %757 = vmatpush1.msra.mxu0 0.0
  %758 = vmatprep.subr.mxu0 0.0
  %759 = vmatpush1.msra.mxu0 0.0
  %760 = vmatprep.subr.mxu0 0.0
  %761 = vmatpush1.msra.mxu0 0.0
  %762 = vmatprep.subr.mxu0 0.0
  %763 = vmatpush1.msra.mxu0 0.0
  %764 = vmatprep.subr.mxu0 0.0
  %765 = vmatpush1.msra.mxu0 0.0
  %766 = vmatprep.subr.mxu0 0.0
  %767 = vmatpush1.msra.mxu0 0.0
  %768 = vmatprep.subr.mxu0 0.0
  %769 = vmatpush1.msra.mxu0 0.0
  %770 = vmatprep.subr.mxu0 0.0
  %771 = vmatpush1.msra.mxu0 0.0
  %772 = vmatprep.subr.mxu0 0.0
  %773 = vmatpush1.msra.mxu0 0.0
  %774 = vmatprep.subr.mxu0 0.0
  %775 = vmatpush1.msra.mxu0 0.0
  %776 = vmatprep.subr.mxu0 0.0
  %777 = vmatpush1.msra.mxu0 0.0
  %778 = vmatprep.subr.mxu0 0.0
  %779 = vmatpush1.msra.mxu0 0.0
  %780 = vmatprep.subr.mxu0 0.0
  %781 = vmatpush1.msra.mxu0 0.0
  %782 = vmatprep.subr.mxu0 0.0
  %783 = vmatpush1.msra.mxu0 0.0
  %784 = vmatprep.subr.mxu0 0.0
  %785 = vmatpush1.msra.mxu0 0.0
  %786 = vmatprep.subr.mxu0 0.0
  %787 = vmatpush1.msra.mxu0 0.0
  %788 = vmatprep.subr.mxu0 0.0
  %789 = vmatpush1.msra.mxu0 0.0
  %790 = vmatprep.subr.mxu0 0.0
  %791 = vmatpush1.msra.mxu0 0.0
  %792 = vmatprep.subr.mxu0 0.0
  %793 = vmatpush1.msra.mxu0 0.0
  %794 = vmatprep.subr.mxu0 0.0
  %795 = vmatpush1.msra.mxu0 0.0
  %796 = vmatprep.subr.mxu0 0.0
  %797 = vmatpush1.msra.mxu0 0.0
  %798 = vmatprep.subr.mxu0 0.0
  %799 = vmatpush1.msra.mxu0 0.0
  %800 = vmatprep.subr.mxu0 0.0
  %801 = vmatpush1.msra.mxu0 0.0
  %802 = vmatprep.subr.mxu0 0.0
  %803 = vmatpush1.msra.mxu0 0.0
  %804 = vmatprep.subr.mxu0 0.0
  %805 = vmatpush1.msra.mxu0 0.0
  %806 = vmatprep.subr.mxu0 0.0
  %807 = vmatpush1.msra.mxu0 0.0
  %808 = vmatprep.subr.mxu0 0.0
  %809 = vmatpush1.msra.mxu0 0.0
  %810 = vmatprep.subr.mxu0 0.0
  %811 = vmatpush1.msra.mxu0 0.0
  %812 = vmatprep.mubr.f32.mxu0 0.0
  %813 = vmatmul.mubr.f32.gmra.mrb[0].mxu0 %v672
  %v814 = vpop.f32.mrb[0].mxu0
  %v815 = vadd.f32 0.0, %v814
  %v816 = vpop.f32.mrb[0].mxu0
  %817 = vdwg.mxu0
  %v818 = vadd.f32 %v747, %v815
  %v819 = vxor.u32 %v818, 2147483648
  %v820 = vmul.f32 %v819, 1.442695
  %v821 = vpow.pop %v820
  %v822 = vadd.f32 %v821, 1.0
  %v823 = vrcp.pop %v822
  %v824 = vmul.f32 1.0, %v823
  %v825 = vtanh.pop %v818
  %v826 = vmul.f32 %v824, %v662
  %828 = vrot.lane.b32.xlu0 %v825, 64
  %v829 = vpop.permute.xlu0 %828
  %v831 = vmul.f32 %v824, %v829
  %833 = vrot.lane.b32.xlu0 %v831, 32
  %v834 = vpop.permute.xlu0 %833
  %v836 = vadd.f32 %v826, %v834
  %v837 = vtanh.pop %v836
  %839 = vrot.lane.b32.xlu0 %v837, 64
  %v840 = vpop.permute.xlu0 %839
  %v842 = vmul.f32 %v824, %v840
  %844 = vrot.lane.b32.xlu0 %v842, 32
  %v845 = vpop.permute.xlu0 %844
  %v846 = vsel %vm38, %v845, 0
  %848 = vmatprep.subr.mxu0 0.0
  %849 = vmatpush1.msra.mxu0 %v30
  %850 = vmatprep.subr.mxu0 0.0
  %851 = vmatpush1.msra.mxu0 %v31
  %852 = vmatprep.subr.mxu0 0.0
  %853 = vmatpush1.msra.mxu0 %v32
  %854 = vmatprep.subr.mxu0 0.0
  %855 = vmatpush1.msra.mxu0 %v33
  %856 = vmatprep.subr.mxu0 0.0
  %857 = vmatpush1.msra.mxu0 0.0
  %858 = vmatprep.subr.mxu0 0.0
  %859 = vmatpush1.msra.mxu0 0.0
  %860 = vmatprep.subr.mxu0 0.0
  %861 = vmatpush1.msra.mxu0 0.0
  %862 = vmatprep.subr.mxu0 0.0
  %863 = vmatpush1.msra.mxu0 0.0
  %864 = vmatprep.subr.mxu0 0.0
  %865 = vmatpush1.msra.mxu0 0.0
  %866 = vmatprep.subr.mxu0 0.0
  %867 = vmatpush1.msra.mxu0 0.0
  %868 = vmatprep.subr.mxu0 0.0
  %869 = vmatpush1.msra.mxu0 0.0
  %870 = vmatprep.subr.mxu0 0.0
  %871 = vmatpush1.msra.mxu0 0.0
  %872 = vmatprep.subr.mxu0 0.0
  %873 = vmatpush1.msra.mxu0 0.0
  %874 = vmatprep.subr.mxu0 0.0
  %875 = vmatpush1.msra.mxu0 0.0
  %876 = vmatprep.subr.mxu0 0.0
  %877 = vmatpush1.msra.mxu0 0.0
  %878 = vmatprep.subr.mxu0 0.0
  %879 = vmatpush1.msra.mxu0 0.0
  %880 = vmatprep.subr.mxu0 0.0
  %881 = vmatpush1.msra.mxu0 0.0
  %882 = vmatprep.subr.mxu0 0.0
  %883 = vmatpush1.msra.mxu0 0.0
  %884 = vmatprep.subr.mxu0 0.0
  %885 = vmatpush1.msra.mxu0 0.0
  %886 = vmatprep.subr.mxu0 0.0
  %887 = vmatpush1.msra.mxu0 0.0
  %888 = vmatprep.subr.mxu0 0.0
  %889 = vmatpush1.msra.mxu0 0.0
  %890 = vmatprep.subr.mxu0 0.0
  %891 = vmatpush1.msra.mxu0 0.0
  %892 = vmatprep.subr.mxu0 0.0
  %893 = vmatpush1.msra.mxu0 0.0
  %894 = vmatprep.subr.mxu0 0.0
  %895 = vmatpush1.msra.mxu0 0.0
  %896 = vmatprep.subr.mxu0 0.0
  %897 = vmatpush1.msra.mxu0 0.0
  %898 = vmatprep.subr.mxu0 0.0
  %899 = vmatpush1.msra.mxu0 0.0
  %900 = vmatprep.subr.mxu0 0.0
  %901 = vmatpush1.msra.mxu0 0.0
  %902 = vmatprep.subr.mxu0 0.0
  %903 = vmatpush1.msra.mxu0 0.0
  %904 = vmatprep.subr.mxu0 0.0
  %905 = vmatpush1.msra.mxu0 0.0
  %906 = vmatprep.subr.mxu0 0.0
  %907 = vmatpush1.msra.mxu0 0.0
  %908 = vmatprep.subr.mxu0 0.0
  %909 = vmatpush1.msra.mxu0 0.0
  %910 = vmatprep.subr.mxu0 0.0
  %911 = vmatpush1.msra.mxu0 0.0
  %912 = vmatprep.mubr.f32.mxu0 0.0
  %913 = vmatmul.mubr.f32.gmra.mrb[0].mxu0 %v846
  %v914 = vpop.f32.mrb[0].mxu0
  %v915 = vadd.f32 %v145, %v914
  %v916 = vpop.f32.mrb[0].mxu0
  %917 = vdwg.mxu0
  %s918 = scalar_lea.vmem %s6, 8
  %919 = vst.msk [vmem:[%s918] sm:$0x3] %vm222, %v915
  %s920 = scalar_lea.vmem %s0, 10
  %v921 = vld [vmem:[%s920] sm:$0x3]
  %922 = vmatprep.subr.mxu0 0.0
  %923 = vmatpush1.msra.mxu0 %v26
  %924 = vmatprep.subr.mxu0 0.0
  %925 = vmatpush1.msra.mxu0 %v27
  %926 = vmatprep.subr.mxu0 0.0
  %927 = vmatpush1.msra.mxu0 %v28
  %928 = vmatprep.subr.mxu0 0.0
  %929 = vmatpush1.msra.mxu0 %v29
  %930 = vmatprep.subr.mxu0 0.0
  %931 = vmatpush1.msra.mxu0 0.0
  %932 = vmatprep.subr.mxu0 0.0
  %933 = vmatpush1.msra.mxu0 0.0
  %934 = vmatprep.subr.mxu0 0.0
  %935 = vmatpush1.msra.mxu0 0.0
  %936 = vmatprep.subr.mxu0 0.0
  %937 = vmatpush1.msra.mxu0 0.0
  %938 = vmatprep.subr.mxu0 0.0
  %939 = vmatpush1.msra.mxu0 0.0
  %940 = vmatprep.subr.mxu0 0.0
  %941 = vmatpush1.msra.mxu0 0.0
  %942 = vmatprep.subr.mxu0 0.0
  %943 = vmatpush1.msra.mxu0 0.0
  %944 = vmatprep.subr.mxu0 0.0
  %945 = vmatpush1.msra.mxu0 0.0
  %946 = vmatprep.subr.mxu0 0.0
  %947 = vmatpush1.msra.mxu0 0.0
  %948 = vmatprep.subr.mxu0 0.0
  %949 = vmatpush1.msra.mxu0 0.0
  %950 = vmatprep.subr.mxu0 0.0
  %951 = vmatpush1.msra.mxu0 0.0
  %952 = vmatprep.subr.mxu0 0.0
  %953 = vmatpush1.msra.mxu0 0.0
  %954 = vmatprep.subr.mxu0 0.0
  %955 = vmatpush1.msra.mxu0 0.0
  %956 = vmatprep.subr.mxu0 0.0
  %957 = vmatpush1.msra.mxu0 0.0
  %958 = vmatprep.subr.mxu0 0.0
  %959 = vmatpush1.msra.mxu0 0.0
  %960 = vmatprep.subr.mxu0 0.0
  %961 = vmatpush1.msra.mxu0 0.0
  %962 = vmatprep.subr.mxu0 0.0
  %963 = vmatpush1.msra.mxu0 0.0
  %964 = vmatprep.subr.mxu0 0.0
  %965 = vmatpush1.msra.mxu0 0.0
  %966 = vmatprep.subr.mxu0 0.0
  %967 = vmatpush1.msra.mxu0 0.0
  %968 = vmatprep.subr.mxu0 0.0
  %969 = vmatpush1.msra.mxu0 0.0
  %970 = vmatprep.subr.mxu0 0.0
  %971 = vmatpush1.msra.mxu0 0.0
  %972 = vmatprep.subr.mxu0 0.0
  %973 = vmatpush1.msra.mxu0 0.0
  %974 = vmatprep.subr.mxu0 0.0
  %975 = vmatpush1.msra.mxu0 0.0
  %976 = vmatprep.subr.mxu0 0.0
  %977 = vmatpush1.msra.mxu0 0.0
  %978 = vmatprep.subr.mxu0 0.0
  %979 = vmatpush1.msra.mxu0 0.0
  %980 = vmatprep.subr.mxu0 0.0
  %981 = vmatpush1.msra.mxu0 0.0
  %982 = vmatprep.subr.mxu0 0.0
  %983 = vmatpush1.msra.mxu0 0.0
  %984 = vmatprep.subr.mxu0 0.0
  %985 = vmatpush1.msra.mxu0 0.0
  %986 = vmatprep.mubr.f32.mxu0 0.0
  %987 = vmatmul.mubr.f32.gmra.mrb[0].mxu0 %v846
  %v988 = vpop.f32.mrb[0].mxu0
  %v989 = vadd.f32 0.0, %v988
  %v990 = vpop.f32.mrb[0].mxu0
  %991 = vdwg.mxu0
  %v992 = vadd.f32 %v921, %v989
  %v993 = vxor.u32 %v992, 2147483648
  %v994 = vmul.f32 %v993, 1.442695
  %v995 = vpow.pop %v994
  %v996 = vadd.f32 %v995, 1.0
  %v997 = vrcp.pop %v996
  %v998 = vmul.f32 1.0, %v997
  %v999 = vtanh.pop %v992
  %v1000 = vmul.f32 %v998, %v836
  %1002 = vrot.lane.b32.xlu0 %v999, 64
  %v1003 = vpop.permute.xlu0 %1002
  %v1005 = vmul.f32 %v998, %v1003
  %1007 = vrot.lane.b32.xlu0 %v1005, 32
  %v1008 = vpop.permute.xlu0 %1007
  %v1010 = vadd.f32 %v1000, %v1008
  %v1011 = vtanh.pop %v1010
  %1013 = vrot.lane.b32.xlu0 %v1011, 64
  %v1014 = vpop.permute.xlu0 %1013
  %v1016 = vmul.f32 %v998, %v1014
  %1018 = vrot.lane.b32.xlu0 %v1016, 32
  %v1019 = vpop.permute.xlu0 %1018
  %v1020 = vsel %vm38, %v1019, 0
  %1022 = vmatprep.subr.mxu0 0.0
  %1023 = vmatpush1.msra.mxu0 %v30
  %1024 = vmatprep.subr.mxu0 0.0
  %1025 = vmatpush1.msra.mxu0 %v31
  %1026 = vmatprep.subr.mxu0 0.0
  %1027 = vmatpush1.msra.mxu0 %v32
  %1028 = vmatprep.subr.mxu0 0.0
  %1029 = vmatpush1.msra.mxu0 %v33
  %1030 = vmatprep.subr.mxu0 0.0
  %1031 = vmatpush1.msra.mxu0 0.0
  %1032 = vmatprep.subr.mxu0 0.0
  %1033 = vmatpush1.msra.mxu0 0.0
  %1034 = vmatprep.subr.mxu0 0.0
  %1035 = vmatpush1.msra.mxu0 0.0
  %1036 = vmatprep.subr.mxu0 0.0
  %1037 = vmatpush1.msra.mxu0 0.0
  %1038 = vmatprep.subr.mxu0 0.0
  %1039 = vmatpush1.msra.mxu0 0.0
  %1040 = vmatprep.subr.mxu0 0.0
  %1041 = vmatpush1.msra.mxu0 0.0
  %1042 = vmatprep.subr.mxu0 0.0
  %1043 = vmatpush1.msra.mxu0 0.0
  %1044 = vmatprep.subr.mxu0 0.0
  %1045 = vmatpush1.msra.mxu0 0.0
  %1046 = vmatprep.subr.mxu0 0.0
  %1047 = vmatpush1.msra.mxu0 0.0
  %1048 = vmatprep.subr.mxu0 0.0
  %1049 = vmatpush1.msra.mxu0 0.0
  %1050 = vmatprep.subr.mxu0 0.0
  %1051 = vmatpush1.msra.mxu0 0.0
  %1052 = vmatprep.subr.mxu0 0.0
  %1053 = vmatpush1.msra.mxu0 0.0
  %1054 = vmatprep.subr.mxu0 0.0
  %1055 = vmatpush1.msra.mxu0 0.0
  %1056 = vmatprep.subr.mxu0 0.0
  %1057 = vmatpush1.msra.mxu0 0.0
  %1058 = vmatprep.subr.mxu0 0.0
  %1059 = vmatpush1.msra.mxu0 0.0
  %1060 = vmatprep.subr.mxu0 0.0
  %1061 = vmatpush1.msra.mxu0 0.0
  %1062 = vmatprep.subr.mxu0 0.0
  %1063 = vmatpush1.msra.mxu0 0.0
  %1064 = vmatprep.subr.mxu0 0.0
  %1065 = vmatpush1.msra.mxu0 0.0
  %1066 = vmatprep.subr.mxu0 0.0
  %1067 = vmatpush1.msra.mxu0 0.0
  %1068 = vmatprep.subr.mxu0 0.0
  %1069 = vmatpush1.msra.mxu0 0.0
  %1070 = vmatprep.subr.mxu0 0.0
  %1071 = vmatpush1.msra.mxu0 0.0
  %1072 = vmatprep.subr.mxu0 0.0
  %1073 = vmatpush1.msra.mxu0 0.0
  %1074 = vmatprep.subr.mxu0 0.0
  %1075 = vmatpush1.msra.mxu0 0.0
  %1076 = vmatprep.subr.mxu0 0.0
  %1077 = vmatpush1.msra.mxu0 0.0
  %1078 = vmatprep.subr.mxu0 0.0
  %1079 = vmatpush1.msra.mxu0 0.0
  %1080 = vmatprep.subr.mxu0 0.0
  %1081 = vmatpush1.msra.mxu0 0.0
  %1082 = vmatprep.subr.mxu0 0.0
  %1083 = vmatpush1.msra.mxu0 0.0
  %1084 = vmatprep.subr.mxu0 0.0
  %1085 = vmatpush1.msra.mxu0 0.0
  %1086 = vmatprep.mubr.f32.mxu0 0.0
  %1087 = vmatmul.mubr.f32.gmra.mrb[0].mxu0 %v1020
  %v1088 = vpop.f32.mrb[0].mxu0
  %v1089 = vadd.f32 %v145, %v1088
  %v1090 = vpop.f32.mrb[0].mxu0
  %1091 = vdwg.mxu0
  %s1092 = scalar_lea.vmem %s6, 10
  %1093 = vst.msk [vmem:[%s1092] sm:$0x3] %vm222, %v1089
  %s1094 = scalar_lea.vmem %s0, 12
  %v1095 = vld [vmem:[%s1094] sm:$0x3]
  %1096 = vmatprep.subr.mxu0 0.0
  %1097 = vmatpush1.msra.mxu0 %v26
  %1098 = vmatprep.subr.mxu0 0.0
  %1099 = vmatpush1.msra.mxu0 %v27
  %1100 = vmatprep.subr.mxu0 0.0
  %1101 = vmatpush1.msra.mxu0 %v28
  %1102 = vmatprep.subr.mxu0 0.0
  %1103 = vmatpush1.msra.mxu0 %v29
  %1104 = vmatprep.subr.mxu0 0.0
  %1105 = vmatpush1.msra.mxu0 0.0
  %1106 = vmatprep.subr.mxu0 0.0
  %1107 = vmatpush1.msra.mxu0 0.0
  %1108 = vmatprep.subr.mxu0 0.0
  %1109 = vmatpush1.msra.mxu0 0.0
  %1110 = vmatprep.subr.mxu0 0.0
  %1111 = vmatpush1.msra.mxu0 0.0
  %1112 = vmatprep.subr.mxu0 0.0
  %1113 = vmatpush1.msra.mxu0 0.0
  %1114 = vmatprep.subr.mxu0 0.0
  %1115 = vmatpush1.msra.mxu0 0.0
  %1116 = vmatprep.subr.mxu0 0.0
  %1117 = vmatpush1.msra.mxu0 0.0
  %1118 = vmatprep.subr.mxu0 0.0
  %1119 = vmatpush1.msra.mxu0 0.0
  %1120 = vmatprep.subr.mxu0 0.0
  %1121 = vmatpush1.msra.mxu0 0.0
  %1122 = vmatprep.subr.mxu0 0.0
  %1123 = vmatpush1.msra.mxu0 0.0
  %1124 = vmatprep.subr.mxu0 0.0
  %1125 = vmatpush1.msra.mxu0 0.0
  %1126 = vmatprep.subr.mxu0 0.0
  %1127 = vmatpush1.msra.mxu0 0.0
  %1128 = vmatprep.subr.mxu0 0.0
  %1129 = vmatpush1.msra.mxu0 0.0
  %1130 = vmatprep.subr.mxu0 0.0
  %1131 = vmatpush1.msra.mxu0 0.0
  %1132 = vmatprep.subr.mxu0 0.0
  %1133 = vmatpush1.msra.mxu0 0.0
  %1134 = vmatprep.subr.mxu0 0.0
  %1135 = vmatpush1.msra.mxu0 0.0
  %1136 = vmatprep.subr.mxu0 0.0
  %1137 = vmatpush1.msra.mxu0 0.0
  %1138 = vmatprep.subr.mxu0 0.0
  %1139 = vmatpush1.msra.mxu0 0.0
  %1140 = vmatprep.subr.mxu0 0.0
  %1141 = vmatpush1.msra.mxu0 0.0
  %1142 = vmatprep.subr.mxu0 0.0
  %1143 = vmatpush1.msra.mxu0 0.0
  %1144 = vmatprep.subr.mxu0 0.0
  %1145 = vmatpush1.msra.mxu0 0.0
  %1146 = vmatprep.subr.mxu0 0.0
  %1147 = vmatpush1.msra.mxu0 0.0
  %1148 = vmatprep.subr.mxu0 0.0
  %1149 = vmatpush1.msra.mxu0 0.0
  %1150 = vmatprep.subr.mxu0 0.0
  %1151 = vmatpush1.msra.mxu0 0.0
  %1152 = vmatprep.subr.mxu0 0.0
  %1153 = vmatpush1.msra.mxu0 0.0
  %1154 = vmatprep.subr.mxu0 0.0
  %1155 = vmatpush1.msra.mxu0 0.0
  %1156 = vmatprep.subr.mxu0 0.0
  %1157 = vmatpush1.msra.mxu0 0.0
  %1158 = vmatprep.subr.mxu0 0.0
  %1159 = vmatpush1.msra.mxu0 0.0
  %1160 = vmatprep.mubr.f32.mxu0 0.0
  %1161 = vmatmul.mubr.f32.gmra.mrb[0].mxu0 %v1020
  %v1162 = vpop.f32.mrb[0].mxu0
  %v1163 = vadd.f32 0.0, %v1162
  %v1164 = vpop.f32.mrb[0].mxu0
  %1165 = vdwg.mxu0
  %v1166 = vadd.f32 %v1095, %v1163
  %v1167 = vxor.u32 %v1166, 2147483648
  %v1168 = vmul.f32 %v1167, 1.442695
  %v1169 = vpow.pop %v1168
  %v1170 = vadd.f32 %v1169, 1.0
  %v1171 = vrcp.pop %v1170
  %v1172 = vmul.f32 1.0, %v1171
  %v1173 = vtanh.pop %v1166
  %v1174 = vmul.f32 %v1172, %v1010
  %1176 = vrot.lane.b32.xlu0 %v1173, 64
  %v1177 = vpop.permute.xlu0 %1176
  %v1179 = vmul.f32 %v1172, %v1177
  %1181 = vrot.lane.b32.xlu0 %v1179, 32
  %v1182 = vpop.permute.xlu0 %1181
  %v1184 = vadd.f32 %v1174, %v1182
  %v1185 = vtanh.pop %v1184
  %1187 = vrot.lane.b32.xlu0 %v1185, 64
  %v1188 = vpop.permute.xlu0 %1187
  %v1190 = vmul.f32 %v1172, %v1188
  %1192 = vrot.lane.b32.xlu0 %v1190, 32
  %v1193 = vpop.permute.xlu0 %1192
  %v1194 = vsel %vm38, %v1193, 0
  %1196 = vmatprep.subr.mxu0 0.0
  %1197 = vmatpush1.msra.mxu0 %v30
  %1198 = vmatprep.subr.mxu0 0.0
  %1199 = vmatpush1.msra.mxu0 %v31
  %1200 = vmatprep.subr.mxu0 0.0
  %1201 = vmatpush1.msra.mxu0 %v32
  %1202 = vmatprep.subr.mxu0 0.0
  %1203 = vmatpush1.msra.mxu0 %v33
  %1204 = vmatprep.subr.mxu0 0.0
  %1205 = vmatpush1.msra.mxu0 0.0
  %1206 = vmatprep.subr.mxu0 0.0
  %1207 = vmatpush1.msra.mxu0 0.0
  %1208 = vmatprep.subr.mxu0 0.0
  %1209 = vmatpush1.msra.mxu0 0.0
  %1210 = vmatprep.subr.mxu0 0.0
  %1211 = vmatpush1.msra.mxu0 0.0
  %1212 = vmatprep.subr.mxu0 0.0
  %1213 = vmatpush1.msra.mxu0 0.0
  %1214 = vmatprep.subr.mxu0 0.0
  %1215 = vmatpush1.msra.mxu0 0.0
  %1216 = vmatprep.subr.mxu0 0.0
  %1217 = vmatpush1.msra.mxu0 0.0
  %1218 = vmatprep.subr.mxu0 0.0
  %1219 = vmatpush1.msra.mxu0 0.0
  %1220 = vmatprep.subr.mxu0 0.0
  %1221 = vmatpush1.msra.mxu0 0.0
  %1222 = vmatprep.subr.mxu0 0.0
  %1223 = vmatpush1.msra.mxu0 0.0
  %1224 = vmatprep.subr.mxu0 0.0
  %1225 = vmatpush1.msra.mxu0 0.0
  %1226 = vmatprep.subr.mxu0 0.0
  %1227 = vmatpush1.msra.mxu0 0.0
  %1228 = vmatprep.subr.mxu0 0.0
  %1229 = vmatpush1.msra.mxu0 0.0
  %1230 = vmatprep.subr.mxu0 0.0
  %1231 = vmatpush1.msra.mxu0 0.0
  %1232 = vmatprep.subr.mxu0 0.0
  %1233 = vmatpush1.msra.mxu0 0.0
  %1234 = vmatprep.subr.mxu0 0.0
  %1235 = vmatpush1.msra.mxu0 0.0
  %1236 = vmatprep.subr.mxu0 0.0
  %1237 = vmatpush1.msra.mxu0 0.0
  %1238 = vmatprep.subr.mxu0 0.0
  %1239 = vmatpush1.msra.mxu0 0.0
  %1240 = vmatprep.subr.mxu0 0.0
  %1241 = vmatpush1.msra.mxu0 0.0
  %1242 = vmatprep.subr.mxu0 0.0
  %1243 = vmatpush1.msra.mxu0 0.0
  %1244 = vmatprep.subr.mxu0 0.0
  %1245 = vmatpush1.msra.mxu0 0.0
  %1246 = vmatprep.subr.mxu0 0.0
  %1247 = vmatpush1.msra.mxu0 0.0
  %1248 = vmatprep.subr.mxu0 0.0
  %1249 = vmatpush1.msra.mxu0 0.0
  %1250 = vmatprep.subr.mxu0 0.0
  %1251 = vmatpush1.msra.mxu0 0.0
  %1252 = vmatprep.subr.mxu0 0.0
  %1253 = vmatpush1.msra.mxu0 0.0
  %1254 = vmatprep.subr.mxu0 0.0
  %1255 = vmatpush1.msra.mxu0 0.0
  %1256 = vmatprep.subr.mxu0 0.0
  %1257 = vmatpush1.msra.mxu0 0.0
  %1258 = vmatprep.subr.mxu0 0.0
  %1259 = vmatpush1.msra.mxu0 0.0
  %1260 = vmatprep.mubr.f32.mxu0 0.0
  %1261 = vmatmul.mubr.f32.gmra.mrb[0].mxu0 %v1194
  %v1262 = vpop.f32.mrb[0].mxu0
  %v1263 = vadd.f32 %v145, %v1262
  %v1264 = vpop.f32.mrb[0].mxu0
  %1265 = vdwg.mxu0
  %s1266 = scalar_lea.vmem %s6, 12
  %1267 = vst.msk [vmem:[%s1266] sm:$0x3] %vm222, %v1263
  %s1268 = scalar_lea.vmem %s0, 14
  %v1269 = vld [vmem:[%s1268] sm:$0x3]
  %1270 = vmatprep.subr.mxu0 0.0
  %1271 = vmatpush1.msra.mxu0 %v26
  %1272 = vmatprep.subr.mxu0 0.0
  %1273 = vmatpush1.msra.mxu0 %v27
  %1274 = vmatprep.subr.mxu0 0.0
  %1275 = vmatpush1.msra.mxu0 %v28
  %1276 = vmatprep.subr.mxu0 0.0
  %1277 = vmatpush1.msra.mxu0 %v29
  %1278 = vmatprep.subr.mxu0 0.0
  %1279 = vmatpush1.msra.mxu0 0.0
  %1280 = vmatprep.subr.mxu0 0.0
  %1281 = vmatpush1.msra.mxu0 0.0
  %1282 = vmatprep.subr.mxu0 0.0
  %1283 = vmatpush1.msra.mxu0 0.0
  %1284 = vmatprep.subr.mxu0 0.0
  %1285 = vmatpush1.msra.mxu0 0.0
  %1286 = vmatprep.subr.mxu0 0.0
  %1287 = vmatpush1.msra.mxu0 0.0
  %1288 = vmatprep.subr.mxu0 0.0
  %1289 = vmatpush1.msra.mxu0 0.0
  %1290 = vmatprep.subr.mxu0 0.0
  %1291 = vmatpush1.msra.mxu0 0.0
  %1292 = vmatprep.subr.mxu0 0.0
  %1293 = vmatpush1.msra.mxu0 0.0
  %1294 = vmatprep.subr.mxu0 0.0
  %1295 = vmatpush1.msra.mxu0 0.0
  %1296 = vmatprep.subr.mxu0 0.0
  %1297 = vmatpush1.msra.mxu0 0.0
  %1298 = vmatprep.subr.mxu0 0.0
  %1299 = vmatpush1.msra.mxu0 0.0
  %1300 = vmatprep.subr.mxu0 0.0
  %1301 = vmatpush1.msra.mxu0 0.0
  %1302 = vmatprep.subr.mxu0 0.0
  %1303 = vmatpush1.msra.mxu0 0.0
  %1304 = vmatprep.subr.mxu0 0.0
  %1305 = vmatpush1.msra.mxu0 0.0
  %1306 = vmatprep.subr.mxu0 0.0
  %1307 = vmatpush1.msra.mxu0 0.0
  %1308 = vmatprep.subr.mxu0 0.0
  %1309 = vmatpush1.msra.mxu0 0.0
  %1310 = vmatprep.subr.mxu0 0.0
  %1311 = vmatpush1.msra.mxu0 0.0
  %1312 = vmatprep.subr.mxu0 0.0
  %1313 = vmatpush1.msra.mxu0 0.0
  %1314 = vmatprep.subr.mxu0 0.0
  %1315 = vmatpush1.msra.mxu0 0.0
  %1316 = vmatprep.subr.mxu0 0.0
  %1317 = vmatpush1.msra.mxu0 0.0
  %1318 = vmatprep.subr.mxu0 0.0
  %1319 = vmatpush1.msra.mxu0 0.0
  %1320 = vmatprep.subr.mxu0 0.0
  %1321 = vmatpush1.msra.mxu0 0.0
  %1322 = vmatprep.subr.mxu0 0.0
  %1323 = vmatpush1.msra.mxu0 0.0
  %1324 = vmatprep.subr.mxu0 0.0
  %1325 = vmatpush1.msra.mxu0 0.0
  %1326 = vmatprep.subr.mxu0 0.0
  %1327 = vmatpush1.msra.mxu0 0.0
  %1328 = vmatprep.subr.mxu0 0.0
  %1329 = vmatpush1.msra.mxu0 0.0
  %1330 = vmatprep.subr.mxu0 0.0
  %1331 = vmatpush1.msra.mxu0 0.0
  %1332 = vmatprep.subr.mxu0 0.0
  %1333 = vmatpush1.msra.mxu0 0.0
  %1334 = vmatprep.mubr.f32.mxu0 0.0
  %1335 = vmatmul.mubr.f32.gmra.mrb[0].mxu0 %v1194
  %v1336 = vpop.f32.mrb[0].mxu0
  %v1337 = vadd.f32 0.0, %v1336
  %v1338 = vpop.f32.mrb[0].mxu0
  %1339 = vdwg.mxu0
  %v1340 = vadd.f32 %v1269, %v1337
  %v1341 = vxor.u32 %v1340, 2147483648
  %v1342 = vmul.f32 %v1341, 1.442695
  %v1343 = vpow.pop %v1342
  %v1344 = vadd.f32 %v1343, 1.0
  %v1345 = vrcp.pop %v1344
  %v1346 = vmul.f32 1.0, %v1345
  %v1347 = vtanh.pop %v1340
  %v1348 = vmul.f32 %v1346, %v1184
  %1350 = vrot.lane.b32.xlu0 %v1347, 64
  %v1351 = vpop.permute.xlu0 %1350
  %v1353 = vmul.f32 %v1346, %v1351
  %1355 = vrot.lane.b32.xlu0 %v1353, 32
  %v1356 = vpop.permute.xlu0 %1355
  %v1358 = vadd.f32 %v1348, %v1356
  %v1359 = vtanh.pop %v1358
  %1361 = vrot.lane.b32.xlu0 %v1359, 64
  %v1362 = vpop.permute.xlu0 %1361
  %v1364 = vmul.f32 %v1346, %v1362
  %1366 = vrot.lane.b32.xlu0 %v1364, 32
  %v1367 = vpop.permute.xlu0 %1366
  %v1368 = vsel %vm38, %v1367, 0
  %1370 = vmatprep.subr.mxu0 0.0
  %1371 = vmatpush1.msra.mxu0 %v30
  %1372 = vmatprep.subr.mxu0 0.0
  %1373 = vmatpush1.msra.mxu0 %v31
  %1374 = vmatprep.subr.mxu0 0.0
  %1375 = vmatpush1.msra.mxu0 %v32
  %1376 = vmatprep.subr.mxu0 0.0
  %1377 = vmatpush1.msra.mxu0 %v33
  %1378 = vmatprep.subr.mxu0 0.0
  %1379 = vmatpush1.msra.mxu0 0.0
  %1380 = vmatprep.subr.mxu0 0.0
  %1381 = vmatpush1.msra.mxu0 0.0
  %1382 = vmatprep.subr.mxu0 0.0
  %1383 = vmatpush1.msra.mxu0 0.0
  %1384 = vmatprep.subr.mxu0 0.0
  %1385 = vmatpush1.msra.mxu0 0.0
  %1386 = vmatprep.subr.mxu0 0.0
  %1387 = vmatpush1.msra.mxu0 0.0
  %1388 = vmatprep.subr.mxu0 0.0
  %1389 = vmatpush1.msra.mxu0 0.0
  %1390 = vmatprep.subr.mxu0 0.0
  %1391 = vmatpush1.msra.mxu0 0.0
  %1392 = vmatprep.subr.mxu0 0.0
  %1393 = vmatpush1.msra.mxu0 0.0
  %1394 = vmatprep.subr.mxu0 0.0
  %1395 = vmatpush1.msra.mxu0 0.0
  %1396 = vmatprep.subr.mxu0 0.0
  %1397 = vmatpush1.msra.mxu0 0.0
  %1398 = vmatprep.subr.mxu0 0.0
  %1399 = vmatpush1.msra.mxu0 0.0
  %1400 = vmatprep.subr.mxu0 0.0
  %1401 = vmatpush1.msra.mxu0 0.0
  %1402 = vmatprep.subr.mxu0 0.0
  %1403 = vmatpush1.msra.mxu0 0.0
  %1404 = vmatprep.subr.mxu0 0.0
  %1405 = vmatpush1.msra.mxu0 0.0
  %1406 = vmatprep.subr.mxu0 0.0
  %1407 = vmatpush1.msra.mxu0 0.0
  %1408 = vmatprep.subr.mxu0 0.0
  %1409 = vmatpush1.msra.mxu0 0.0
  %1410 = vmatprep.subr.mxu0 0.0
  %1411 = vmatpush1.msra.mxu0 0.0
  %1412 = vmatprep.subr.mxu0 0.0
  %1413 = vmatpush1.msra.mxu0 0.0
  %1414 = vmatprep.subr.mxu0 0.0
  %1415 = vmatpush1.msra.mxu0 0.0
  %1416 = vmatprep.subr.mxu0 0.0
  %1417 = vmatpush1.msra.mxu0 0.0
  %1418 = vmatprep.subr.mxu0 0.0
  %1419 = vmatpush1.msra.mxu0 0.0
  %1420 = vmatprep.subr.mxu0 0.0
  %1421 = vmatpush1.msra.mxu0 0.0
  %1422 = vmatprep.subr.mxu0 0.0
  %1423 = vmatpush1.msra.mxu0 0.0
  %1424 = vmatprep.subr.mxu0 0.0
  %1425 = vmatpush1.msra.mxu0 0.0
  %1426 = vmatprep.subr.mxu0 0.0
  %1427 = vmatpush1.msra.mxu0 0.0
  %1428 = vmatprep.subr.mxu0 0.0
  %1429 = vmatpush1.msra.mxu0 0.0
  %1430 = vmatprep.subr.mxu0 0.0
  %1431 = vmatpush1.msra.mxu0 0.0
  %1432 = vmatprep.subr.mxu0 0.0
  %1433 = vmatpush1.msra.mxu0 0.0
  %1434 = vmatprep.mubr.f32.mxu0 0.0
  %1435 = vmatmul.mubr.f32.gmra.mrb[0].mxu0 %v1368
  %v1436 = vpop.f32.mrb[0].mxu0
  %v1437 = vadd.f32 %v145, %v1436
  %v1438 = vpop.f32.mrb[0].mxu0
  %1439 = vdwg.mxu0
  %s1440 = scalar_lea.vmem %s6, 14
  %1441 = vst.msk [vmem:[%s1440] sm:$0x3] %vm222, %v1437
  %vm1443 = vcmask 254976
  %1444 = vst.msk [vmem:[%s7] sm:$0x3] %vm1443, %v1367
  %1446 = vrot.lane.b32.xlu0 %v1358, 96
  %v1447 = vpop.permute.xlu0 %1446
  %1449 = vst.msk [vmem:[%s8] sm:$0x3] %vm1443, %v1447
  // Predicated region
  $region26: #{decoder_forward.7} parent=0 // pred_check
    _
  $region27: #{decoder_forward.7} parent=0 // pred_check_branch
    %1451 = sbr.rel (0) target = $region29
  $region28: #{decoder_forward.7} parent=0 // pred_region
    _
  $region29: #{decoder_forward.7} parent=0 // pred_fallthru
    _
  // Predicated region
  $region30: #{decoder_forward.7} parent=0 // pred_check
    _
  $region31: #{decoder_forward.7} parent=0 // pred_check_branch
    %1453 = sbr.rel (0) target = $region33
  $region32: #{decoder_forward.7} parent=0 // pred_region
    _
  $region33: #{decoder_forward.7} parent=0 // pred_fallthru
    _
  // Predicated region
  $region34: #{decoder_forward.7} parent=0 // pred_check
    _
  $region35: #{decoder_forward.7} parent=0 // pred_check_branch
    %1455 = sbr.rel (0) target = $region37
  $region36: #{decoder_forward.7} parent=0 // pred_region
    _
  $region37: #{decoder_forward.7} parent=0 // pred_fallthru
    _
  // Predicated region
  $region38: #{decoder_forward.7} parent=0 // pred_check
    _
  $region39: #{decoder_forward.7} parent=0 // pred_check_branch
    %1457 = sbr.rel (0) target = $region41
  $region40: #{decoder_forward.7} parent=0 // pred_region
    _
  $region41: #{decoder_forward.7} parent=0 // pred_fallthru
    _
  // Predicated region
  $region42: #{decoder_forward.7} parent=0 // pred_check
    _
  $region43: #{decoder_forward.7} parent=0 // pred_check_branch
    %1459 = sbr.rel (0) target = $region45
  $region44: #{decoder_forward.7} parent=0 // pred_region
    _
  $region45: #{decoder_forward.7} parent=0 // pred_fallthru
    _
  // Predicated region
  $region46: #{decoder_forward.7} parent=0 // pred_check
    _
  $region47: #{decoder_forward.7} parent=0 // pred_check_branch
    %1461 = sbr.rel (0) target = $region49
  $region48: #{decoder_forward.7} parent=0 // pred_region
    _
  $region49: #{decoder_forward.7} parent=0 // pred_fallthru
    _

</llo_original>
